<compile_context>
chip_gen: v6e
topology: v6e:2x2x1
jax: 0.10.0
libtpu: 0.0.40
codegen_flags: <defaults>
</compile_context>

<pallas_src>
import jax
import jax.numpy as jnp
from jax.experimental import pallas as pl
from jax.experimental.pallas import tpu as pltpu

SEQ = 160      # hard-coded by the module: x.view(160, -1, num_channel)
UNROLL = 8     # SEQ % UNROLL == 0


# ---------------------------------------------------------------------------
# Kernel 1: 2-layer LSTM over the full sequence (fused gates).
# wih0/whh0/wih1/whh1: (C_in, 4C), gate order along columns [i | f | g | o].
# b0/b1: (1, 4C) (= b_ih + b_hh).
# ---------------------------------------------------------------------------
def lstm2_kernel(x_ref, wih0_ref, whh0_ref, b0_ref, wih1_ref, whh1_ref, b1_ref,
                 out_ref, hn_ref, cn_ref, xp_ref):
    B = out_ref.shape[1]
    C = x_ref.shape[1]

    # Hoist all weight/bias reads out of the recurrence.
    whh0 = whh0_ref[...]        # (C, 4C)
    wih1 = wih1_ref[...]        # (C, 4C)
    whh1 = whh1_ref[...]        # (C, 4C)
    b1 = b1_ref[...]            # (1, 4C)

    # Hoist the layer-0 input projection: ONE (SEQ*B, C) @ (C, 4C) matmul.
    xp_ref[...] = (jnp.dot(x_ref[...], wih0_ref[...],
                           preferred_element_type=jnp.float32) + b0_ref[...])

    def cell(gates, c):
        i = jax.nn.sigmoid(gates[:, 0 * C:1 * C])
        f = jax.nn.sigmoid(gates[:, 1 * C:2 * C])
        g = jnp.tanh(gates[:, 2 * C:3 * C])
        o = jax.nn.sigmoid(gates[:, 3 * C:4 * C])
        c_new = f * c + i * g
        h_new = o * jnp.tanh(c_new)
        return h_new, c_new

    def step(t, carry):
        h0, c0, h1, c1 = carry
        # Layer 0: input projection already precomputed; only the recurrent dot here.
        gates0 = xp_ref[pl.ds(t * B, B), :] + jnp.dot(
            h0, whh0, preferred_element_type=jnp.float32)
        h0, c0 = cell(gates0, c0)
        # TODO(synk): nn.LSTM inter-layer dropout is stochastic; treated as identity (eval).
        # Layer 1: the h1/whh1 term depends only on the previous step -> overlappable.
        gates1 = (jnp.dot(h0, wih1, preferred_element_type=jnp.float32)
                  + jnp.dot(h1, whh1, preferred_element_type=jnp.float32) + b1)
        h1, c1 = cell(gates1, c1)
        out_ref[t] = h1
        return (h0, c0, h1, c1)

    def group(g, carry):
        # Manual partial unroll: UNROLL steps per fori_loop iteration.
        for u in range(UNROLL):
            carry = step(g * UNROLL + u, carry)
        return carry

    z = jnp.zeros((B, C), jnp.float32)
    h0, c0, h1, c1 = jax.lax.fori_loop(0, SEQ // UNROLL, group, (z, z, z, z))
    hn_ref[0] = h0
    hn_ref[1] = h1
    cn_ref[0] = c0
    cn_ref[1] = c1


# ---------------------------------------------------------------------------
# Kernel 2: attention = softmax(x @ W_att, dim=1); y = x * attention; Linear.
# ---------------------------------------------------------------------------
def attn_linear_kernel(x_ref, watt_ref, wlin_ref, blin_ref, out_ref):
    x = x_ref[...]                                                   # (B, D)
    logits = jnp.dot(x, watt_ref[...], preferred_element_type=jnp.float32)
    m = jnp.max(logits, axis=1, keepdims=True)
    e = jnp.exp(logits - m)
    attn = e / jnp.sum(e, axis=1, keepdims=True)                     # softmax(dim=1)
    y = x * attn
    out_ref[...] = (jnp.dot(y, wlin_ref[...], preferred_element_type=jnp.float32)
                    + blin_ref[...])


# ---------------------------------------------------------------------------
# Wrapper (glue: reshapes + pallas_call plumbing).
# ---------------------------------------------------------------------------
def lstm_with_attention_forward(x, params):
    C = params["num_channel"]
    x = jnp.reshape(x, (SEQ, -1, C)).astype(jnp.float32)   # == torch .view(160, -1, C)
    B = x.shape[1]
    x2d = jnp.reshape(x, (SEQ * B, C))                     # rows in (t, b) time-major order

    vmem = pl.BlockSpec(memory_space=pltpu.MemorySpace.VMEM)

    out_seq, h_n, c_n = pl.pallas_call(
        lstm2_kernel,
        out_shape=(
            jax.ShapeDtypeStruct((SEQ, B, C), jnp.float32),
            jax.ShapeDtypeStruct((2, B, C), jnp.float32),   # h_n (num_layers, B, C)
            jax.ShapeDtypeStruct((2, B, C), jnp.float32),   # c_n (num_layers, B, C)
        ),
        in_specs=[vmem] * 7,
        out_specs=(vmem, vmem, vmem),
        scratch_shapes=[pltpu.VMEM((SEQ * B, 4 * C), jnp.float32)],  # hoisted x@Wih0+b0
    )(x2d, params["wih0"], params["whh0"], params["b0"],
      params["wih1"], params["whh1"], params["b1"])

    # torch .view(-1, C*160) on the contiguous (SEQ, B, C) LSTM output == row-major
    # reshape (mixes timesteps across batch rows when B > 1 — faithful to the module).
    xf = jnp.reshape(out_seq, (-1, C * SEQ))

    y = pl.pallas_call(
        attn_linear_kernel,
        out_shape=jax.ShapeDtypeStruct((xf.shape[0], 512), jnp.float32),
        in_specs=[vmem] * 4,
        out_specs=vmem,
    )(xf, params["w_att"], params["w_lin_t"], params["b_lin"])

    return y, (h_n, c_n)


# ---------------------------------------------------------------------------
# Deterministic parameter init (shapes from the module's __init__), pre-laid-out
# for the fused-gate kernel.
# ---------------------------------------------------------------------------
def init_params(key, num_channel):
    C = num_channel
    D = C * SEQ
    keys = jax.random.split(key, 11)
    s = 1.0 / jnp.sqrt(jnp.float32(C))

    def rnd(k, shape, scale):
        return jax.random.normal(k, shape, jnp.float32) * scale

    # PyTorch LSTM layout: weight_ih/hh_l{0,1}: (4C, C), gate order [i, f, g, o]
    wih0 = rnd(keys[0], (4 * C, C), s); whh0 = rnd(keys[1], (4 * C, C), s)
    bih0 = rnd(keys[2], (4 * C,), s);   bhh0 = rnd(keys[3], (4 * C,), s)
    wih1 = rnd(keys[4], (4 * C, C), s); whh1 = rnd(keys[5], (4 * C, C), s)
    bih1 = rnd(keys[6], (4 * C,), s);   bhh1 = rnd(keys[7], (4 * C,), s)

    w_att = jax.random.normal(keys[8], (D, D), jnp.float32)   # randn, like nn.Parameter
    ls = 1.0 / jnp.sqrt(jnp.float32(D))
    w_lin = rnd(keys[9], (512, D), ls)                        # nn.Linear weight
    b_lin = rnd(keys[10], (512,), ls)                         # nn.Linear bias

    # Fused-gate layout: (C_in, 4C) so the kernel does one x @ W per cell,
    # output columns ordered [i | f | g | o] (same ordering as PyTorch's rows).
    return dict(
        num_channel=C,
        wih0=jnp.transpose(wih0),                 # (C, 4C)
        whh0=jnp.transpose(whh0),                 # (C, 4C)
        b0=jnp.reshape(bih0 + bhh0, (1, 4 * C)),  # folded b_ih + b_hh
        wih1=jnp.transpose(wih1),                 # (C, 4C)
        whh1=jnp.transpose(whh1),                 # (C, 4C)
        b1=jnp.reshape(bih1 + bhh1, (1, 4 * C)),
        w_att=w_att,
        w_lin_t=jnp.transpose(w_lin),             # (C*160, 512)
        b_lin=jnp.reshape(b_lin, (1, 512)),
    )


if __name__ == "__main__":
    key = jax.random.PRNGKey(0)
    k_param, k_x = jax.random.split(key)

    NUM_CHANNEL = 4   # small, consistent with the module
    BATCH = 2

    params = init_params(k_param, NUM_CHANNEL)
    x = jax.random.normal(k_x, (SEQ, BATCH, NUM_CHANNEL), jnp.float32)

    y, (h_n, c_n) = lstm_with_attention_forward(x, params)
    jax.block_until_ready((y, h_n, c_n))

    assert y.shape == (BATCH, 512)
    assert h_n.shape == (2, BATCH, NUM_CHANNEL)
    assert c_n.shape == (2, BATCH, NUM_CHANNEL)
    print("KERNEL_OK")
</pallas_src>

<mosaic_0001>
module attributes {stable_mosaic.version = 11 : i64} {
  func.func @lstm2_kernel(%arg0: memref<320x4xf32, #tpu.memory_space<vmem>>, %arg1: memref<4x16xf32, #tpu.memory_space<vmem>>, %arg2: memref<4x16xf32, #tpu.memory_space<vmem>>, %arg3: memref<1x16xf32, #tpu.memory_space<vmem>>, %arg4: memref<4x16xf32, #tpu.memory_space<vmem>>, %arg5: memref<4x16xf32, #tpu.memory_space<vmem>>, %arg6: memref<1x16xf32, #tpu.memory_space<vmem>>, %arg7: memref<160x2x4xf32, #tpu.memory_space<vmem>>, %arg8: memref<2x2x4xf32, #tpu.memory_space<vmem>>, %arg9: memref<2x2x4xf32, #tpu.memory_space<vmem>>, %arg10: memref<320x16xf32, #tpu.memory_space<vmem>>) attributes {dimension_semantics = [], scalar_prefetch = 0 : i64, scratch_operands = 1 : i64, tpu.core_type = #tpu.core_type<tc>} {
    %c0 = arith.constant 0 : index
    %c0_0 = arith.constant 0 : index
    %0 = vector.load %arg2[%c0, %c0_0] : memref<4x16xf32, #tpu.memory_space<vmem>>, vector<4x16xf32>
    %c0_1 = arith.constant 0 : index
    %c0_2 = arith.constant 0 : index
    %1 = vector.load %arg4[%c0_1, %c0_2] : memref<4x16xf32, #tpu.memory_space<vmem>>, vector<4x16xf32>
    %c0_3 = arith.constant 0 : index
    %c0_4 = arith.constant 0 : index
    %2 = vector.load %arg5[%c0_3, %c0_4] : memref<4x16xf32, #tpu.memory_space<vmem>>, vector<4x16xf32>
    %c0_5 = arith.constant 0 : index
    %c0_6 = arith.constant 0 : index
    %3 = vector.load %arg6[%c0_5, %c0_6] : memref<1x16xf32, #tpu.memory_space<vmem>>, vector<1x16xf32>
    %c0_7 = arith.constant 0 : index
    %c0_8 = arith.constant 0 : index
    %4 = vector.load %arg0[%c0_7, %c0_8] : memref<320x4xf32, #tpu.memory_space<vmem>>, vector<320x4xf32>
    %c0_9 = arith.constant 0 : index
    %c0_10 = arith.constant 0 : index
    %5 = vector.load %arg1[%c0_9, %c0_10] : memref<4x16xf32, #tpu.memory_space<vmem>>, vector<4x16xf32>
    %cst = arith.constant dense<0.000000e+00> : vector<320x16xf32>
    %6 = tpu.matmul %4, %5, %cst {dimension_numbers = #tpu.dot_dimension_numbers<[1], [0], [0], [1], [0, 0, 1, 1], [], []>} : vector<320x4xf32>, vector<4x16xf32>, vector<320x16xf32> -> vector<320x16xf32>
    %c0_11 = arith.constant 0 : index
    %c0_12 = arith.constant 0 : index
    %7 = vector.load %arg3[%c0_11, %c0_12] : memref<1x16xf32, #tpu.memory_space<vmem>>, vector<1x16xf32>
    %8 = vector.broadcast %7 : vector<1x16xf32> to vector<320x16xf32>
    %9 = arith.addf %6, %8 : vector<320x16xf32>
    %c0_13 = arith.constant 0 : index
    %c0_14 = arith.constant 0 : index
    %10 = vector.load %arg10[%c0_13, %c0_14] : memref<320x16xf32, #tpu.memory_space<vmem>>, vector<320x16xf32>
    tpu.vector_store %arg10[%c0_13, %c0_14], %9 {strides = array<i32>} : memref<320x16xf32, #tpu.memory_space<vmem>>, vector<320x16xf32>,
    %cst_15 = arith.constant 0.000000e+00 : f32
    %11 = vector.broadcast %cst_15 : f32 to vector<2x4xf32>
    %c0_i32 = arith.constant 0 : i32
    %c20_i32 = arith.constant 20 : i32
    %12 = arith.addi %c0_i32, %c20_i32 : i32
    %c1_i32 = arith.constant 1 : i32
    %13:4 = scf.for %arg11 = %c0_i32 to %12 step %c1_i32 iter_args(%arg12 = %11, %arg13 = %11, %arg14 = %11, %arg15 = %11) -> (vector<2x4xf32>, vector<2x4xf32>, vector<2x4xf32>, vector<2x4xf32>)  : i32 {
      %c8_i32 = arith.constant 8 : i32
      %26 = arith.muli %arg11, %c8_i32 : i32
      %c0_i32_28 = arith.constant 0 : i32
      %27 = arith.addi %26, %c0_i32_28 : i32
      %c2_i32 = arith.constant 2 : i32
      %28 = arith.muli %27, %c2_i32 : i32
      %29 = arith.index_cast %28 : i32 to index
      %c0_29 = arith.constant 0 : index
      %30 = vector.load %arg10[%29, %c0_29] : memref<320x16xf32, #tpu.memory_space<vmem>>, vector<2x16xf32>
      %cst_30 = arith.constant dense<0.000000e+00> : vector<2x16xf32>
      %31 = tpu.matmul %arg12, %0, %cst_30 {dimension_numbers = #tpu.dot_dimension_numbers<[1], [0], [0], [1], [0, 0, 1, 1], [], []>} : vector<2x4xf32>, vector<4x16xf32>, vector<2x16xf32> -> vector<2x16xf32>
      %32 = arith.addf %30, %31 : vector<2x16xf32>
      %33 = vector.extract_strided_slice %32 {offsets = [0, 0], sizes = [2, 4], strides = [1, 1]} : vector<2x16xf32> to vector<2x4xf32>
      %34 = arith.negf %33 : vector<2x4xf32>
      %35 = math.exp %34 : vector<2x4xf32>
      %cst_31 = arith.constant 1.000000e+00 : f32
      %36 = vector.broadcast %cst_31 : f32 to vector<2x4xf32>
      %37 = arith.addf %36, %35 : vector<2x4xf32>
      %38 = arith.divf %36, %37 : vector<2x4xf32>
      %39 = vector.extract_strided_slice %32 {offsets = [0, 4], sizes = [2, 4], strides = [1, 1]} : vector<2x16xf32> to vector<2x4xf32>
      %40 = arith.negf %39 : vector<2x4xf32>
      %41 = math.exp %40 : vector<2x4xf32>
      %cst_32 = arith.constant 1.000000e+00 : f32
      %42 = vector.broadcast %cst_32 : f32 to vector<2x4xf32>
      %43 = arith.addf %42, %41 : vector<2x4xf32>
      %44 = arith.divf %42, %43 : vector<2x4xf32>
      %45 = vector.extract_strided_slice %32 {offsets = [0, 8], sizes = [2, 4], strides = [1, 1]} : vector<2x16xf32> to vector<2x4xf32>
      %46 = math.tanh %45 : vector<2x4xf32>
      %47 = vector.extract_strided_slice %32 {offsets = [0, 12], sizes = [2, 4], strides = [1, 1]} : vector<2x16xf32> to vector<2x4xf32>
      %48 = arith.negf %47 : vector<2x4xf32>
      %49 = math.exp %48 : vector<2x4xf32>
      %cst_33 = arith.constant 1.000000e+00 : f32
      %50 = vector.broadcast %cst_33 : f32 to vector<2x4xf32>
      %51 = arith.addf %50, %49 : vector<2x4xf32>
      %52 = arith.divf %50, %51 : vector<2x4xf32>
      %53 = arith.mulf %44, %arg13 : vector<2x4xf32>
      %54 = arith.mulf %38, %46 : vector<2x4xf32>
      %55 = arith.addf %53, %54 : vector<2x4xf32>
      %56 = math.tanh %55 : vector<2x4xf32>
      %57 = arith.mulf %52, %56 : vector<2x4xf32>
      %cst_34 = arith.constant dense<0.000000e+00> : vector<2x16xf32>
      %58 = tpu.matmul %57, %1, %cst_34 {dimension_numbers = #tpu.dot_dimension_numbers<[1], [0], [0], [1], [0, 0, 1, 1], [], []>} : vector<2x4xf32>, vector<4x16xf32>, vector<2x16xf32> -> vector<2x16xf32>
      %cst_35 = arith.constant dense<0.000000e+00> : vector<2x16xf32>
      %59 = tpu.matmul %arg14, %2, %cst_35 {dimension_numbers = #tpu.dot_dimension_numbers<[1], [0], [0], [1], [0, 0, 1, 1], [], []>} : vector<2x4xf32>, vector<4x16xf32>, vector<2x16xf32> -> vector<2x16xf32>
      %60 = arith.addf %58, %59 : vector<2x16xf32>
      %61 = vector.broadcast %3 : vector<1x16xf32> to vector<2x16xf32>
      %62 = arith.addf %60, %61 : vector<2x16xf32>
      %63 = vector.extract_strided_slice %62 {offsets = [0, 0], sizes = [2, 4], strides = [1, 1]} : vector<2x16xf32> to vector<2x4xf32>
      %64 = arith.negf %63 : vector<2x4xf32>
      %65 = math.exp %64 : vector<2x4xf32>
      %cst_36 = arith.constant 1.000000e+00 : f32
      %66 = vector.broadcast %cst_36 : f32 to vector<2x4xf32>
      %67 = arith.addf %66, %65 : vector<2x4xf32>
      %68 = arith.divf %66, %67 : vector<2x4xf32>
      %69 = vector.extract_strided_slice %62 {offsets = [0, 4], sizes = [2, 4], strides = [1, 1]} : vector<2x16xf32> to vector<2x4xf32>
      %70 = arith.negf %69 : vector<2x4xf32>
      %71 = math.exp %70 : vector<2x4xf32>
      %cst_37 = arith.constant 1.000000e+00 : f32
      %72 = vector.broadcast %cst_37 : f32 to vector<2x4xf32>
      %73 = arith.addf %72, %71 : vector<2x4xf32>
      %74 = arith.divf %72, %73 : vector<2x4xf32>
      %75 = vector.extract_strided_slice %62 {offsets = [0, 8], sizes = [2, 4], strides = [1, 1]} : vector<2x16xf32> to vector<2x4xf32>
      %76 = math.tanh %75 : vector<2x4xf32>
      %77 = vector.extract_strided_slice %62 {offsets = [0, 12], sizes = [2, 4], strides = [1, 1]} : vector<2x16xf32> to vector<2x4xf32>
      %78 = arith.negf %77 : vector<2x4xf32>
      %79 = math.exp %78 : vector<2x4xf32>
      %cst_38 = arith.constant 1.000000e+00 : f32
      %80 = vector.broadcast %cst_38 : f32 to vector<2x4xf32>
      %81 = arith.addf %80, %79 : vector<2x4xf32>
      %82 = arith.divf %80, %81 : vector<2x4xf32>
      %83 = arith.mulf %74, %arg15 : vector<2x4xf32>
      %84 = arith.mulf %68, %76 : vector<2x4xf32>
      %85 = arith.addf %83, %84 : vector<2x4xf32>
      %86 = math.tanh %85 : vector<2x4xf32>
      %87 = arith.mulf %82, %86 : vector<2x4xf32>
      %88 = arith.index_cast %27 : i32 to index
      %c0_39 = arith.constant 0 : index
      %c0_40 = arith.constant 0 : index
      %89 = vector.load %arg7[%88, %c0_39, %c0_40] : memref<160x2x4xf32, #tpu.memory_space<vmem>>, vector<1x2x4xf32>
      %90 = vector.shape_cast %89 : vector<1x2x4xf32> to vector<2x4xf32>
      %91 = vector.shape_cast %87 : vector<2x4xf32> to vector<1x2x4xf32>
      tpu.vector_store %arg7[%88, %c0_39, %c0_40], %91 {strides = array<i32>} : memref<160x2x4xf32, #tpu.memory_space<vmem>>, vector<1x2x4xf32>,
      %c8_i32_41 = arith.constant 8 : i32
      %92 = arith.muli %arg11, %c8_i32_41 : i32
      %c1_i32_42 = arith.constant 1 : i32
      %93 = arith.addi %92, %c1_i32_42 : i32
      %c2_i32_43 = arith.constant 2 : i32
      %94 = arith.muli %93, %c2_i32_43 : i32
      %95 = arith.index_cast %94 : i32 to index
      %c0_44 = arith.constant 0 : index
      %96 = vector.load %arg10[%95, %c0_44] : memref<320x16xf32, #tpu.memory_space<vmem>>, vector<2x16xf32>
      %cst_45 = arith.constant dense<0.000000e+00> : vector<2x16xf32>
      %97 = tpu.matmul %57, %0, %cst_45 {dimension_numbers = #tpu.dot_dimension_numbers<[1], [0], [0], [1], [0, 0, 1, 1], [], []>} : vector<2x4xf32>, vector<4x16xf32>, vector<2x16xf32> -> vector<2x16xf32>
      %98 = arith.addf %96, %97 : vector<2x16xf32>
      %99 = vector.extract_strided_slice %98 {offsets = [0, 0], sizes = [2, 4], strides = [1, 1]} : vector<2x16xf32> to vector<2x4xf32>
      %100 = arith.negf %99 : vector<2x4xf32>
      %101 = math.exp %100 : vector<2x4xf32>
      %cst_46 = arith.constant 1.000000e+00 : f32
      %102 = vector.broadcast %cst_46 : f32 to vector<2x4xf32>
      %103 = arith.addf %102, %101 : vector<2x4xf32>
      %104 = arith.divf %102, %103 : vector<2x4xf32>
      %105 = vector.extract_strided_slice %98 {offsets = [0, 4], sizes = [2, 4], strides = [1, 1]} : vector<2x16xf32> to vector<2x4xf32>
      %106 = arith.negf %105 : vector<2x4xf32>
      %107 = math.exp %106 : vector<2x4xf32>
      %cst_47 = arith.constant 1.000000e+00 : f32
      %108 = vector.broadcast %cst_47 : f32 to vector<2x4xf32>
      %109 = arith.addf %108, %107 : vector<2x4xf32>
      %110 = arith.divf %108, %109 : vector<2x4xf32>
      %111 = vector.extract_strided_slice %98 {offsets = [0, 8], sizes = [2, 4], strides = [1, 1]} : vector<2x16xf32> to vector<2x4xf32>
      %112 = math.tanh %111 : vector<2x4xf32>
      %113 = vector.extract_strided_slice %98 {offsets = [0, 12], sizes = [2, 4], strides = [1, 1]} : vector<2x16xf32> to vector<2x4xf32>
      %114 = arith.negf %113 : vector<2x4xf32>
      %115 = math.exp %114 : vector<2x4xf32>
      %cst_48 = arith.constant 1.000000e+00 : f32
      %116 = vector.broadcast %cst_48 : f32 to vector<2x4xf32>
      %117 = arith.addf %116, %115 : vector<2x4xf32>
      %118 = arith.divf %116, %117 : vector<2x4xf32>
      %119 = arith.mulf %110, %55 : vector<2x4xf32>
      %120 = arith.mulf %104, %112 : vector<2x4xf32>
      %121 = arith.addf %119, %120 : vector<2x4xf32>
      %122 = math.tanh %121 : vector<2x4xf32>
      %123 = arith.mulf %118, %122 : vector<2x4xf32>
      %cst_49 = arith.constant dense<0.000000e+00> : vector<2x16xf32>
      %124 = tpu.matmul %123, %1, %cst_49 {dimension_numbers = #tpu.dot_dimension_numbers<[1], [0], [0], [1], [0, 0, 1, 1], [], []>} : vector<2x4xf32>, vector<4x16xf32>, vector<2x16xf32> -> vector<2x16xf32>
      %cst_50 = arith.constant dense<0.000000e+00> : vector<2x16xf32>
      %125 = tpu.matmul %87, %2, %cst_50 {dimension_numbers = #tpu.dot_dimension_numbers<[1], [0], [0], [1], [0, 0, 1, 1], [], []>} : vector<2x4xf32>, vector<4x16xf32>, vector<2x16xf32> -> vector<2x16xf32>
      %126 = arith.addf %124, %125 : vector<2x16xf32>
      %127 = vector.broadcast %3 : vector<1x16xf32> to vector<2x16xf32>
      %128 = arith.addf %126, %127 : vector<2x16xf32>
      %129 = vector.extract_strided_slice %128 {offsets = [0, 0], sizes = [2, 4], strides = [1, 1]} : vector<2x16xf32> to vector<2x4xf32>
      %130 = arith.negf %129 : vector<2x4xf32>
      %131 = math.exp %130 : vector<2x4xf32>
      %cst_51 = arith.constant 1.000000e+00 : f32
      %132 = vector.broadcast %cst_51 : f32 to vector<2x4xf32>
      %133 = arith.addf %132, %131 : vector<2x4xf32>
      %134 = arith.divf %132, %133 : vector<2x4xf32>
      %135 = vector.extract_strided_slice %128 {offsets = [0, 4], sizes = [2, 4], strides = [1, 1]} : vector<2x16xf32> to vector<2x4xf32>
      %136 = arith.negf %135 : vector<2x4xf32>
      %137 = math.exp %136 : vector<2x4xf32>
      %cst_52 = arith.constant 1.000000e+00 : f32
      %138 = vector.broadcast %cst_52 : f32 to vector<2x4xf32>
      %139 = arith.addf %138, %137 : vector<2x4xf32>
      %140 = arith.divf %138, %139 : vector<2x4xf32>
      %141 = vector.extract_strided_slice %128 {offsets = [0, 8], sizes = [2, 4], strides = [1, 1]} : vector<2x16xf32> to vector<2x4xf32>
      %142 = math.tanh %141 : vector<2x4xf32>
      %143 = vector.extract_strided_slice %128 {offsets = [0, 12], sizes = [2, 4], strides = [1, 1]} : vector<2x16xf32> to vector<2x4xf32>
      %144 = arith.negf %143 : vector<2x4xf32>
      %145 = math.exp %144 : vector<2x4xf32>
      %cst_53 = arith.constant 1.000000e+00 : f32
      %146 = vector.broadcast %cst_53 : f32 to vector<2x4xf32>
      %147 = arith.addf %146, %145 : vector<2x4xf32>
      %148 = arith.divf %146, %147 : vector<2x4xf32>
      %149 = arith.mulf %140, %85 : vector<2x4xf32>
      %150 = arith.mulf %134, %142 : vector<2x4xf32>
      %151 = arith.addf %149, %150 : vector<2x4xf32>
      %152 = math.tanh %151 : vector<2x4xf32>
      %153 = arith.mulf %148, %152 : vector<2x4xf32>
      %154 = arith.index_cast %93 : i32 to index
      %c0_54 = arith.constant 0 : index
      %c0_55 = arith.constant 0 : index
      %155 = vector.load %arg7[%154, %c0_54, %c0_55] : memref<160x2x4xf32, #tpu.memory_space<vmem>>, vector<1x2x4xf32>
      %156 = vector.shape_cast %155 : vector<1x2x4xf32> to vector<2x4xf32>
      %157 = vector.shape_cast %153 : vector<2x4xf32> to vector<1x2x4xf32>
      tpu.vector_store %arg7[%154, %c0_54, %c0_55], %157 {strides = array<i32>} : memref<160x2x4xf32, #tpu.memory_space<vmem>>, vector<1x2x4xf32>,
      %c8_i32_56 = arith.constant 8 : i32
      %158 = arith.muli %arg11, %c8_i32_56 : i32
      %c2_i32_57 = arith.constant 2 : i32
      %159 = arith.addi %158, %c2_i32_57 : i32
      %c2_i32_58 = arith.constant 2 : i32
      %160 = arith.muli %159, %c2_i32_58 : i32
      %161 = arith.index_cast %160 : i32 to index
      %c0_59 = arith.constant 0 : index
      %162 = vector.load %arg10[%161, %c0_59] : memref<320x16xf32, #tpu.memory_space<vmem>>, vector<2x16xf32>
      %cst_60 = arith.constant dense<0.000000e+00> : vector<2x16xf32>
      %163 = tpu.matmul %123, %0, %cst_60 {dimension_numbers = #tpu.dot_dimension_numbers<[1], [0], [0], [1], [0, 0, 1, 1], [], []>} : vector<2x4xf32>, vector<4x16xf32>, vector<2x16xf32> -> vector<2x16xf32>
      %164 = arith.addf %162, %163 : vector<2x16xf32>
      %165 = vector.extract_strided_slice %164 {offsets = [0, 0], sizes = [2, 4], strides = [1, 1]} : vector<2x16xf32> to vector<2x4xf32>
      %166 = arith.negf %165 : vector<2x4xf32>
      %167 = math.exp %166 : vector<2x4xf32>
      %cst_61 = arith.constant 1.000000e+00 : f32
      %168 = vector.broadcast %cst_61 : f32 to vector<2x4xf32>
      %169 = arith.addf %168, %167 : vector<2x4xf32>
      %170 = arith.divf %168, %169 : vector<2x4xf32>
      %171 = vector.extract_strided_slice %164 {offsets = [0, 4], sizes = [2, 4], strides = [1, 1]} : vector<2x16xf32> to vector<2x4xf32>
      %172 = arith.negf %171 : vector<2x4xf32>
      %173 = math.exp %172 : vector<2x4xf32>
      %cst_62 = arith.constant 1.000000e+00 : f32
      %174 = vector.broadcast %cst_62 : f32 to vector<2x4xf32>
      %175 = arith.addf %174, %173 : vector<2x4xf32>
      %176 = arith.divf %174, %175 : vector<2x4xf32>
      %177 = vector.extract_strided_slice %164 {offsets = [0, 8], sizes = [2, 4], strides = [1, 1]} : vector<2x16xf32> to vector<2x4xf32>
      %178 = math.tanh %177 : vector<2x4xf32>
      %179 = vector.extract_strided_slice %164 {offsets = [0, 12], sizes = [2, 4], strides = [1, 1]} : vector<2x16xf32> to vector<2x4xf32>
      %180 = arith.negf %179 : vector<2x4xf32>
      %181 = math.exp %180 : vector<2x4xf32>
      %cst_63 = arith.constant 1.000000e+00 : f32
      %182 = vector.broadcast %cst_63 : f32 to vector<2x4xf32>
      %183 = arith.addf %182, %181 : vector<2x4xf32>
      %184 = arith.divf %182, %183 : vector<2x4xf32>
      %185 = arith.mulf %176, %121 : vector<2x4xf32>
      %186 = arith.mulf %170, %178 : vector<2x4xf32>
      %187 = arith.addf %185, %186 : vector<2x4xf32>
      %188 = math.tanh %187 : vector<2x4xf32>
      %189 = arith.mulf %184, %188 : vector<2x4xf32>
      %cst_64 = arith.constant dense<0.000000e+00> : vector<2x16xf32>
      %190 = tpu.matmul %189, %1, %cst_64 {dimension_numbers = #tpu.dot_dimension_numbers<[1], [0], [0], [1], [0, 0, 1, 1], [], []>} : vector<2x4xf32>, vector<4x16xf32>, vector<2x16xf32> -> vector<2x16xf32>
      %cst_65 = arith.constant dense<0.000000e+00> : vector<2x16xf32>
      %191 = tpu.matmul %153, %2, %cst_65 {dimension_numbers = #tpu.dot_dimension_numbers<[1], [0], [0], [1], [0, 0, 1, 1], [], []>} : vector<2x4xf32>, vector<4x16xf32>, vector<2x16xf32> -> vector<2x16xf32>
      %192 = arith.addf %190, %191 : vector<2x16xf32>
      %193 = vector.broadcast %3 : vector<1x16xf32> to vector<2x16xf32>
      %194 = arith.addf %192, %193 : vector<2x16xf32>
      %195 = vector.extract_strided_slice %194 {offsets = [0, 0], sizes = [2, 4], strides = [1, 1]} : vector<2x16xf32> to vector<2x4xf32>
      %196 = arith.negf %195 : vector<2x4xf32>
      %197 = math.exp %196 : vector<2x4xf32>
      %cst_66 = arith.constant 1.000000e+00 : f32
      %198 = vector.broadcast %cst_66 : f32 to vector<2x4xf32>
      %199 = arith.addf %198, %197 : vector<2x4xf32>
      %200 = arith.divf %198, %199 : vector<2x4xf32>
      %201 = vector.extract_strided_slice %194 {offsets = [0, 4], sizes = [2, 4], strides = [1, 1]} : vector<2x16xf32> to vector<2x4xf32>
      %202 = arith.negf %201 : vector<2x4xf32>
      %203 = math.exp %202 : vector<2x4xf32>
      %cst_67 = arith.constant 1.000000e+00 : f32
      %204 = vector.broadcast %cst_67 : f32 to vector<2x4xf32>
      %205 = arith.addf %204, %203 : vector<2x4xf32>
      %206 = arith.divf %204, %205 : vector<2x4xf32>
      %207 = vector.extract_strided_slice %194 {offsets = [0, 8], sizes = [2, 4], strides = [1, 1]} : vector<2x16xf32> to vector<2x4xf32>
      %208 = math.tanh %207 : vector<2x4xf32>
      %209 = vector.extract_strided_slice %194 {offsets = [0, 12], sizes = [2, 4], strides = [1, 1]} : vector<2x16xf32> to vector<2x4xf32>
      %210 = arith.negf %209 : vector<2x4xf32>
      %211 = math.exp %210 : vector<2x4xf32>
      %cst_68 = arith.constant 1.000000e+00 : f32
      %212 = vector.broadcast %cst_68 : f32 to vector<2x4xf32>
      %213 = arith.addf %212, %211 : vector<2x4xf32>
      %214 = arith.divf %212, %213 : vector<2x4xf32>
      %215 = arith.mulf %206, %151 : vector<2x4xf32>
      %216 = arith.mulf %200, %208 : vector<2x4xf32>
      %217 = arith.addf %215, %216 : vector<2x4xf32>
      %218 = math.tanh %217 : vector<2x4xf32>
      %219 = arith.mulf %214, %218 : vector<2x4xf32>
      %220 = arith.index_cast %159 : i32 to index
      %c0_69 = arith.constant 0 : index
      %c0_70 = arith.constant 0 : index
      %221 = vector.load %arg7[%220, %c0_69, %c0_70] : memref<160x2x4xf32, #tpu.memory_space<vmem>>, vector<1x2x4xf32>
      %222 = vector.shape_cast %221 : vector<1x2x4xf32> to vector<2x4xf32>
      %223 = vector.shape_cast %219 : vector<2x4xf32> to vector<1x2x4xf32>
      tpu.vector_store %arg7[%220, %c0_69, %c0_70], %223 {strides = array<i32>} : memref<160x2x4xf32, #tpu.memory_space<vmem>>, vector<1x2x4xf32>,
      %c8_i32_71 = arith.constant 8 : i32
      %224 = arith.muli %arg11, %c8_i32_71 : i32
      %c3_i32 = arith.constant 3 : i32
      %225 = arith.addi %224, %c3_i32 : i32
      %c2_i32_72 = arith.constant 2 : i32
      %226 = arith.muli %225, %c2_i32_72 : i32
      %227 = arith.index_cast %226 : i32 to index
      %c0_73 = arith.constant 0 : index
      %228 = vector.load %arg10[%227, %c0_73] : memref<320x16xf32, #tpu.memory_space<vmem>>, vector<2x16xf32>
      %cst_74 = arith.constant dense<0.000000e+00> : vector<2x16xf32>
      %229 = tpu.matmul %189, %0, %cst_74 {dimension_numbers = #tpu.dot_dimension_numbers<[1], [0], [0], [1], [0, 0, 1, 1], [], []>} : vector<2x4xf32>, vector<4x16xf32>, vector<2x16xf32> -> vector<2x16xf32>
      %230 = arith.addf %228, %229 : vector<2x16xf32>
      %231 = vector.extract_strided_slice %230 {offsets = [0, 0], sizes = [2, 4], strides = [1, 1]} : vector<2x16xf32> to vector<2x4xf32>
      %232 = arith.negf %231 : vector<2x4xf32>
      %233 = math.exp %232 : vector<2x4xf32>
      %cst_75 = arith.constant 1.000000e+00 : f32
      %234 = vector.broadcast %cst_75 : f32 to vector<2x4xf32>
      %235 = arith.addf %234, %233 : vector<2x4xf32>
      %236 = arith.divf %234, %235 : vector<2x4xf32>
      %237 = vector.extract_strided_slice %230 {offsets = [0, 4], sizes = [2, 4], strides = [1, 1]} : vector<2x16xf32> to vector<2x4xf32>
      %238 = arith.negf %237 : vector<2x4xf32>
      %239 = math.exp %238 : vector<2x4xf32>
      %cst_76 = arith.constant 1.000000e+00 : f32
      %240 = vector.broadcast %cst_76 : f32 to vector<2x4xf32>
      %241 = arith.addf %240, %239 : vector<2x4xf32>
      %242 = arith.divf %240, %241 : vector<2x4xf32>
      %243 = vector.extract_strided_slice %230 {offsets = [0, 8], sizes = [2, 4], strides = [1, 1]} : vector<2x16xf32> to vector<2x4xf32>
      %244 = math.tanh %243 : vector<2x4xf32>
      %245 = vector.extract_strided_slice %230 {offsets = [0, 12], sizes = [2, 4], strides = [1, 1]} : vector<2x16xf32> to vector<2x4xf32>
      %246 = arith.negf %245 : vector<2x4xf32>
      %247 = math.exp %246 : vector<2x4xf32>
      %cst_77 = arith.constant 1.000000e+00 : f32
      %248 = vector.broadcast %cst_77 : f32 to vector<2x4xf32>
      %249 = arith.addf %248, %247 : vector<2x4xf32>
      %250 = arith.divf %248, %249 : vector<2x4xf32>
      %251 = arith.mulf %242, %187 : vector<2x4xf32>
      %252 = arith.mulf %236, %244 : vector<2x4xf32>
      %253 = arith.addf %251, %252 : vector<2x4xf32>
      %254 = math.tanh %253 : vector<2x4xf32>
      %255 = arith.mulf %250, %254 : vector<2x4xf32>
      %cst_78 = arith.constant dense<0.000000e+00> : vector<2x16xf32>
      %256 = tpu.matmul %255, %1, %cst_78 {dimension_numbers = #tpu.dot_dimension_numbers<[1], [0], [0], [1], [0, 0, 1, 1], [], []>} : vector<2x4xf32>, vector<4x16xf32>, vector<2x16xf32> -> vector<2x16xf32>
      %cst_79 = arith.constant dense<0.000000e+00> : vector<2x16xf32>
      %257 = tpu.matmul %219, %2, %cst_79 {dimension_numbers = #tpu.dot_dimension_numbers<[1], [0], [0], [1], [0, 0, 1, 1], [], []>} : vector<2x4xf32>, vector<4x16xf32>, vector<2x16xf32> -> vector<2x16xf32>
      %258 = arith.addf %256, %257 : vector<2x16xf32>
      %259 = vector.broadcast %3 : vector<1x16xf32> to vector<2x16xf32>
      %260 = arith.addf %258, %259 : vector<2x16xf32>
      %261 = vector.extract_strided_slice %260 {offsets = [0, 0], sizes = [2, 4], strides = [1, 1]} : vector<2x16xf32> to vector<2x4xf32>
      %262 = arith.negf %261 : vector<2x4xf32>
      %263 = math.exp %262 : vector<2x4xf32>
      %cst_80 = arith.constant 1.000000e+00 : f32
      %264 = vector.broadcast %cst_80 : f32 to vector<2x4xf32>
      %265 = arith.addf %264, %263 : vector<2x4xf32>
      %266 = arith.divf %264, %265 : vector<2x4xf32>
      %267 = vector.extract_strided_slice %260 {offsets = [0, 4], sizes = [2, 4], strides = [1, 1]} : vector<2x16xf32> to vector<2x4xf32>
      %268 = arith.negf %267 : vector<2x4xf32>
      %269 = math.exp %268 : vector<2x4xf32>
      %cst_81 = arith.constant 1.000000e+00 : f32
      %270 = vector.broadcast %cst_81 : f32 to vector<2x4xf32>
      %271 = arith.addf %270, %269 : vector<2x4xf32>
      %272 = arith.divf %270, %271 : vector<2x4xf32>
      %273 = vector.extract_strided_slice %260 {offsets = [0, 8], sizes = [2, 4], strides = [1, 1]} : vector<2x16xf32> to vector<2x4xf32>
      %274 = math.tanh %273 : vector<2x4xf32>
      %275 = vector.extract_strided_slice %260 {offsets = [0, 12], sizes = [2, 4], strides = [1, 1]} : vector<2x16xf32> to vector<2x4xf32>
      %276 = arith.negf %275 : vector<2x4xf32>
      %277 = math.exp %276 : vector<2x4xf32>
      %cst_82 = arith.constant 1.000000e+00 : f32
      %278 = vector.broadcast %cst_82 : f32 to vector<2x4xf32>
      %279 = arith.addf %278, %277 : vector<2x4xf32>
      %280 = arith.divf %278, %279 : vector<2x4xf32>
      %281 = arith.mulf %272, %217 : vector<2x4xf32>
      %282 = arith.mulf %266, %274 : vector<2x4xf32>
      %283 = arith.addf %281, %282 : vector<2x4xf32>
      %284 = math.tanh %283 : vector<2x4xf32>
      %285 = arith.mulf %280, %284 : vector<2x4xf32>
      %286 = arith.index_cast %225 : i32 to index
      %c0_83 = arith.constant 0 : index
      %c0_84 = arith.constant 0 : index
      %287 = vector.load %arg7[%286, %c0_83, %c0_84] : memref<160x2x4xf32, #tpu.memory_space<vmem>>, vector<1x2x4xf32>
      %288 = vector.shape_cast %287 : vector<1x2x4xf32> to vector<2x4xf32>
      %289 = vector.shape_cast %285 : vector<2x4xf32> to vector<1x2x4xf32>
      tpu.vector_store %arg7[%286, %c0_83, %c0_84], %289 {strides = array<i32>} : memref<160x2x4xf32, #tpu.memory_space<vmem>>, vector<1x2x4xf32>,
      %c8_i32_85 = arith.constant 8 : i32
      %290 = arith.muli %arg11, %c8_i32_85 : i32
      %c4_i32 = arith.constant 4 : i32
      %291 = arith.addi %290, %c4_i32 : i32
      %c2_i32_86 = arith.constant 2 : i32
      %292 = arith.muli %291, %c2_i32_86 : i32
      %293 = arith.index_cast %292 : i32 to index
      %c0_87 = arith.constant 0 : index
      %294 = vector.load %arg10[%293, %c0_87] : memref<320x16xf32, #tpu.memory_space<vmem>>, vector<2x16xf32>
      %cst_88 = arith.constant dense<0.000000e+00> : vector<2x16xf32>
      %295 = tpu.matmul %255, %0, %cst_88 {dimension_numbers = #tpu.dot_dimension_numbers<[1], [0], [0], [1], [0, 0, 1, 1], [], []>} : vector<2x4xf32>, vector<4x16xf32>, vector<2x16xf32> -> vector<2x16xf32>
      %296 = arith.addf %294, %295 : vector<2x16xf32>
      %297 = vector.extract_strided_slice %296 {offsets = [0, 0], sizes = [2, 4], strides = [1, 1]} : vector<2x16xf32> to vector<2x4xf32>
      %298 = arith.negf %297 : vector<2x4xf32>
      %299 = math.exp %298 : vector<2x4xf32>
      %cst_89 = arith.constant 1.000000e+00 : f32
      %300 = vector.broadcast %cst_89 : f32 to vector<2x4xf32>
      %301 = arith.addf %300, %299 : vector<2x4xf32>
      %302 = arith.divf %300, %301 : vector<2x4xf32>
      %303 = vector.extract_strided_slice %296 {offsets = [0, 4], sizes = [2, 4], strides = [1, 1]} : vector<2x16xf32> to vector<2x4xf32>
      %304 = arith.negf %303 : vector<2x4xf32>
      %305 = math.exp %304 : vector<2x4xf32>
      %cst_90 = arith.constant 1.000000e+00 : f32
      %306 = vector.broadcast %cst_90 : f32 to vector<2x4xf32>
      %307 = arith.addf %306, %305 : vector<2x4xf32>
      %308 = arith.divf %306, %307 : vector<2x4xf32>
      %309 = vector.extract_strided_slice %296 {offsets = [0, 8], sizes = [2, 4], strides = [1, 1]} : vector<2x16xf32> to vector<2x4xf32>
      %310 = math.tanh %309 : vector<2x4xf32>
      %311 = vector.extract_strided_slice %296 {offsets = [0, 12], sizes = [2, 4], strides = [1, 1]} : vector<2x16xf32> to vector<2x4xf32>
      %312 = arith.negf %311 : vector<2x4xf32>
      %313 = math.exp %312 : vector<2x4xf32>
      %cst_91 = arith.constant 1.000000e+00 : f32
      %314 = vector.broadcast %cst_91 : f32 to vector<2x4xf32>
      %315 = arith.addf %314, %313 : vector<2x4xf32>
      %316 = arith.divf %314, %315 : vector<2x4xf32>
      %317 = arith.mulf %308, %253 : vector<2x4xf32>
      %318 = arith.mulf %302, %310 : vector<2x4xf32>
      %319 = arith.addf %317, %318 : vector<2x4xf32>
      %320 = math.tanh %319 : vector<2x4xf32>
      %321 = arith.mulf %316, %320 : vector<2x4xf32>
      %cst_92 = arith.constant dense<0.000000e+00> : vector<2x16xf32>
      %322 = tpu.matmul %321, %1, %cst_92 {dimension_numbers = #tpu.dot_dimension_numbers<[1], [0], [0], [1], [0, 0, 1, 1], [], []>} : vector<2x4xf32>, vector<4x16xf32>, vector<2x16xf32> -> vector<2x16xf32>
      %cst_93 = arith.constant dense<0.000000e+00> : vector<2x16xf32>
      %323 = tpu.matmul %285, %2, %cst_93 {dimension_numbers = #tpu.dot_dimension_numbers<[1], [0], [0], [1], [0, 0, 1, 1], [], []>} : vector<2x4xf32>, vector<4x16xf32>, vector<2x16xf32> -> vector<2x16xf32>
      %324 = arith.addf %322, %323 : vector<2x16xf32>
      %325 = vector.broadcast %3 : vector<1x16xf32> to vector<2x16xf32>
      %326 = arith.addf %324, %325 : vector<2x16xf32>
      %327 = vector.extract_strided_slice %326 {offsets = [0, 0], sizes = [2, 4], strides = [1, 1]} : vector<2x16xf32> to vector<2x4xf32>
      %328 = arith.negf %327 : vector<2x4xf32>
      %329 = math.exp %328 : vector<2x4xf32>
      %cst_94 = arith.constant 1.000000e+00 : f32
      %330 = vector.broadcast %cst_94 : f32 to vector<2x4xf32>
      %331 = arith.addf %330, %329 : vector<2x4xf32>
      %332 = arith.divf %330, %331 : vector<2x4xf32>
      %333 = vector.extract_strided_slice %326 {offsets = [0, 4], sizes = [2, 4], strides = [1, 1]} : vector<2x16xf32> to vector<2x4xf32>
      %334 = arith.negf %333 : vector<2x4xf32>
      %335 = math.exp %334 : vector<2x4xf32>
      %cst_95 = arith.constant 1.000000e+00 : f32
      %336 = vector.broadcast %cst_95 : f32 to vector<2x4xf32>
      %337 = arith.addf %336, %335 : vector<2x4xf32>
      %338 = arith.divf %336, %337 : vector<2x4xf32>
      %339 = vector.extract_strided_slice %326 {offsets = [0, 8], sizes = [2, 4], strides = [1, 1]} : vector<2x16xf32> to vector<2x4xf32>
      %340 = math.tanh %339 : vector<2x4xf32>
      %341 = vector.extract_strided_slice %326 {offsets = [0, 12], sizes = [2, 4], strides = [1, 1]} : vector<2x16xf32> to vector<2x4xf32>
      %342 = arith.negf %341 : vector<2x4xf32>
      %343 = math.exp %342 : vector<2x4xf32>
      %cst_96 = arith.constant 1.000000e+00 : f32
      %344 = vector.broadcast %cst_96 : f32 to vector<2x4xf32>
      %345 = arith.addf %344, %343 : vector<2x4xf32>
      %346 = arith.divf %344, %345 : vector<2x4xf32>
      %347 = arith.mulf %338, %283 : vector<2x4xf32>
      %348 = arith.mulf %332, %340 : vector<2x4xf32>
      %349 = arith.addf %347, %348 : vector<2x4xf32>
      %350 = math.tanh %349 : vector<2x4xf32>
      %351 = arith.mulf %346, %350 : vector<2x4xf32>
      %352 = arith.index_cast %291 : i32 to index
      %c0_97 = arith.constant 0 : index
      %c0_98 = arith.constant 0 : index
      %353 = vector.load %arg7[%352, %c0_97, %c0_98] : memref<160x2x4xf32, #tpu.memory_space<vmem>>, vector<1x2x4xf32>
      %354 = vector.shape_cast %353 : vector<1x2x4xf32> to vector<2x4xf32>
      %355 = vector.shape_cast %351 : vector<2x4xf32> to vector<1x2x4xf32>
      tpu.vector_store %arg7[%352, %c0_97, %c0_98], %355 {strides = array<i32>} : memref<160x2x4xf32, #tpu.memory_space<vmem>>, vector<1x2x4xf32>,
      %c8_i32_99 = arith.constant 8 : i32
      %356 = arith.muli %arg11, %c8_i32_99 : i32
      %c5_i32 = arith.constant 5 : i32
      %357 = arith.addi %356, %c5_i32 : i32
      %c2_i32_100 = arith.constant 2 : i32
      %358 = arith.muli %357, %c2_i32_100 : i32
      %359 = arith.index_cast %358 : i32 to index
      %c0_101 = arith.constant 0 : index
      %360 = vector.load %arg10[%359, %c0_101] : memref<320x16xf32, #tpu.memory_space<vmem>>, vector<2x16xf32>
      %cst_102 = arith.constant dense<0.000000e+00> : vector<2x16xf32>
      %361 = tpu.matmul %321, %0, %cst_102 {dimension_numbers = #tpu.dot_dimension_numbers<[1], [0], [0], [1], [0, 0, 1, 1], [], []>} : vector<2x4xf32>, vector<4x16xf32>, vector<2x16xf32> -> vector<2x16xf32>
      %362 = arith.addf %360, %361 : vector<2x16xf32>
      %363 = vector.extract_strided_slice %362 {offsets = [0, 0], sizes = [2, 4], strides = [1, 1]} : vector<2x16xf32> to vector<2x4xf32>
      %364 = arith.negf %363 : vector<2x4xf32>
      %365 = math.exp %364 : vector<2x4xf32>
      %cst_103 = arith.constant 1.000000e+00 : f32
      %366 = vector.broadcast %cst_103 : f32 to vector<2x4xf32>
      %367 = arith.addf %366, %365 : vector<2x4xf32>
      %368 = arith.divf %366, %367 : vector<2x4xf32>
      %369 = vector.extract_strided_slice %362 {offsets = [0, 4], sizes = [2, 4], strides = [1, 1]} : vector<2x16xf32> to vector<2x4xf32>
      %370 = arith.negf %369 : vector<2x4xf32>
      %371 = math.exp %370 : vector<2x4xf32>
      %cst_104 = arith.constant 1.000000e+00 : f32
      %372 = vector.broadcast %cst_104 : f32 to vector<2x4xf32>
      %373 = arith.addf %372, %371 : vector<2x4xf32>
      %374 = arith.divf %372, %373 : vector<2x4xf32>
      %375 = vector.extract_strided_slice %362 {offsets = [0, 8], sizes = [2, 4], strides = [1, 1]} : vector<2x16xf32> to vector<2x4xf32>
      %376 = math.tanh %375 : vector<2x4xf32>
      %377 = vector.extract_strided_slice %362 {offsets = [0, 12], sizes = [2, 4], strides = [1, 1]} : vector<2x16xf32> to vector<2x4xf32>
      %378 = arith.negf %377 : vector<2x4xf32>
      %379 = math.exp %378 : vector<2x4xf32>
      %cst_105 = arith.constant 1.000000e+00 : f32
      %380 = vector.broadcast %cst_105 : f32 to vector<2x4xf32>
      %381 = arith.addf %380, %379 : vector<2x4xf32>
      %382 = arith.divf %380, %381 : vector<2x4xf32>
      %383 = arith.mulf %374, %319 : vector<2x4xf32>
      %384 = arith.mulf %368, %376 : vector<2x4xf32>
      %385 = arith.addf %383, %384 : vector<2x4xf32>
      %386 = math.tanh %385 : vector<2x4xf32>
      %387 = arith.mulf %382, %386 : vector<2x4xf32>
      %cst_106 = arith.constant dense<0.000000e+00> : vector<2x16xf32>
      %388 = tpu.matmul %387, %1, %cst_106 {dimension_numbers = #tpu.dot_dimension_numbers<[1], [0], [0], [1], [0, 0, 1, 1], [], []>} : vector<2x4xf32>, vector<4x16xf32>, vector<2x16xf32> -> vector<2x16xf32>
      %cst_107 = arith.constant dense<0.000000e+00> : vector<2x16xf32>
      %389 = tpu.matmul %351, %2, %cst_107 {dimension_numbers = #tpu.dot_dimension_numbers<[1], [0], [0], [1], [0, 0, 1, 1], [], []>} : vector<2x4xf32>, vector<4x16xf32>, vector<2x16xf32> -> vector<2x16xf32>
      %390 = arith.addf %388, %389 : vector<2x16xf32>
      %391 = vector.broadcast %3 : vector<1x16xf32> to vector<2x16xf32>
      %392 = arith.addf %390, %391 : vector<2x16xf32>
      %393 = vector.extract_strided_slice %392 {offsets = [0, 0], sizes = [2, 4], strides = [1, 1]} : vector<2x16xf32> to vector<2x4xf32>
      %394 = arith.negf %393 : vector<2x4xf32>
      %395 = math.exp %394 : vector<2x4xf32>
      %cst_108 = arith.constant 1.000000e+00 : f32
      %396 = vector.broadcast %cst_108 : f32 to vector<2x4xf32>
      %397 = arith.addf %396, %395 : vector<2x4xf32>
      %398 = arith.divf %396, %397 : vector<2x4xf32>
      %399 = vector.extract_strided_slice %392 {offsets = [0, 4], sizes = [2, 4], strides = [1, 1]} : vector<2x16xf32> to vector<2x4xf32>
      %400 = arith.negf %399 : vector<2x4xf32>
      %401 = math.exp %400 : vector<2x4xf32>
      %cst_109 = arith.constant 1.000000e+00 : f32
      %402 = vector.broadcast %cst_109 : f32 to vector<2x4xf32>
      %403 = arith.addf %402, %401 : vector<2x4xf32>
      %404 = arith.divf %402, %403 : vector<2x4xf32>
      %405 = vector.extract_strided_slice %392 {offsets = [0, 8], sizes = [2, 4], strides = [1, 1]} : vector<2x16xf32> to vector<2x4xf32>
      %406 = math.tanh %405 : vector<2x4xf32>
      %407 = vector.extract_strided_slice %392 {offsets = [0, 12], sizes = [2, 4], strides = [1, 1]} : vector<2x16xf32> to vector<2x4xf32>
      %408 = arith.negf %407 : vector<2x4xf32>
      %409 = math.exp %408 : vector<2x4xf32>
      %cst_110 = arith.constant 1.000000e+00 : f32
      %410 = vector.broadcast %cst_110 : f32 to vector<2x4xf32>
      %411 = arith.addf %410, %409 : vector<2x4xf32>
      %412 = arith.divf %410, %411 : vector<2x4xf32>
      %413 = arith.mulf %404, %349 : vector<2x4xf32>
      %414 = arith.mulf %398, %406 : vector<2x4xf32>
      %415 = arith.addf %413, %414 : vector<2x4xf32>
      %416 = math.tanh %415 : vector<2x4xf32>
      %417 = arith.mulf %412, %416 : vector<2x4xf32>
      %418 = arith.index_cast %357 : i32 to index
      %c0_111 = arith.constant 0 : index
      %c0_112 = arith.constant 0 : index
      %419 = vector.load %arg7[%418, %c0_111, %c0_112] : memref<160x2x4xf32, #tpu.memory_space<vmem>>, vector<1x2x4xf32>
      %420 = vector.shape_cast %419 : vector<1x2x4xf32> to vector<2x4xf32>
      %421 = vector.shape_cast %417 : vector<2x4xf32> to vector<1x2x4xf32>
      tpu.vector_store %arg7[%418, %c0_111, %c0_112], %421 {strides = array<i32>} : memref<160x2x4xf32, #tpu.memory_space<vmem>>, vector<1x2x4xf32>,
      %c8_i32_113 = arith.constant 8 : i32
      %422 = arith.muli %arg11, %c8_i32_113 : i32
      %c6_i32 = arith.constant 6 : i32
      %423 = arith.addi %422, %c6_i32 : i32
      %c2_i32_114 = arith.constant 2 : i32
      %424 = arith.muli %423, %c2_i32_114 : i32
      %425 = arith.index_cast %424 : i32 to index
      %c0_115 = arith.constant 0 : index
      %426 = vector.load %arg10[%425, %c0_115] : memref<320x16xf32, #tpu.memory_space<vmem>>, vector<2x16xf32>
      %cst_116 = arith.constant dense<0.000000e+00> : vector<2x16xf32>
      %427 = tpu.matmul %387, %0, %cst_116 {dimension_numbers = #tpu.dot_dimension_numbers<[1], [0], [0], [1], [0, 0, 1, 1], [], []>} : vector<2x4xf32>, vector<4x16xf32>, vector<2x16xf32> -> vector<2x16xf32>
      %428 = arith.addf %426, %427 : vector<2x16xf32>
      %429 = vector.extract_strided_slice %428 {offsets = [0, 0], sizes = [2, 4], strides = [1, 1]} : vector<2x16xf32> to vector<2x4xf32>
      %430 = arith.negf %429 : vector<2x4xf32>
      %431 = math.exp %430 : vector<2x4xf32>
      %cst_117 = arith.constant 1.000000e+00 : f32
      %432 = vector.broadcast %cst_117 : f32 to vector<2x4xf32>
      %433 = arith.addf %432, %431 : vector<2x4xf32>
      %434 = arith.divf %432, %433 : vector<2x4xf32>
      %435 = vector.extract_strided_slice %428 {offsets = [0, 4], sizes = [2, 4], strides = [1, 1]} : vector<2x16xf32> to vector<2x4xf32>
      %436 = arith.negf %435 : vector<2x4xf32>
      %437 = math.exp %436 : vector<2x4xf32>
      %cst_118 = arith.constant 1.000000e+00 : f32
      %438 = vector.broadcast %cst_118 : f32 to vector<2x4xf32>
      %439 = arith.addf %438, %437 : vector<2x4xf32>
      %440 = arith.divf %438, %439 : vector<2x4xf32>
      %441 = vector.extract_strided_slice %428 {offsets = [0, 8], sizes = [2, 4], strides = [1, 1]} : vector<2x16xf32> to vector<2x4xf32>
      %442 = math.tanh %441 : vector<2x4xf32>
      %443 = vector.extract_strided_slice %428 {offsets = [0, 12], sizes = [2, 4], strides = [1, 1]} : vector<2x16xf32> to vector<2x4xf32>
      %444 = arith.negf %443 : vector<2x4xf32>
      %445 = math.exp %444 : vector<2x4xf32>
      %cst_119 = arith.constant 1.000000e+00 : f32
      %446 = vector.broadcast %cst_119 : f32 to vector<2x4xf32>
      %447 = arith.addf %446, %445 : vector<2x4xf32>
      %448 = arith.divf %446, %447 : vector<2x4xf32>
      %449 = arith.mulf %440, %385 : vector<2x4xf32>
      %450 = arith.mulf %434, %442 : vector<2x4xf32>
      %451 = arith.addf %449, %450 : vector<2x4xf32>
      %452 = math.tanh %451 : vector<2x4xf32>
      %453 = arith.mulf %448, %452 : vector<2x4xf32>
      %cst_120 = arith.constant dense<0.000000e+00> : vector<2x16xf32>
      %454 = tpu.matmul %453, %1, %cst_120 {dimension_numbers = #tpu.dot_dimension_numbers<[1], [0], [0], [1], [0, 0, 1, 1], [], []>} : vector<2x4xf32>, vector<4x16xf32>, vector<2x16xf32> -> vector<2x16xf32>
      %cst_121 = arith.constant dense<0.000000e+00> : vector<2x16xf32>
      %455 = tpu.matmul %417, %2, %cst_121 {dimension_numbers = #tpu.dot_dimension_numbers<[1], [0], [0], [1], [0, 0, 1, 1], [], []>} : vector<2x4xf32>, vector<4x16xf32>, vector<2x16xf32> -> vector<2x16xf32>
      %456 = arith.addf %454, %455 : vector<2x16xf32>
      %457 = vector.broadcast %3 : vector<1x16xf32> to vector<2x16xf32>
      %458 = arith.addf %456, %457 : vector<2x16xf32>
      %459 = vector.extract_strided_slice %458 {offsets = [0, 0], sizes = [2, 4], strides = [1, 1]} : vector<2x16xf32> to vector<2x4xf32>
      %460 = arith.negf %459 : vector<2x4xf32>
      %461 = math.exp %460 : vector<2x4xf32>
      %cst_122 = arith.constant 1.000000e+00 : f32
      %462 = vector.broadcast %cst_122 : f32 to vector<2x4xf32>
      %463 = arith.addf %462, %461 : vector<2x4xf32>
      %464 = arith.divf %462, %463 : vector<2x4xf32>
      %465 = vector.extract_strided_slice %458 {offsets = [0, 4], sizes = [2, 4], strides = [1, 1]} : vector<2x16xf32> to vector<2x4xf32>
      %466 = arith.negf %465 : vector<2x4xf32>
      %467 = math.exp %466 : vector<2x4xf32>
      %cst_123 = arith.constant 1.000000e+00 : f32
      %468 = vector.broadcast %cst_123 : f32 to vector<2x4xf32>
      %469 = arith.addf %468, %467 : vector<2x4xf32>
      %470 = arith.divf %468, %469 : vector<2x4xf32>
      %471 = vector.extract_strided_slice %458 {offsets = [0, 8], sizes = [2, 4], strides = [1, 1]} : vector<2x16xf32> to vector<2x4xf32>
      %472 = math.tanh %471 : vector<2x4xf32>
      %473 = vector.extract_strided_slice %458 {offsets = [0, 12], sizes = [2, 4], strides = [1, 1]} : vector<2x16xf32> to vector<2x4xf32>
      %474 = arith.negf %473 : vector<2x4xf32>
      %475 = math.exp %474 : vector<2x4xf32>
      %cst_124 = arith.constant 1.000000e+00 : f32
      %476 = vector.broadcast %cst_124 : f32 to vector<2x4xf32>
      %477 = arith.addf %476, %475 : vector<2x4xf32>
      %478 = arith.divf %476, %477 : vector<2x4xf32>
      %479 = arith.mulf %470, %415 : vector<2x4xf32>
      %480 = arith.mulf %464, %472 : vector<2x4xf32>
      %481 = arith.addf %479, %480 : vector<2x4xf32>
      %482 = math.tanh %481 : vector<2x4xf32>
      %483 = arith.mulf %478, %482 : vector<2x4xf32>
      %484 = arith.index_cast %423 : i32 to index
      %c0_125 = arith.constant 0 : index
      %c0_126 = arith.constant 0 : index
      %485 = vector.load %arg7[%484, %c0_125, %c0_126] : memref<160x2x4xf32, #tpu.memory_space<vmem>>, vector<1x2x4xf32>
      %486 = vector.shape_cast %485 : vector<1x2x4xf32> to vector<2x4xf32>
      %487 = vector.shape_cast %483 : vector<2x4xf32> to vector<1x2x4xf32>
      tpu.vector_store %arg7[%484, %c0_125, %c0_126], %487 {strides = array<i32>} : memref<160x2x4xf32, #tpu.memory_space<vmem>>, vector<1x2x4xf32>,
      %c8_i32_127 = arith.constant 8 : i32
      %488 = arith.muli %arg11, %c8_i32_127 : i32
      %c7_i32 = arith.constant 7 : i32
      %489 = arith.addi %488, %c7_i32 : i32
      %c2_i32_128 = arith.constant 2 : i32
      %490 = arith.muli %489, %c2_i32_128 : i32
      %491 = arith.index_cast %490 : i32 to index
      %c0_129 = arith.constant 0 : index
      %492 = vector.load %arg10[%491, %c0_129] : memref<320x16xf32, #tpu.memory_space<vmem>>, vector<2x16xf32>
      %cst_130 = arith.constant dense<0.000000e+00> : vector<2x16xf32>
      %493 = tpu.matmul %453, %0, %cst_130 {dimension_numbers = #tpu.dot_dimension_numbers<[1], [0], [0], [1], [0, 0, 1, 1], [], []>} : vector<2x4xf32>, vector<4x16xf32>, vector<2x16xf32> -> vector<2x16xf32>
      %494 = arith.addf %492, %493 : vector<2x16xf32>
      %495 = vector.extract_strided_slice %494 {offsets = [0, 0], sizes = [2, 4], strides = [1, 1]} : vector<2x16xf32> to vector<2x4xf32>
      %496 = arith.negf %495 : vector<2x4xf32>
      %497 = math.exp %496 : vector<2x4xf32>
      %cst_131 = arith.constant 1.000000e+00 : f32
      %498 = vector.broadcast %cst_131 : f32 to vector<2x4xf32>
      %499 = arith.addf %498, %497 : vector<2x4xf32>
      %500 = arith.divf %498, %499 : vector<2x4xf32>
      %501 = vector.extract_strided_slice %494 {offsets = [0, 4], sizes = [2, 4], strides = [1, 1]} : vector<2x16xf32> to vector<2x4xf32>
      %502 = arith.negf %501 : vector<2x4xf32>
      %503 = math.exp %502 : vector<2x4xf32>
      %cst_132 = arith.constant 1.000000e+00 : f32
      %504 = vector.broadcast %cst_132 : f32 to vector<2x4xf32>
      %505 = arith.addf %504, %503 : vector<2x4xf32>
      %506 = arith.divf %504, %505 : vector<2x4xf32>
      %507 = vector.extract_strided_slice %494 {offsets = [0, 8], sizes = [2, 4], strides = [1, 1]} : vector<2x16xf32> to vector<2x4xf32>
      %508 = math.tanh %507 : vector<2x4xf32>
      %509 = vector.extract_strided_slice %494 {offsets = [0, 12], sizes = [2, 4], strides = [1, 1]} : vector<2x16xf32> to vector<2x4xf32>
      %510 = arith.negf %509 : vector<2x4xf32>
      %511 = math.exp %510 : vector<2x4xf32>
      %cst_133 = arith.constant 1.000000e+00 : f32
      %512 = vector.broadcast %cst_133 : f32 to vector<2x4xf32>
      %513 = arith.addf %512, %511 : vector<2x4xf32>
      %514 = arith.divf %512, %513 : vector<2x4xf32>
      %515 = arith.mulf %506, %451 : vector<2x4xf32>
      %516 = arith.mulf %500, %508 : vector<2x4xf32>
      %517 = arith.addf %515, %516 : vector<2x4xf32>
      %518 = math.tanh %517 : vector<2x4xf32>
      %519 = arith.mulf %514, %518 : vector<2x4xf32>
      %cst_134 = arith.constant dense<0.000000e+00> : vector<2x16xf32>
      %520 = tpu.matmul %519, %1, %cst_134 {dimension_numbers = #tpu.dot_dimension_numbers<[1], [0], [0], [1], [0, 0, 1, 1], [], []>} : vector<2x4xf32>, vector<4x16xf32>, vector<2x16xf32> -> vector<2x16xf32>
      %cst_135 = arith.constant dense<0.000000e+00> : vector<2x16xf32>
      %521 = tpu.matmul %483, %2, %cst_135 {dimension_numbers = #tpu.dot_dimension_numbers<[1], [0], [0], [1], [0, 0, 1, 1], [], []>} : vector<2x4xf32>, vector<4x16xf32>, vector<2x16xf32> -> vector<2x16xf32>
      %522 = arith.addf %520, %521 : vector<2x16xf32>
      %523 = vector.broadcast %3 : vector<1x16xf32> to vector<2x16xf32>
      %524 = arith.addf %522, %523 : vector<2x16xf32>
      %525 = vector.extract_strided_slice %524 {offsets = [0, 0], sizes = [2, 4], strides = [1, 1]} : vector<2x16xf32> to vector<2x4xf32>
      %526 = arith.negf %525 : vector<2x4xf32>
      %527 = math.exp %526 : vector<2x4xf32>
      %cst_136 = arith.constant 1.000000e+00 : f32
      %528 = vector.broadcast %cst_136 : f32 to vector<2x4xf32>
      %529 = arith.addf %528, %527 : vector<2x4xf32>
      %530 = arith.divf %528, %529 : vector<2x4xf32>
      %531 = vector.extract_strided_slice %524 {offsets = [0, 4], sizes = [2, 4], strides = [1, 1]} : vector<2x16xf32> to vector<2x4xf32>
      %532 = arith.negf %531 : vector<2x4xf32>
      %533 = math.exp %532 : vector<2x4xf32>
      %cst_137 = arith.constant 1.000000e+00 : f32
      %534 = vector.broadcast %cst_137 : f32 to vector<2x4xf32>
      %535 = arith.addf %534, %533 : vector<2x4xf32>
      %536 = arith.divf %534, %535 : vector<2x4xf32>
      %537 = vector.extract_strided_slice %524 {offsets = [0, 8], sizes = [2, 4], strides = [1, 1]} : vector<2x16xf32> to vector<2x4xf32>
      %538 = math.tanh %537 : vector<2x4xf32>
      %539 = vector.extract_strided_slice %524 {offsets = [0, 12], sizes = [2, 4], strides = [1, 1]} : vector<2x16xf32> to vector<2x4xf32>
      %540 = arith.negf %539 : vector<2x4xf32>
      %541 = math.exp %540 : vector<2x4xf32>
      %cst_138 = arith.constant 1.000000e+00 : f32
      %542 = vector.broadcast %cst_138 : f32 to vector<2x4xf32>
      %543 = arith.addf %542, %541 : vector<2x4xf32>
      %544 = arith.divf %542, %543 : vector<2x4xf32>
      %545 = arith.mulf %536, %481 : vector<2x4xf32>
      %546 = arith.mulf %530, %538 : vector<2x4xf32>
      %547 = arith.addf %545, %546 : vector<2x4xf32>
      %548 = math.tanh %547 : vector<2x4xf32>
      %549 = arith.mulf %544, %548 : vector<2x4xf32>
      %550 = arith.index_cast %489 : i32 to index
      %c0_139 = arith.constant 0 : index
      %c0_140 = arith.constant 0 : index
      %551 = vector.load %arg7[%550, %c0_139, %c0_140] : memref<160x2x4xf32, #tpu.memory_space<vmem>>, vector<1x2x4xf32>
      %552 = vector.shape_cast %551 : vector<1x2x4xf32> to vector<2x4xf32>
      %553 = vector.shape_cast %549 : vector<2x4xf32> to vector<1x2x4xf32>
      tpu.vector_store %arg7[%550, %c0_139, %c0_140], %553 {strides = array<i32>} : memref<160x2x4xf32, #tpu.memory_space<vmem>>, vector<1x2x4xf32>,
      scf.yield %519, %517, %549, %547 : vector<2x4xf32>, vector<2x4xf32>, vector<2x4xf32>, vector<2x4xf32>
    }
    %c20_i32_16 = arith.constant 20 : i32
    %c0_17 = arith.constant 0 : index
    %c0_18 = arith.constant 0 : index
    %c0_19 = arith.constant 0 : index
    %14 = vector.load %arg8[%c0_17, %c0_18, %c0_19] : memref<2x2x4xf32, #tpu.memory_space<vmem>>, vector<1x2x4xf32>
    %15 = vector.shape_cast %14 : vector<1x2x4xf32> to vector<2x4xf32>
    %16 = vector.shape_cast %13#0 : vector<2x4xf32> to vector<1x2x4xf32>
    tpu.vector_store %arg8[%c0_17, %c0_18, %c0_19], %16 {strides = array<i32>} : memref<2x2x4xf32, #tpu.memory_space<vmem>>, vector<1x2x4xf32>,
    %c1 = arith.constant 1 : index
    %c0_20 = arith.constant 0 : index
    %c0_21 = arith.constant 0 : index
    %17 = vector.load %arg8[%c1, %c0_20, %c0_21] : memref<2x2x4xf32, #tpu.memory_space<vmem>>, vector<1x2x4xf32>
    %18 = vector.shape_cast %17 : vector<1x2x4xf32> to vector<2x4xf32>
    %19 = vector.shape_cast %13#2 : vector<2x4xf32> to vector<1x2x4xf32>
    tpu.vector_store %arg8[%c1, %c0_20, %c0_21], %19 {strides = array<i32>} : memref<2x2x4xf32, #tpu.memory_space<vmem>>, vector<1x2x4xf32>,
    %c0_22 = arith.constant 0 : index
    %c0_23 = arith.constant 0 : index
    %c0_24 = arith.constant 0 : index
    %20 = vector.load %arg9[%c0_22, %c0_23, %c0_24] : memref<2x2x4xf32, #tpu.memory_space<vmem>>, vector<1x2x4xf32>
    %21 = vector.shape_cast %20 : vector<1x2x4xf32> to vector<2x4xf32>
    %22 = vector.shape_cast %13#1 : vector<2x4xf32> to vector<1x2x4xf32>
    tpu.vector_store %arg9[%c0_22, %c0_23, %c0_24], %22 {strides = array<i32>} : memref<2x2x4xf32, #tpu.memory_space<vmem>>, vector<1x2x4xf32>,
    %c1_25 = arith.constant 1 : index
    %c0_26 = arith.constant 0 : index
    %c0_27 = arith.constant 0 : index
    %23 = vector.load %arg9[%c1_25, %c0_26, %c0_27] : memref<2x2x4xf32, #tpu.memory_space<vmem>>, vector<1x2x4xf32>
    %24 = vector.shape_cast %23 : vector<1x2x4xf32> to vector<2x4xf32>
    %25 = vector.shape_cast %13#3 : vector<2x4xf32> to vector<1x2x4xf32>
    tpu.vector_store %arg9[%c1_25, %c0_26, %c0_27], %25 {strides = array<i32>} : memref<2x2x4xf32, #tpu.memory_space<vmem>>, vector<1x2x4xf32>,
    return
  }
}

</mosaic_0001>

<llo_original>
// kernel: tpu_custom_call.1
$region0: #{tpu_custom_call.1}
  #allocation0 [shape = 'u32[]', space=smem, size = 0x4, offset = 0x4, fixed_abs, tag = 'smem constant byte address 0x4 - core index']
  #allocation1 [shape = 'u32[144,128]{1,0:T(1,128)}', space=vmem, size = 0x12000, scoped, tag = 'internal scratch']
  #allocation2 [shape = 'f32[320,16]{1,0:T(8,128)}', space=vmem, size = 0x28000, scoped, tag = 'scratch operand']
  %s0 = inlined_call_operand.vmem [shape: f32[320,4], index: 0, kind: input, shape index: {}]
  %s1 = inlined_call_operand.vmem [shape: f32[4,16], index: 1, kind: input, shape index: {}]
  %s2 = inlined_call_operand.vmem [shape: f32[4,16], index: 2, kind: input, shape index: {}]
  %s3 = inlined_call_operand.vmem [shape: f32[1,16], index: 3, kind: input, shape index: {}]
  %s4 = inlined_call_operand.vmem [shape: f32[4,16], index: 4, kind: input, shape index: {}]
  %s5 = inlined_call_operand.vmem [shape: f32[4,16], index: 5, kind: input, shape index: {}]
  %s6 = inlined_call_operand.vmem [shape: f32[1,16], index: 6, kind: input, shape index: {}]
  %s7 = inlined_call_operand.vmem [shape: f32[160,2,4], index: 7, kind: output, shape index: {0}]
  %s8 = inlined_call_operand.hbm [shape: f32[2,2,4], index: 8, kind: output, shape index: {1}]
  %s9 = inlined_call_operand.hbm [shape: f32[2,2,4], index: 9, kind: output, shape index: {2}]
  %10 = xla_tuple %s7, %s8, %s9
  %s11 = sld [smem:[#allocation0]]
  $region61: #{tpu_custom_call.1} parent=0
    _
  %s13 = ssub.s32 1, %s11
  %s14 = scalar_select 0, %s13, %s11
  $region1: #{tpu_custom_call.1} parent=0
    #allocation3 [shape = 'u8[2048]{0}', space=vmem, size = 0x800, scoped, tag = 'output window, operand 1, single buffered']
    #allocation4 [shape = 's32[1]{0}', space=sflag, size = 0x4, scoped, tag = 'scoped memory for tpu_custom_call.1']
    #allocation5 [shape = 'u8[2048]{0}', space=vmem, size = 0x800, scoped, tag = 'output window, operand 2, single buffered']
    #allocation6 [shape = 's32[1]{0}', space=sflag, size = 0x4, scoped, tag = 'scoped memory for tpu_custom_call.1']
    %15 = vsyncpa [#allocation4], 0
    %16 = vsyncpa [#allocation6], 0
    // Predicated region
    $region2: #{tpu_custom_call.1} parent=1 // pred_check
      _
    $region3: #{tpu_custom_call.1} parent=1 // pred_check_branch
      %18 = sbr.rel (0) target = $region5
    $region4: #{tpu_custom_call.1} parent=1 // pred_region
      _
    $region5: #{tpu_custom_call.1} parent=1 // pred_fallthru
      _
    // Predicated region
    $region6: #{tpu_custom_call.1} parent=1 // pred_check
      _
    $region7: #{tpu_custom_call.1} parent=1 // pred_check_branch
      %20 = sbr.rel (0) target = $region9
    $region8: #{tpu_custom_call.1} parent=1 // pred_region
      _
    $region9: #{tpu_custom_call.1} parent=1 // pred_fallthru
      _
    // Predicated region
    $region10: #{tpu_custom_call.1} parent=1 // pred_check
      _
    $region11: #{tpu_custom_call.1} parent=1 // pred_check_branch
      %22 = sbr.rel (0) target = $region13
    $region12: #{tpu_custom_call.1} parent=1 // pred_region
      _
    $region13: #{tpu_custom_call.1} parent=1 // pred_fallthru
      _
    // Predicated region
    $region14: #{tpu_custom_call.1} parent=1 // pred_check
      _
    $region15: #{tpu_custom_call.1} parent=1 // pred_check_branch
      %24 = sbr.rel (0) target = $region17
    $region16: #{tpu_custom_call.1} parent=1 // pred_region
      _
    $region17: #{tpu_custom_call.1} parent=1 // pred_fallthru
      _
    // Predicated region
    $region18: #{tpu_custom_call.1} parent=1 // pred_check
      _
    $region19: #{tpu_custom_call.1} parent=1 // pred_check_branch
      %26 = sbr.rel (0) target = $region21
    $region20: #{tpu_custom_call.1} parent=1 // pred_region
      _
    $region21: #{tpu_custom_call.1} parent=1 // pred_fallthru
      _
    // Predicated region
    $region22: #{tpu_custom_call.1} parent=1 // pred_check
      _
    $region23: #{tpu_custom_call.1} parent=1 // pred_check_branch
      %28 = sbr.rel (0) target = $region25
    $region24: #{tpu_custom_call.1} parent=1 // pred_region
      _
    $region25: #{tpu_custom_call.1} parent=1 // pred_fallthru
      _
    // Predicated region
    $region26: #{tpu_custom_call.1} parent=1 // pred_check
      _
    $region27: #{tpu_custom_call.1} parent=1 // pred_check_branch
      %30 = sbr.rel (0) target = $region29
    $region28: #{tpu_custom_call.1} parent=1 // pred_region
      _
    $region29: #{tpu_custom_call.1} parent=1 // pred_fallthru
      _
    %v31 = vld [vmem:[%s2] sm:$0xf]
    %v32 = vld [vmem:[%s4] sm:$0xf]
    %v33 = vld [vmem:[%s5] sm:$0xf]
    %v34 = vld [vmem:[%s6] sm:$0x1]
    %v35 = vld [vmem:[%s0] sm:$0xff]
    %v36 = vld [vmem:[%s0 + $0x8] sm:$0xff]
    %v37 = vld [vmem:[%s0 + $0x10] sm:$0xff]
    %v38 = vld [vmem:[%s0 + $0x18] sm:$0xff]
    %v39 = vld [vmem:[%s0 + $0x20] sm:$0xff]
    %v40 = vld [vmem:[%s0 + $0x28] sm:$0xff]
    %v41 = vld [vmem:[%s0 + $0x30] sm:$0xff]
    %v42 = vld [vmem:[%s0 + $0x38] sm:$0xff]
    %v43 = vld [vmem:[%s0 + $0x40] sm:$0xff]
    %v44 = vld [vmem:[%s0 + $0x48] sm:$0xff]
    %v45 = vld [vmem:[%s0 + $0x50] sm:$0xff]
    %v46 = vld [vmem:[%s0 + $0x58] sm:$0xff]
    %v47 = vld [vmem:[%s0 + $0x60] sm:$0xff]
    %v48 = vld [vmem:[%s0 + $0x68] sm:$0xff]
    %v49 = vld [vmem:[%s0 + $0x70] sm:$0xff]
    %v50 = vld [vmem:[%s0 + $0x78] sm:$0xff]
    %v51 = vld [vmem:[%s0 + $0x80] sm:$0xff]
    %v52 = vld [vmem:[%s0 + $0x88] sm:$0xff]
    %v53 = vld [vmem:[%s0 + $0x90] sm:$0xff]
    %v54 = vld [vmem:[%s0 + $0x98] sm:$0xff]
    %v55 = vld [vmem:[%s0 + $0xa0] sm:$0xff]
    %v56 = vld [vmem:[%s0 + $0xa8] sm:$0xff]
    %v57 = vld [vmem:[%s0 + $0xb0] sm:$0xff]
    %v58 = vld [vmem:[%s0 + $0xb8] sm:$0xff]
    %v59 = vld [vmem:[%s0 + $0xc0] sm:$0xff]
    %v60 = vld [vmem:[%s0 + $0xc8] sm:$0xff]
    %v61 = vld [vmem:[%s0 + $0xd0] sm:$0xff]
    %v62 = vld [vmem:[%s0 + $0xd8] sm:$0xff]
    %v63 = vld [vmem:[%s0 + $0xe0] sm:$0xff]
    %v64 = vld [vmem:[%s0 + $0xe8] sm:$0xff]
    %v65 = vld [vmem:[%s0 + $0xf0] sm:$0xff]
    %v66 = vld [vmem:[%s0 + $0xf8] sm:$0xff]
    %v67 = vld [vmem:[%s0 + $0x100] sm:$0xff]
    %v68 = vld [vmem:[%s0 + $0x108] sm:$0xff]
    %v69 = vld [vmem:[%s0 + $0x110] sm:$0xff]
    %v70 = vld [vmem:[%s0 + $0x118] sm:$0xff]
    %v71 = vld [vmem:[%s0 + $0x120] sm:$0xff]
    %v72 = vld [vmem:[%s0 + $0x128] sm:$0xff]
    %v73 = vld [vmem:[%s0 + $0x130] sm:$0xff]
    %v74 = vld [vmem:[%s0 + $0x138] sm:$0xff]
    %v75 = vld [vmem:[%s1] sm:$0xf]
    %v76 = vld [vmem:[%s3] sm:$0x1]
    %v78 = vlaneseq
    %v79 = vshrl.u32 %v78, 7
    %v80 = vsub.s32 0, %v79
    %v81 = vrot.slane %v76, %v80
    %vm83 = vcmask 31744
    %v85 = vsel %vm83, %v35, 0
    %v88 = vsel %vm83, %v36, 0
    %v91 = vsel %vm83, %v37, 0
    %v94 = vsel %vm83, %v38, 0
    %v97 = vsel %vm83, %v39, 0
    %v100 = vsel %vm83, %v40, 0
    %v103 = vsel %vm83, %v41, 0
    %v106 = vsel %vm83, %v42, 0
    %v109 = vsel %vm83, %v43, 0
    %v112 = vsel %vm83, %v44, 0
    %v115 = vsel %vm83, %v45, 0
    %v118 = vsel %vm83, %v46, 0
    %v121 = vsel %vm83, %v47, 0
    %v124 = vsel %vm83, %v48, 0
    %v127 = vsel %vm83, %v49, 0
    %v130 = vsel %vm83, %v50, 0
    %v133 = vsel %vm83, %v51, 0
    %v136 = vsel %vm83, %v52, 0
    %v139 = vsel %vm83, %v53, 0
    %v142 = vsel %vm83, %v54, 0
    %v145 = vsel %vm83, %v55, 0
    %v148 = vsel %vm83, %v56, 0
    %v151 = vsel %vm83, %v57, 0
    %v154 = vsel %vm83, %v58, 0
    %v157 = vsel %vm83, %v59, 0
    %v160 = vsel %vm83, %v60, 0
    %v163 = vsel %vm83, %v61, 0
    %v166 = vsel %vm83, %v62, 0
    %v169 = vsel %vm83, %v63, 0
    %v172 = vsel %vm83, %v64, 0
    %v175 = vsel %vm83, %v65, 0
    %v178 = vsel %vm83, %v66, 0
    %v181 = vsel %vm83, %v67, 0
    %v184 = vsel %vm83, %v68, 0
    %v187 = vsel %vm83, %v69, 0
    %v190 = vsel %vm83, %v70, 0
    %v193 = vsel %vm83, %v71, 0
    %v196 = vsel %vm83, %v72, 0
    %v199 = vsel %vm83, %v73, 0
    %v202 = vsel %vm83, %v74, 0
    %vm204 = vcmask 1043456
    %v206 = vsel %vm204, %v75, 0
    %208 = vmatprep.subr.mxu0 0.0
    %209 = vmatpush1.msra.mxu0 0.0
    %210 = vmatprep.subr.mxu0 0.0
    %211 = vmatpush1.msra.mxu0 0.0
    %212 = vmatprep.subr.mxu0 0.0
    %213 = vmatpush1.msra.mxu0 0.0
    %214 = vmatprep.subr.mxu0 0.0
    %215 = vmatpush1.msra.mxu0 0.0
    %216 = vmatprep.subr.mxu0 0.0
    %217 = vmatpush1.msra.mxu0 0.0
    %218 = vmatprep.subr.mxu0 0.0
    %219 = vmatpush1.msra.mxu0 0.0
    %220 = vmatprep.subr.mxu0 0.0
    %221 = vmatpush1.msra.mxu0 0.0
    %222 = vmatprep.subr.mxu0 0.0
    %223 = vmatpush1.msra.mxu0 0.0
    %224 = vmatprep.subr.mxu0 0.0
    %225 = vmatpush1.msra.mxu0 0.0
    %226 = vmatprep.subr.mxu0 0.0
    %227 = vmatpush1.msra.mxu0 0.0
    %228 = vmatprep.subr.mxu0 0.0
    %229 = vmatpush1.msra.mxu0 0.0
    %230 = vmatprep.subr.mxu0 0.0
    %231 = vmatpush1.msra.mxu0 0.0
    %232 = vmatprep.subr.mxu0 0.0
    %233 = vmatpush1.msra.mxu0 0.0
    %234 = vmatprep.subr.mxu0 0.0
    %235 = vmatpush1.msra.mxu0 0.0
    %236 = vmatprep.subr.mxu0 0.0
    %237 = vmatpush1.msra.mxu0 0.0
    %238 = vmatprep.subr.mxu0 0.0
    %239 = vmatpush1.msra.mxu0 %v206
    %240 = vmatprep.subr.mxu0 0.0
    %241 = vmatpush2.msra.mxu0 0.0
    %242 = vmatprep.subr.mxu0 0.0
    %243 = vmatpush2.msra.mxu0 0.0
    %244 = vmatprep.subr.mxu0 0.0
    %245 = vmatpush2.msra.mxu0 0.0
    %246 = vmatprep.subr.mxu0 0.0
    %247 = vmatpush2.msra.mxu0 0.0
    %248 = vmatprep.subr.mxu0 0.0
    %249 = vmatpush2.msra.mxu0 0.0
    %250 = vmatprep.subr.mxu0 0.0
    %251 = vmatpush2.msra.mxu0 0.0
    %252 = vmatprep.subr.mxu0 0.0
    %253 = vmatpush2.msra.mxu0 0.0
    %254 = vmatprep.subr.mxu0 0.0
    %255 = vmatpush2.msra.mxu0 0.0
    %256 = vmatprep.subr.mxu0 0.0
    %257 = vmatpush2.msra.mxu0 0.0
    %258 = vmatprep.subr.mxu0 0.0
    %259 = vmatpush2.msra.mxu0 0.0
    %260 = vmatprep.subr.mxu0 0.0
    %261 = vmatpush2.msra.mxu0 0.0
    %262 = vmatprep.subr.mxu0 0.0
    %263 = vmatpush2.msra.mxu0 0.0
    %264 = vmatprep.subr.mxu0 0.0
    %265 = vmatpush2.msra.mxu0 0.0
    %266 = vmatprep.subr.mxu0 0.0
    %267 = vmatpush2.msra.mxu0 0.0
    %268 = vmatprep.subr.mxu0 0.0
    %269 = vmatpush2.msra.mxu0 0.0
    %270 = vmatprep.subr.mxu0 0.0
    %271 = vmatpush2.msra.mxu0 0.0
    %272 = vmatprep.mubr.f32.mxu0 0.0
    %273 = vmatmul.mubr.f32.gmra.mxu0 %v85
    %v274 = vpop.f32.mrf.mxu0
    %v275 = vadd.f32 %v81, %v274
    %v276 = vpop.f32.mrf.mxu0
    %277 = vmatprep.mubr.f32.mxu0 0.0
    %278 = vmatmul.mubr.f32.gmra.mxu0 %v88
    %v279 = vpop.f32.mrf.mxu0
    %v280 = vadd.f32 %v81, %v279
    %v281 = vpop.f32.mrf.mxu0
    %282 = vmatprep.mubr.f32.mxu0 0.0
    %283 = vmatmul.mubr.f32.gmra.mxu0 %v91
    %v284 = vpop.f32.mrf.mxu0
    %v285 = vadd.f32 %v81, %v284
    %v286 = vpop.f32.mrf.mxu0
    %287 = vmatprep.mubr.f32.mxu0 0.0
    %288 = vmatmul.mubr.f32.gmra.mxu0 %v94
    %v289 = vpop.f32.mrf.mxu0
    %v290 = vadd.f32 %v81, %v289
    %v291 = vpop.f32.mrf.mxu0
    %292 = vmatprep.mubr.f32.mxu0 0.0
    %293 = vmatmul.mubr.f32.gmra.mxu0 %v97
    %v294 = vpop.f32.mrf.mxu0
    %v295 = vadd.f32 %v81, %v294
    %v296 = vpop.f32.mrf.mxu0
    %297 = vmatprep.mubr.f32.mxu0 0.0
    %298 = vmatmul.mubr.f32.gmra.mxu0 %v100
    %v299 = vpop.f32.mrf.mxu0
    %v300 = vadd.f32 %v81, %v299
    %v301 = vpop.f32.mrf.mxu0
    %302 = vmatprep.mubr.f32.mxu0 0.0
    %303 = vmatmul.mubr.f32.gmra.mxu0 %v103
    %v304 = vpop.f32.mrf.mxu0
    %v305 = vadd.f32 %v81, %v304
    %v306 = vpop.f32.mrf.mxu0
    %307 = vmatprep.mubr.f32.mxu0 0.0
    %308 = vmatmul.mubr.f32.gmra.mxu0 %v106
    %v309 = vpop.f32.mrf.mxu0
    %v310 = vadd.f32 %v81, %v309
    %v311 = vpop.f32.mrf.mxu0
    %312 = vmatprep.mubr.f32.mxu0 0.0
    %313 = vmatmul.mubr.f32.gmra.mxu0 %v109
    %v314 = vpop.f32.mrf.mxu0
    %v315 = vadd.f32 %v81, %v314
    %v316 = vpop.f32.mrf.mxu0
    %317 = vmatprep.mubr.f32.mxu0 0.0
    %318 = vmatmul.mubr.f32.gmra.mxu0 %v112
    %v319 = vpop.f32.mrf.mxu0
    %v320 = vadd.f32 %v81, %v319
    %v321 = vpop.f32.mrf.mxu0
    %322 = vmatprep.mubr.f32.mxu0 0.0
    %323 = vmatmul.mubr.f32.gmra.mxu0 %v115
    %v324 = vpop.f32.mrf.mxu0
    %v325 = vadd.f32 %v81, %v324
    %v326 = vpop.f32.mrf.mxu0
    %327 = vmatprep.mubr.f32.mxu0 0.0
    %328 = vmatmul.mubr.f32.gmra.mxu0 %v118
    %v329 = vpop.f32.mrf.mxu0
    %v330 = vadd.f32 %v81, %v329
    %v331 = vpop.f32.mrf.mxu0
    %332 = vmatprep.mubr.f32.mxu0 0.0
    %333 = vmatmul.mubr.f32.gmra.mxu0 %v121
    %v334 = vpop.f32.mrf.mxu0
    %v335 = vadd.f32 %v81, %v334
    %v336 = vpop.f32.mrf.mxu0
    %337 = vmatprep.mubr.f32.mxu0 0.0
    %338 = vmatmul.mubr.f32.gmra.mxu0 %v124
    %v339 = vpop.f32.mrf.mxu0
    %v340 = vadd.f32 %v81, %v339
    %v341 = vpop.f32.mrf.mxu0
    %342 = vmatprep.mubr.f32.mxu0 0.0
    %343 = vmatmul.mubr.f32.gmra.mxu0 %v127
    %v344 = vpop.f32.mrf.mxu0
    %v345 = vadd.f32 %v81, %v344
    %v346 = vpop.f32.mrf.mxu0
    %347 = vmatprep.mubr.f32.mxu0 0.0
    %348 = vmatmul.mubr.f32.gmra.mxu0 %v130
    %v349 = vpop.f32.mrf.mxu0
    %v350 = vadd.f32 %v81, %v349
    %v351 = vpop.f32.mrf.mxu0
    %352 = vmatprep.mubr.f32.mxu0 0.0
    %353 = vmatmul.mubr.f32.gmra.mxu0 %v133
    %v354 = vpop.f32.mrf.mxu0
    %v355 = vadd.f32 %v81, %v354
    %v356 = vpop.f32.mrf.mxu0
    %357 = vmatprep.mubr.f32.mxu0 0.0
    %358 = vmatmul.mubr.f32.gmra.mxu0 %v136
    %v359 = vpop.f32.mrf.mxu0
    %v360 = vadd.f32 %v81, %v359
    %v361 = vpop.f32.mrf.mxu0
    %362 = vmatprep.mubr.f32.mxu0 0.0
    %363 = vmatmul.mubr.f32.gmra.mxu0 %v139
    %v364 = vpop.f32.mrf.mxu0
    %v365 = vadd.f32 %v81, %v364
    %v366 = vpop.f32.mrf.mxu0
    %367 = vmatprep.mubr.f32.mxu0 0.0
    %368 = vmatmul.mubr.f32.gmra.mxu0 %v142
    %v369 = vpop.f32.mrf.mxu0
    %v370 = vadd.f32 %v81, %v369
    %v371 = vpop.f32.mrf.mxu0
    %372 = vmatprep.mubr.f32.mxu0 0.0
    %373 = vmatmul.mubr.f32.gmra.mxu0 %v145
    %v374 = vpop.f32.mrf.mxu0
    %v375 = vadd.f32 %v81, %v374
    %v376 = vpop.f32.mrf.mxu0
    %377 = vmatprep.mubr.f32.mxu0 0.0
    %378 = vmatmul.mubr.f32.gmra.mxu0 %v148
    %v379 = vpop.f32.mrf.mxu0
    %v380 = vadd.f32 %v81, %v379
    %v381 = vpop.f32.mrf.mxu0
    %382 = vmatprep.mubr.f32.mxu0 0.0
    %383 = vmatmul.mubr.f32.gmra.mxu0 %v151
    %v384 = vpop.f32.mrf.mxu0
    %v385 = vadd.f32 %v81, %v384
    %v386 = vpop.f32.mrf.mxu0
    %387 = vmatprep.mubr.f32.mxu0 0.0
    %388 = vmatmul.mubr.f32.gmra.mxu0 %v154
    %v389 = vpop.f32.mrf.mxu0
    %v390 = vadd.f32 %v81, %v389
    %v391 = vpop.f32.mrf.mxu0
    %392 = vmatprep.mubr.f32.mxu0 0.0
    %393 = vmatmul.mubr.f32.gmra.mxu0 %v157
    %v394 = vpop.f32.mrf.mxu0
    %v395 = vadd.f32 %v81, %v394
    %v396 = vpop.f32.mrf.mxu0
    %397 = vmatprep.mubr.f32.mxu0 0.0
    %398 = vmatmul.mubr.f32.gmra.mxu0 %v160
    %v399 = vpop.f32.mrf.mxu0
    %v400 = vadd.f32 %v81, %v399
    %v401 = vpop.f32.mrf.mxu0
    %402 = vmatprep.mubr.f32.mxu0 0.0
    %403 = vmatmul.mubr.f32.gmra.mxu0 %v163
    %v404 = vpop.f32.mrf.mxu0
    %v405 = vadd.f32 %v81, %v404
    %v406 = vpop.f32.mrf.mxu0
    %407 = vmatprep.mubr.f32.mxu0 0.0
    %408 = vmatmul.mubr.f32.gmra.mxu0 %v166
    %v409 = vpop.f32.mrf.mxu0
    %v410 = vadd.f32 %v81, %v409
    %v411 = vpop.f32.mrf.mxu0
    %412 = vmatprep.mubr.f32.mxu0 0.0
    %413 = vmatmul.mubr.f32.gmra.mxu0 %v169
    %v414 = vpop.f32.mrf.mxu0
    %v415 = vadd.f32 %v81, %v414
    %v416 = vpop.f32.mrf.mxu0
    %417 = vmatprep.mubr.f32.mxu0 0.0
    %418 = vmatmul.mubr.f32.gmra.mxu0 %v172
    %v419 = vpop.f32.mrf.mxu0
    %v420 = vadd.f32 %v81, %v419
    %v421 = vpop.f32.mrf.mxu0
    %422 = vmatprep.mubr.f32.mxu0 0.0
    %423 = vmatmul.mubr.f32.gmra.mxu0 %v175
    %v424 = vpop.f32.mrf.mxu0
    %v425 = vadd.f32 %v81, %v424
    %v426 = vpop.f32.mrf.mxu0
    %427 = vmatprep.mubr.f32.mxu0 0.0
    %428 = vmatmul.mubr.f32.gmra.mxu0 %v178
    %v429 = vpop.f32.mrf.mxu0
    %v430 = vadd.f32 %v81, %v429
    %v431 = vpop.f32.mrf.mxu0
    %432 = vmatprep.mubr.f32.mxu0 0.0
    %433 = vmatmul.mubr.f32.gmra.mxu0 %v181
    %v434 = vpop.f32.mrf.mxu0
    %v435 = vadd.f32 %v81, %v434
    %v436 = vpop.f32.mrf.mxu0
    %437 = vmatprep.mubr.f32.mxu0 0.0
    %438 = vmatmul.mubr.f32.gmra.mxu0 %v184
    %v439 = vpop.f32.mrf.mxu0
    %v440 = vadd.f32 %v81, %v439
    %v441 = vpop.f32.mrf.mxu0
    %442 = vmatprep.mubr.f32.mxu0 0.0
    %443 = vmatmul.mubr.f32.gmra.mxu0 %v187
    %v444 = vpop.f32.mrf.mxu0
    %v445 = vadd.f32 %v81, %v444
    %v446 = vpop.f32.mrf.mxu0
    %447 = vmatprep.mubr.f32.mxu0 0.0
    %448 = vmatmul.mubr.f32.gmra.mxu0 %v190
    %v449 = vpop.f32.mrf.mxu0
    %v450 = vadd.f32 %v81, %v449
    %v451 = vpop.f32.mrf.mxu0
    %452 = vmatprep.mubr.f32.mxu0 0.0
    %453 = vmatmul.mubr.f32.gmra.mxu0 %v193
    %v454 = vpop.f32.mrf.mxu0
    %v455 = vadd.f32 %v81, %v454
    %v456 = vpop.f32.mrf.mxu0
    %457 = vmatprep.mubr.f32.mxu0 0.0
    %458 = vmatmul.mubr.f32.gmra.mxu0 %v196
    %v459 = vpop.f32.mrf.mxu0
    %v460 = vadd.f32 %v81, %v459
    %v461 = vpop.f32.mrf.mxu0
    %462 = vmatprep.mubr.f32.mxu0 0.0
    %463 = vmatmul.mubr.f32.gmra.mxu0 %v199
    %v464 = vpop.f32.mrf.mxu0
    %v465 = vadd.f32 %v81, %v464
    %v466 = vpop.f32.mrf.mxu0
    %467 = vmatprep.mubr.f32.mxu0 0.0
    %468 = vmatmul.mubr.f32.gmra.mxu0 %v202
    %v469 = vpop.f32.mrf.mxu0
    %v470 = vadd.f32 %v81, %v469
    %v471 = vpop.f32.mrf.mxu0
    %472 = vdwg.mxu0
    %vm473 = vcmask 130048
    %474 = vst.msk [vmem:[#allocation2] sm:$0xff] %vm473, %v275
    %475 = vst.msk [vmem:[#allocation2 + $0x8] sm:$0xff] %vm473, %v280
    %476 = vst.msk [vmem:[#allocation2 + $0x10] sm:$0xff] %vm473, %v285
    %477 = vst.msk [vmem:[#allocation2 + $0x18] sm:$0xff] %vm473, %v290
    %478 = vst.msk [vmem:[#allocation2 + $0x20] sm:$0xff] %vm473, %v295
    %479 = vst.msk [vmem:[#allocation2 + $0x28] sm:$0xff] %vm473, %v300
    %480 = vst.msk [vmem:[#allocation2 + $0x30] sm:$0xff] %vm473, %v305
    %481 = vst.msk [vmem:[#allocation2 + $0x38] sm:$0xff] %vm473, %v310
    %482 = vst.msk [vmem:[#allocation2 + $0x40] sm:$0xff] %vm473, %v315
    %483 = vst.msk [vmem:[#allocation2 + $0x48] sm:$0xff] %vm473, %v320
    %484 = vst.msk [vmem:[#allocation2 + $0x50] sm:$0xff] %vm473, %v325
    %485 = vst.msk [vmem:[#allocation2 + $0x58] sm:$0xff] %vm473, %v330
    %486 = vst.msk [vmem:[#allocation2 + $0x60] sm:$0xff] %vm473, %v335
    %487 = vst.msk [vmem:[#allocation2 + $0x68] sm:$0xff] %vm473, %v340
    %488 = vst.msk [vmem:[#allocation2 + $0x70] sm:$0xff] %vm473, %v345
    %489 = vst.msk [vmem:[#allocation2 + $0x78] sm:$0xff] %vm473, %v350
    %490 = vst.msk [vmem:[#allocation2 + $0x80] sm:$0xff] %vm473, %v355
    %491 = vst.msk [vmem:[#allocation2 + $0x88] sm:$0xff] %vm473, %v360
    %492 = vst.msk [vmem:[#allocation2 + $0x90] sm:$0xff] %vm473, %v365
    %493 = vst.msk [vmem:[#allocation2 + $0x98] sm:$0xff] %vm473, %v370
    %494 = vst.msk [vmem:[#allocation2 + $0xa0] sm:$0xff] %vm473, %v375
    %495 = vst.msk [vmem:[#allocation2 + $0xa8] sm:$0xff] %vm473, %v380
    %496 = vst.msk [vmem:[#allocation2 + $0xb0] sm:$0xff] %vm473, %v385
    %497 = vst.msk [vmem:[#allocation2 + $0xb8] sm:$0xff] %vm473, %v390
    %498 = vst.msk [vmem:[#allocation2 + $0xc0] sm:$0xff] %vm473, %v395
    %499 = vst.msk [vmem:[#allocation2 + $0xc8] sm:$0xff] %vm473, %v400
    %500 = vst.msk [vmem:[#allocation2 + $0xd0] sm:$0xff] %vm473, %v405
    %501 = vst.msk [vmem:[#allocation2 + $0xd8] sm:$0xff] %vm473, %v410
    %502 = vst.msk [vmem:[#allocation2 + $0xe0] sm:$0xff] %vm473, %v415
    %503 = vst.msk [vmem:[#allocation2 + $0xe8] sm:$0xff] %vm473, %v420
    %504 = vst.msk [vmem:[#allocation2 + $0xf0] sm:$0xff] %vm473, %v425
    %505 = vst.msk [vmem:[#allocation2 + $0xf8] sm:$0xff] %vm473, %v430
    %506 = vst.msk [vmem:[#allocation2 + $0x100] sm:$0xff] %vm473, %v435
    %507 = vst.msk [vmem:[#allocation2 + $0x108] sm:$0xff] %vm473, %v440
    %508 = vst.msk [vmem:[#allocation2 + $0x110] sm:$0xff] %vm473, %v445
    %509 = vst.msk [vmem:[#allocation2 + $0x118] sm:$0xff] %vm473, %v450
    %510 = vst.msk [vmem:[#allocation2 + $0x120] sm:$0xff] %vm473, %v455
    %511 = vst.msk [vmem:[#allocation2 + $0x128] sm:$0xff] %vm473, %v460
    %512 = vst.msk [vmem:[#allocation2 + $0x130] sm:$0xff] %vm473, %v465
    %513 = vst.msk [vmem:[#allocation2 + $0x138] sm:$0xff] %vm473, %v470
    loop: start=0, step=1, limit=20
    $region30: #{tpu_custom_call.1} parent=1 // loop_pre_header
      _
    $region31: #{tpu_custom_call.1} parent=1 // loop_header
      %s515 = sphi 0, %s519
      %p516 = scmp.ge.s32.totalorder %s515, 20
      %v520 = vphi 0.0, %v2586
      %v521 = vphi 0.0, %v2580
      %v522 = vphi 0.0, %v2758
      %v523 = vphi 0.0, %v2752
    $region32: #{tpu_custom_call.1} parent=1 // loop_header_branch
      %518 = sbr.rel (%p516) target = $region36
    $region33: #{tpu_custom_call.1} parent=1 // loop_body
      %s524 = smul.u32 %s515, 8
      %s525 = smul.u32 %s515, 16
      %s526 = scalar_lea.vmem [#allocation2], %s525
      %v527 = vld [vmem:[%s526] sm:$0x3]
      %529 = vrot.lane.b32.xlu0 %v520, 116
      %v530 = vpop.permute.xlu0 %529
      %v531 = vsel %vm83, %v530, 0
      %v534 = vsel %vm204, %v31, 0
      %536 = vmatprep.subr.mxu0 0.0
      %537 = vmatpush1.msra.mxu0 0.0
      %538 = vmatprep.subr.mxu0 0.0
      %539 = vmatpush1.msra.mxu0 0.0
      %540 = vmatprep.subr.mxu0 0.0
      %541 = vmatpush1.msra.mxu0 0.0
      %542 = vmatprep.subr.mxu0 0.0
      %543 = vmatpush1.msra.mxu0 0.0
      %544 = vmatprep.subr.mxu0 0.0
      %545 = vmatpush1.msra.mxu0 0.0
      %546 = vmatprep.subr.mxu0 0.0
      %547 = vmatpush1.msra.mxu0 0.0
      %548 = vmatprep.subr.mxu0 0.0
      %549 = vmatpush1.msra.mxu0 0.0
      %550 = vmatprep.subr.mxu0 0.0
      %551 = vmatpush1.msra.mxu0 0.0
      %552 = vmatprep.subr.mxu0 0.0
      %553 = vmatpush1.msra.mxu0 0.0
      %554 = vmatprep.subr.mxu0 0.0
      %555 = vmatpush1.msra.mxu0 0.0
      %556 = vmatprep.subr.mxu0 0.0
      %557 = vmatpush1.msra.mxu0 0.0
      %558 = vmatprep.subr.mxu0 0.0
      %559 = vmatpush1.msra.mxu0 0.0
      %560 = vmatprep.subr.mxu0 0.0
      %561 = vmatpush1.msra.mxu0 0.0
      %562 = vmatprep.subr.mxu0 0.0
      %563 = vmatpush1.msra.mxu0 0.0
      %564 = vmatprep.subr.mxu0 0.0
      %565 = vmatpush1.msra.mxu0 0.0
      %566 = vmatprep.subr.mxu0 0.0
      %567 = vmatpush1.msra.mxu0 %v534
      %568 = vmatprep.subr.mxu0 0.0
      %569 = vmatpush2.msra.mxu0 0.0
      %570 = vmatprep.subr.mxu0 0.0
      %571 = vmatpush2.msra.mxu0 0.0
      %572 = vmatprep.subr.mxu0 0.0
      %573 = vmatpush2.msra.mxu0 0.0
      %574 = vmatprep.subr.mxu0 0.0
      %575 = vmatpush2.msra.mxu0 0.0
      %576 = vmatprep.subr.mxu0 0.0
      %577 = vmatpush2.msra.mxu0 0.0
      %578 = vmatprep.subr.mxu0 0.0
      %579 = vmatpush2.msra.mxu0 0.0
      %580 = vmatprep.subr.mxu0 0.0
      %581 = vmatpush2.msra.mxu0 0.0
      %582 = vmatprep.subr.mxu0 0.0
      %583 = vmatpush2.msra.mxu0 0.0
      %584 = vmatprep.subr.mxu0 0.0
      %585 = vmatpush2.msra.mxu0 0.0
      %586 = vmatprep.subr.mxu0 0.0
      %587 = vmatpush2.msra.mxu0 0.0
      %588 = vmatprep.subr.mxu0 0.0
      %589 = vmatpush2.msra.mxu0 0.0
      %590 = vmatprep.subr.mxu0 0.0
      %591 = vmatpush2.msra.mxu0 0.0
      %592 = vmatprep.subr.mxu0 0.0
      %593 = vmatpush2.msra.mxu0 0.0
      %594 = vmatprep.subr.mxu0 0.0
      %595 = vmatpush2.msra.mxu0 0.0
      %596 = vmatprep.subr.mxu0 0.0
      %597 = vmatpush2.msra.mxu0 0.0
      %598 = vmatprep.subr.mxu0 0.0
      %599 = vmatpush2.msra.mxu0 0.0
      %600 = vmatprep.mubr.f32.mxu0 0.0
      %601 = vmatmul.mubr.f32.gmra.mxu0 %v531
      %v602 = vpop.f32.mrf.mxu0
      %v603 = vadd.f32 0.0, %v602
      %v604 = vpop.f32.mrf.mxu0
      %605 = vdwg.mxu0
      %v606 = vadd.f32 %v527, %v603
      %v607 = vxor.u32 %v606, 2147483648
      %v608 = vmul.f32 %v607, 1.442695
      %v609 = vpow.pop %v608
      %v610 = vadd.f32 %v609, 1.0
      %v611 = vrcp.pop %v610
      %v612 = vmul.f32 1.0, %v611
      %v613 = vtanh.pop %v606
      %v614 = vmul.f32 %v612, %v521
      %616 = vrot.lane.b32.xlu0 %v613, 120
      %v617 = vpop.permute.xlu0 %616
      %v619 = vmul.f32 %v612, %v617
      %621 = vrot.lane.b32.xlu0 %v619, 4
      %v622 = vpop.permute.xlu0 %621
      %v624 = vadd.f32 %v614, %v622
      %v625 = vtanh.pop %v624
      %627 = vrot.lane.b32.xlu0 %v625, 8
      %v628 = vpop.permute.xlu0 %627
      %v630 = vmul.f32 %v612, %v628
      %632 = vrot.lane.b32.xlu0 %v522, 116
      %v633 = vpop.permute.xlu0 %632
      %v634 = vsel %vm83, %v633, 0
      %v637 = vsel %vm204, %v33, 0
      %639 = vmatprep.subr.mxu0 0.0
      %640 = vmatpush1.msra.mxu0 0.0
      %641 = vmatprep.subr.mxu0 0.0
      %642 = vmatpush1.msra.mxu0 0.0
      %643 = vmatprep.subr.mxu0 0.0
      %644 = vmatpush1.msra.mxu0 0.0
      %645 = vmatprep.subr.mxu0 0.0
      %646 = vmatpush1.msra.mxu0 0.0
      %647 = vmatprep.subr.mxu0 0.0
      %648 = vmatpush1.msra.mxu0 0.0
      %649 = vmatprep.subr.mxu0 0.0
      %650 = vmatpush1.msra.mxu0 0.0
      %651 = vmatprep.subr.mxu0 0.0
      %652 = vmatpush1.msra.mxu0 0.0
      %653 = vmatprep.subr.mxu0 0.0
      %654 = vmatpush1.msra.mxu0 0.0
      %655 = vmatprep.subr.mxu0 0.0
      %656 = vmatpush1.msra.mxu0 0.0
      %657 = vmatprep.subr.mxu0 0.0
      %658 = vmatpush1.msra.mxu0 0.0
      %659 = vmatprep.subr.mxu0 0.0
      %660 = vmatpush1.msra.mxu0 0.0
      %661 = vmatprep.subr.mxu0 0.0
      %662 = vmatpush1.msra.mxu0 0.0
      %663 = vmatprep.subr.mxu0 0.0
      %664 = vmatpush1.msra.mxu0 0.0
      %665 = vmatprep.subr.mxu0 0.0
      %666 = vmatpush1.msra.mxu0 0.0
      %667 = vmatprep.subr.mxu0 0.0
      %668 = vmatpush1.msra.mxu0 0.0
      %669 = vmatprep.subr.mxu0 0.0
      %670 = vmatpush1.msra.mxu0 %v637
      %671 = vmatprep.subr.mxu0 0.0
      %672 = vmatpush2.msra.mxu0 0.0
      %673 = vmatprep.subr.mxu0 0.0
      %674 = vmatpush2.msra.mxu0 0.0
      %675 = vmatprep.subr.mxu0 0.0
      %676 = vmatpush2.msra.mxu0 0.0
      %677 = vmatprep.subr.mxu0 0.0
      %678 = vmatpush2.msra.mxu0 0.0
      %679 = vmatprep.subr.mxu0 0.0
      %680 = vmatpush2.msra.mxu0 0.0
      %681 = vmatprep.subr.mxu0 0.0
      %682 = vmatpush2.msra.mxu0 0.0
      %683 = vmatprep.subr.mxu0 0.0
      %684 = vmatpush2.msra.mxu0 0.0
      %685 = vmatprep.subr.mxu0 0.0
      %686 = vmatpush2.msra.mxu0 0.0
      %687 = vmatprep.subr.mxu0 0.0
      %688 = vmatpush2.msra.mxu0 0.0
      %689 = vmatprep.subr.mxu0 0.0
      %690 = vmatpush2.msra.mxu0 0.0
      %691 = vmatprep.subr.mxu0 0.0
      %692 = vmatpush2.msra.mxu0 0.0
      %693 = vmatprep.subr.mxu0 0.0
      %694 = vmatpush2.msra.mxu0 0.0
      %695 = vmatprep.subr.mxu0 0.0
      %696 = vmatpush2.msra.mxu0 0.0
      %697 = vmatprep.subr.mxu0 0.0
      %698 = vmatpush2.msra.mxu0 0.0
      %699 = vmatprep.subr.mxu0 0.0
      %700 = vmatpush2.msra.mxu0 0.0
      %701 = vmatprep.subr.mxu0 0.0
      %702 = vmatpush2.msra.mxu0 0.0
      %703 = vmatprep.mubr.f32.mxu0 0.0
      %704 = vmatmul.mubr.f32.gmra.mxu0 %v634
      %v705 = vpop.f32.mrf.mxu0
      %v706 = vadd.f32 0.0, %v705
      %v707 = vpop.f32.mrf.mxu0
      %708 = vdwg.mxu0
      %710 = vrot.lane.b32.xlu0 %v630, 116
      %v711 = vpop.permute.xlu0 %710
      %v712 = vsel %vm83, %v711, 0
      %v715 = vsel %vm204, %v32, 0
      %717 = vmatprep.subr.mxu0 0.0
      %718 = vmatpush1.msra.mxu0 0.0
      %719 = vmatprep.subr.mxu0 0.0
      %720 = vmatpush1.msra.mxu0 0.0
      %721 = vmatprep.subr.mxu0 0.0
      %722 = vmatpush1.msra.mxu0 0.0
      %723 = vmatprep.subr.mxu0 0.0
      %724 = vmatpush1.msra.mxu0 0.0
      %725 = vmatprep.subr.mxu0 0.0
      %726 = vmatpush1.msra.mxu0 0.0
      %727 = vmatprep.subr.mxu0 0.0
      %728 = vmatpush1.msra.mxu0 0.0
      %729 = vmatprep.subr.mxu0 0.0
      %730 = vmatpush1.msra.mxu0 0.0
      %731 = vmatprep.subr.mxu0 0.0
      %732 = vmatpush1.msra.mxu0 0.0
      %733 = vmatprep.subr.mxu0 0.0
      %734 = vmatpush1.msra.mxu0 0.0
      %735 = vmatprep.subr.mxu0 0.0
      %736 = vmatpush1.msra.mxu0 0.0
      %737 = vmatprep.subr.mxu0 0.0
      %738 = vmatpush1.msra.mxu0 0.0
      %739 = vmatprep.subr.mxu0 0.0
      %740 = vmatpush1.msra.mxu0 0.0
      %741 = vmatprep.subr.mxu0 0.0
      %742 = vmatpush1.msra.mxu0 0.0
      %743 = vmatprep.subr.mxu0 0.0
      %744 = vmatpush1.msra.mxu0 0.0
      %745 = vmatprep.subr.mxu0 0.0
      %746 = vmatpush1.msra.mxu0 0.0
      %747 = vmatprep.subr.mxu0 0.0
      %748 = vmatpush1.msra.mxu0 %v715
      %749 = vmatprep.subr.mxu0 0.0
      %750 = vmatpush2.msra.mxu0 0.0
      %751 = vmatprep.subr.mxu0 0.0
      %752 = vmatpush2.msra.mxu0 0.0
      %753 = vmatprep.subr.mxu0 0.0
      %754 = vmatpush2.msra.mxu0 0.0
      %755 = vmatprep.subr.mxu0 0.0
      %756 = vmatpush2.msra.mxu0 0.0
      %757 = vmatprep.subr.mxu0 0.0
      %758 = vmatpush2.msra.mxu0 0.0
      %759 = vmatprep.subr.mxu0 0.0
      %760 = vmatpush2.msra.mxu0 0.0
      %761 = vmatprep.subr.mxu0 0.0
      %762 = vmatpush2.msra.mxu0 0.0
      %763 = vmatprep.subr.mxu0 0.0
      %764 = vmatpush2.msra.mxu0 0.0
      %765 = vmatprep.subr.mxu0 0.0
      %766 = vmatpush2.msra.mxu0 0.0
      %767 = vmatprep.subr.mxu0 0.0
      %768 = vmatpush2.msra.mxu0 0.0
      %769 = vmatprep.subr.mxu0 0.0
      %770 = vmatpush2.msra.mxu0 0.0
      %771 = vmatprep.subr.mxu0 0.0
      %772 = vmatpush2.msra.mxu0 0.0
      %773 = vmatprep.subr.mxu0 0.0
      %774 = vmatpush2.msra.mxu0 0.0
      %775 = vmatprep.subr.mxu0 0.0
      %776 = vmatpush2.msra.mxu0 0.0
      %777 = vmatprep.subr.mxu0 0.0
      %778 = vmatpush2.msra.mxu0 0.0
      %779 = vmatprep.subr.mxu0 0.0
      %780 = vmatpush2.msra.mxu0 0.0
      %781 = vmatprep.mubr.f32.mxu0 0.0
      %782 = vmatmul.mubr.f32.gmra.mxu0 %v712
      %v783 = vpop.f32.mrf.mxu0
      %v784 = vadd.f32 %v706, %v783
      %v785 = vpop.f32.mrf.mxu0
      %786 = vdwg.mxu0
      %v788 = vlaneseq
      %v789 = vshrl.u32 %v788, 7
      %v790 = vsub.s32 0, %v789
      %v791 = vrot.slane %v34, %v790
      %v793 = vadd.f32 %v784, %v791
      %v794 = vxor.u32 %v793, 2147483648
      %v795 = vmul.f32 %v794, 1.442695
      %v796 = vpow.pop %v795
      %v797 = vadd.f32 %v796, 1.0
      %v798 = vrcp.pop %v797
      %v799 = vmul.f32 1.0, %v798
      %v800 = vtanh.pop %v793
      %v801 = vmul.f32 %v799, %v523
      %803 = vrot.lane.b32.xlu0 %v800, 120
      %v804 = vpop.permute.xlu0 %803
      %v806 = vmul.f32 %v799, %v804
      %808 = vrot.lane.b32.xlu0 %v806, 4
      %v809 = vpop.permute.xlu0 %808
      %v811 = vadd.f32 %v801, %v809
      %v812 = vtanh.pop %v811
      %814 = vrot.lane.b32.xlu0 %v812, 8
      %v815 = vpop.permute.xlu0 %814
      %v817 = vmul.f32 %v799, %v815
      %819 = vrot.lane.b32.xlu0 %v817, 116
      %v820 = vpop.permute.xlu0 %819
      %s822 = smul.u32 %s524, 2
      %s823 = scalar_lea.vmem %s7, %s822
      %vm824 = vcmask 25600
      %825 = vst.msk [vmem:[%s823] sm:$0x3] %vm824, %v820
      %s826 = sadd.s32 %s524, 1
      %s827 = smul.u32 %s826, 2
      %s828 = scalar_lea.vmem [#allocation2], %s827
      %v829 = vld [vmem:[%s828] sm:$0x3]
      %830 = vmatprep.subr.mxu0 0.0
      %831 = vmatpush1.msra.mxu0 0.0
      %832 = vmatprep.subr.mxu0 0.0
      %833 = vmatpush1.msra.mxu0 0.0
      %834 = vmatprep.subr.mxu0 0.0
      %835 = vmatpush1.msra.mxu0 0.0
      %836 = vmatprep.subr.mxu0 0.0
      %837 = vmatpush1.msra.mxu0 0.0
      %838 = vmatprep.subr.mxu0 0.0
      %839 = vmatpush1.msra.mxu0 0.0
      %840 = vmatprep.subr.mxu0 0.0
      %841 = vmatpush1.msra.mxu0 0.0
      %842 = vmatprep.subr.mxu0 0.0
      %843 = vmatpush1.msra.mxu0 0.0
      %844 = vmatprep.subr.mxu0 0.0
      %845 = vmatpush1.msra.mxu0 0.0
      %846 = vmatprep.subr.mxu0 0.0
      %847 = vmatpush1.msra.mxu0 0.0
      %848 = vmatprep.subr.mxu0 0.0
      %849 = vmatpush1.msra.mxu0 0.0
      %850 = vmatprep.subr.mxu0 0.0
      %851 = vmatpush1.msra.mxu0 0.0
      %852 = vmatprep.subr.mxu0 0.0
      %853 = vmatpush1.msra.mxu0 0.0
      %854 = vmatprep.subr.mxu0 0.0
      %855 = vmatpush1.msra.mxu0 0.0
      %856 = vmatprep.subr.mxu0 0.0
      %857 = vmatpush1.msra.mxu0 0.0
      %858 = vmatprep.subr.mxu0 0.0
      %859 = vmatpush1.msra.mxu0 0.0
      %860 = vmatprep.subr.mxu0 0.0
      %861 = vmatpush1.msra.mxu0 %v534
      %862 = vmatprep.subr.mxu0 0.0
      %863 = vmatpush2.msra.mxu0 0.0
      %864 = vmatprep.subr.mxu0 0.0
      %865 = vmatpush2.msra.mxu0 0.0
      %866 = vmatprep.subr.mxu0 0.0
      %867 = vmatpush2.msra.mxu0 0.0
      %868 = vmatprep.subr.mxu0 0.0
      %869 = vmatpush2.msra.mxu0 0.0
      %870 = vmatprep.subr.mxu0 0.0
      %871 = vmatpush2.msra.mxu0 0.0
      %872 = vmatprep.subr.mxu0 0.0
      %873 = vmatpush2.msra.mxu0 0.0
      %874 = vmatprep.subr.mxu0 0.0
      %875 = vmatpush2.msra.mxu0 0.0
      %876 = vmatprep.subr.mxu0 0.0
      %877 = vmatpush2.msra.mxu0 0.0
      %878 = vmatprep.subr.mxu0 0.0
      %879 = vmatpush2.msra.mxu0 0.0
      %880 = vmatprep.subr.mxu0 0.0
      %881 = vmatpush2.msra.mxu0 0.0
      %882 = vmatprep.subr.mxu0 0.0
      %883 = vmatpush2.msra.mxu0 0.0
      %884 = vmatprep.subr.mxu0 0.0
      %885 = vmatpush2.msra.mxu0 0.0
      %886 = vmatprep.subr.mxu0 0.0
      %887 = vmatpush2.msra.mxu0 0.0
      %888 = vmatprep.subr.mxu0 0.0
      %889 = vmatpush2.msra.mxu0 0.0
      %890 = vmatprep.subr.mxu0 0.0
      %891 = vmatpush2.msra.mxu0 0.0
      %892 = vmatprep.subr.mxu0 0.0
      %893 = vmatpush2.msra.mxu0 0.0
      %894 = vmatprep.mubr.f32.mxu0 0.0
      %895 = vmatmul.mubr.f32.gmra.mxu0 %v712
      %v896 = vpop.f32.mrf.mxu0
      %v897 = vadd.f32 0.0, %v896
      %v898 = vpop.f32.mrf.mxu0
      %899 = vdwg.mxu0
      %v900 = vadd.f32 %v829, %v897
      %v901 = vxor.u32 %v900, 2147483648
      %v902 = vmul.f32 %v901, 1.442695
      %v903 = vpow.pop %v902
      %v904 = vadd.f32 %v903, 1.0
      %v905 = vrcp.pop %v904
      %v906 = vmul.f32 1.0, %v905
      %v907 = vtanh.pop %v900
      %v908 = vmul.f32 %v906, %v624
      %910 = vrot.lane.b32.xlu0 %v907, 120
      %v911 = vpop.permute.xlu0 %910
      %v913 = vmul.f32 %v906, %v911
      %915 = vrot.lane.b32.xlu0 %v913, 4
      %v916 = vpop.permute.xlu0 %915
      %v918 = vadd.f32 %v908, %v916
      %v919 = vtanh.pop %v918
      %921 = vrot.lane.b32.xlu0 %v919, 8
      %v922 = vpop.permute.xlu0 %921
      %v924 = vmul.f32 %v906, %v922
      %v925 = vsel %vm83, %v820, 0
      %927 = vmatprep.subr.mxu0 0.0
      %928 = vmatpush1.msra.mxu0 0.0
      %929 = vmatprep.subr.mxu0 0.0
      %930 = vmatpush1.msra.mxu0 0.0
      %931 = vmatprep.subr.mxu0 0.0
      %932 = vmatpush1.msra.mxu0 0.0
      %933 = vmatprep.subr.mxu0 0.0
      %934 = vmatpush1.msra.mxu0 0.0
      %935 = vmatprep.subr.mxu0 0.0
      %936 = vmatpush1.msra.mxu0 0.0
      %937 = vmatprep.subr.mxu0 0.0
      %938 = vmatpush1.msra.mxu0 0.0
      %939 = vmatprep.subr.mxu0 0.0
      %940 = vmatpush1.msra.mxu0 0.0
      %941 = vmatprep.subr.mxu0 0.0
      %942 = vmatpush1.msra.mxu0 0.0
      %943 = vmatprep.subr.mxu0 0.0
      %944 = vmatpush1.msra.mxu0 0.0
      %945 = vmatprep.subr.mxu0 0.0
      %946 = vmatpush1.msra.mxu0 0.0
      %947 = vmatprep.subr.mxu0 0.0
      %948 = vmatpush1.msra.mxu0 0.0
      %949 = vmatprep.subr.mxu0 0.0
      %950 = vmatpush1.msra.mxu0 0.0
      %951 = vmatprep.subr.mxu0 0.0
      %952 = vmatpush1.msra.mxu0 0.0
      %953 = vmatprep.subr.mxu0 0.0
      %954 = vmatpush1.msra.mxu0 0.0
      %955 = vmatprep.subr.mxu0 0.0
      %956 = vmatpush1.msra.mxu0 0.0
      %957 = vmatprep.subr.mxu0 0.0
      %958 = vmatpush1.msra.mxu0 %v637
      %959 = vmatprep.subr.mxu0 0.0
      %960 = vmatpush2.msra.mxu0 0.0
      %961 = vmatprep.subr.mxu0 0.0
      %962 = vmatpush2.msra.mxu0 0.0
      %963 = vmatprep.subr.mxu0 0.0
      %964 = vmatpush2.msra.mxu0 0.0
      %965 = vmatprep.subr.mxu0 0.0
      %966 = vmatpush2.msra.mxu0 0.0
      %967 = vmatprep.subr.mxu0 0.0
      %968 = vmatpush2.msra.mxu0 0.0
      %969 = vmatprep.subr.mxu0 0.0
      %970 = vmatpush2.msra.mxu0 0.0
      %971 = vmatprep.subr.mxu0 0.0
      %972 = vmatpush2.msra.mxu0 0.0
      %973 = vmatprep.subr.mxu0 0.0
      %974 = vmatpush2.msra.mxu0 0.0
      %975 = vmatprep.subr.mxu0 0.0
      %976 = vmatpush2.msra.mxu0 0.0
      %977 = vmatprep.subr.mxu0 0.0
      %978 = vmatpush2.msra.mxu0 0.0
      %979 = vmatprep.subr.mxu0 0.0
      %980 = vmatpush2.msra.mxu0 0.0
      %981 = vmatprep.subr.mxu0 0.0
      %982 = vmatpush2.msra.mxu0 0.0
      %983 = vmatprep.subr.mxu0 0.0
      %984 = vmatpush2.msra.mxu0 0.0
      %985 = vmatprep.subr.mxu0 0.0
      %986 = vmatpush2.msra.mxu0 0.0
      %987 = vmatprep.subr.mxu0 0.0
      %988 = vmatpush2.msra.mxu0 0.0
      %989 = vmatprep.subr.mxu0 0.0
      %990 = vmatpush2.msra.mxu0 0.0
      %991 = vmatprep.mubr.f32.mxu0 0.0
      %992 = vmatmul.mubr.f32.gmra.mxu0 %v925
      %v993 = vpop.f32.mrf.mxu0
      %v994 = vadd.f32 0.0, %v993
      %v995 = vpop.f32.mrf.mxu0
      %996 = vdwg.mxu0
      %998 = vrot.lane.b32.xlu0 %v924, 116
      %v999 = vpop.permute.xlu0 %998
      %v1000 = vsel %vm83, %v999, 0
      %1002 = vmatprep.subr.mxu0 0.0
      %1003 = vmatpush1.msra.mxu0 0.0
      %1004 = vmatprep.subr.mxu0 0.0
      %1005 = vmatpush1.msra.mxu0 0.0
      %1006 = vmatprep.subr.mxu0 0.0
      %1007 = vmatpush1.msra.mxu0 0.0
      %1008 = vmatprep.subr.mxu0 0.0
      %1009 = vmatpush1.msra.mxu0 0.0
      %1010 = vmatprep.subr.mxu0 0.0
      %1011 = vmatpush1.msra.mxu0 0.0
      %1012 = vmatprep.subr.mxu0 0.0
      %1013 = vmatpush1.msra.mxu0 0.0
      %1014 = vmatprep.subr.mxu0 0.0
      %1015 = vmatpush1.msra.mxu0 0.0
      %1016 = vmatprep.subr.mxu0 0.0
      %1017 = vmatpush1.msra.mxu0 0.0
      %1018 = vmatprep.subr.mxu0 0.0
      %1019 = vmatpush1.msra.mxu0 0.0
      %1020 = vmatprep.subr.mxu0 0.0
      %1021 = vmatpush1.msra.mxu0 0.0
      %1022 = vmatprep.subr.mxu0 0.0
      %1023 = vmatpush1.msra.mxu0 0.0
      %1024 = vmatprep.subr.mxu0 0.0
      %1025 = vmatpush1.msra.mxu0 0.0
      %1026 = vmatprep.subr.mxu0 0.0
      %1027 = vmatpush1.msra.mxu0 0.0
      %1028 = vmatprep.subr.mxu0 0.0
      %1029 = vmatpush1.msra.mxu0 0.0
      %1030 = vmatprep.subr.mxu0 0.0
      %1031 = vmatpush1.msra.mxu0 0.0
      %1032 = vmatprep.subr.mxu0 0.0
      %1033 = vmatpush1.msra.mxu0 %v715
      %1034 = vmatprep.subr.mxu0 0.0
      %1035 = vmatpush2.msra.mxu0 0.0
      %1036 = vmatprep.subr.mxu0 0.0
      %1037 = vmatpush2.msra.mxu0 0.0
      %1038 = vmatprep.subr.mxu0 0.0
      %1039 = vmatpush2.msra.mxu0 0.0
      %1040 = vmatprep.subr.mxu0 0.0
      %1041 = vmatpush2.msra.mxu0 0.0
      %1042 = vmatprep.subr.mxu0 0.0
      %1043 = vmatpush2.msra.mxu0 0.0
      %1044 = vmatprep.subr.mxu0 0.0
      %1045 = vmatpush2.msra.mxu0 0.0
      %1046 = vmatprep.subr.mxu0 0.0
      %1047 = vmatpush2.msra.mxu0 0.0
      %1048 = vmatprep.subr.mxu0 0.0
      %1049 = vmatpush2.msra.mxu0 0.0
      %1050 = vmatprep.subr.mxu0 0.0
      %1051 = vmatpush2.msra.mxu0 0.0
      %1052 = vmatprep.subr.mxu0 0.0
      %1053 = vmatpush2.msra.mxu0 0.0
      %1054 = vmatprep.subr.mxu0 0.0
      %1055 = vmatpush2.msra.mxu0 0.0
      %1056 = vmatprep.subr.mxu0 0.0
      %1057 = vmatpush2.msra.mxu0 0.0
      %1058 = vmatprep.subr.mxu0 0.0
      %1059 = vmatpush2.msra.mxu0 0.0
      %1060 = vmatprep.subr.mxu0 0.0
      %1061 = vmatpush2.msra.mxu0 0.0
      %1062 = vmatprep.subr.mxu0 0.0
      %1063 = vmatpush2.msra.mxu0 0.0
      %1064 = vmatprep.subr.mxu0 0.0
      %1065 = vmatpush2.msra.mxu0 0.0
      %1066 = vmatprep.mubr.f32.mxu0 0.0
      %1067 = vmatmul.mubr.f32.gmra.mxu0 %v1000
      %v1068 = vpop.f32.mrf.mxu0
      %v1069 = vadd.f32 %v994, %v1068
      %v1070 = vpop.f32.mrf.mxu0
      %1071 = vdwg.mxu0
      %v1072 = vadd.f32 %v1069, %v791
      %v1073 = vxor.u32 %v1072, 2147483648
      %v1074 = vmul.f32 %v1073, 1.442695
      %v1075 = vpow.pop %v1074
      %v1076 = vadd.f32 %v1075, 1.0
      %v1077 = vrcp.pop %v1076
      %v1078 = vmul.f32 1.0, %v1077
      %v1079 = vtanh.pop %v1072
      %v1080 = vmul.f32 %v1078, %v811
      %1082 = vrot.lane.b32.xlu0 %v1079, 120
      %v1083 = vpop.permute.xlu0 %1082
      %v1085 = vmul.f32 %v1078, %v1083
      %1087 = vrot.lane.b32.xlu0 %v1085, 4
      %v1088 = vpop.permute.xlu0 %1087
      %v1090 = vadd.f32 %v1080, %v1088
      %v1091 = vtanh.pop %v1090
      %1093 = vrot.lane.b32.xlu0 %v1091, 8
      %v1094 = vpop.permute.xlu0 %1093
      %v1096 = vmul.f32 %v1078, %v1094
      %1098 = vrot.lane.b32.xlu0 %v1096, 116
      %v1099 = vpop.permute.xlu0 %1098
      %s1101 = scalar_lea.vmem %s7, %s827
      %1102 = vst.msk [vmem:[%s1101] sm:$0x3] %vm824, %v1099
      %s1103 = sadd.s32 %s524, 2
      %s1104 = smul.u32 %s1103, 2
      %s1105 = scalar_lea.vmem [#allocation2], %s1104
      %v1106 = vld [vmem:[%s1105] sm:$0x3]
      %1107 = vmatprep.subr.mxu0 0.0
      %1108 = vmatpush1.msra.mxu0 0.0
      %1109 = vmatprep.subr.mxu0 0.0
      %1110 = vmatpush1.msra.mxu0 0.0
      %1111 = vmatprep.subr.mxu0 0.0
      %1112 = vmatpush1.msra.mxu0 0.0
      %1113 = vmatprep.subr.mxu0 0.0
      %1114 = vmatpush1.msra.mxu0 0.0
      %1115 = vmatprep.subr.mxu0 0.0
      %1116 = vmatpush1.msra.mxu0 0.0
      %1117 = vmatprep.subr.mxu0 0.0
      %1118 = vmatpush1.msra.mxu0 0.0
      %1119 = vmatprep.subr.mxu0 0.0
      %1120 = vmatpush1.msra.mxu0 0.0
      %1121 = vmatprep.subr.mxu0 0.0
      %1122 = vmatpush1.msra.mxu0 0.0
      %1123 = vmatprep.subr.mxu0 0.0
      %1124 = vmatpush1.msra.mxu0 0.0
      %1125 = vmatprep.subr.mxu0 0.0
      %1126 = vmatpush1.msra.mxu0 0.0
      %1127 = vmatprep.subr.mxu0 0.0
      %1128 = vmatpush1.msra.mxu0 0.0
      %1129 = vmatprep.subr.mxu0 0.0
      %1130 = vmatpush1.msra.mxu0 0.0
      %1131 = vmatprep.subr.mxu0 0.0
      %1132 = vmatpush1.msra.mxu0 0.0
      %1133 = vmatprep.subr.mxu0 0.0
      %1134 = vmatpush1.msra.mxu0 0.0
      %1135 = vmatprep.subr.mxu0 0.0
      %1136 = vmatpush1.msra.mxu0 0.0
      %1137 = vmatprep.subr.mxu0 0.0
      %1138 = vmatpush1.msra.mxu0 %v534
      %1139 = vmatprep.subr.mxu0 0.0
      %1140 = vmatpush2.msra.mxu0 0.0
      %1141 = vmatprep.subr.mxu0 0.0
      %1142 = vmatpush2.msra.mxu0 0.0
      %1143 = vmatprep.subr.mxu0 0.0
      %1144 = vmatpush2.msra.mxu0 0.0
      %1145 = vmatprep.subr.mxu0 0.0
      %1146 = vmatpush2.msra.mxu0 0.0
      %1147 = vmatprep.subr.mxu0 0.0
      %1148 = vmatpush2.msra.mxu0 0.0
      %1149 = vmatprep.subr.mxu0 0.0
      %1150 = vmatpush2.msra.mxu0 0.0
      %1151 = vmatprep.subr.mxu0 0.0
      %1152 = vmatpush2.msra.mxu0 0.0
      %1153 = vmatprep.subr.mxu0 0.0
      %1154 = vmatpush2.msra.mxu0 0.0
      %1155 = vmatprep.subr.mxu0 0.0
      %1156 = vmatpush2.msra.mxu0 0.0
      %1157 = vmatprep.subr.mxu0 0.0
      %1158 = vmatpush2.msra.mxu0 0.0
      %1159 = vmatprep.subr.mxu0 0.0
      %1160 = vmatpush2.msra.mxu0 0.0
      %1161 = vmatprep.subr.mxu0 0.0
      %1162 = vmatpush2.msra.mxu0 0.0
      %1163 = vmatprep.subr.mxu0 0.0
      %1164 = vmatpush2.msra.mxu0 0.0
      %1165 = vmatprep.subr.mxu0 0.0
      %1166 = vmatpush2.msra.mxu0 0.0
      %1167 = vmatprep.subr.mxu0 0.0
      %1168 = vmatpush2.msra.mxu0 0.0
      %1169 = vmatprep.subr.mxu0 0.0
      %1170 = vmatpush2.msra.mxu0 0.0
      %1171 = vmatprep.mubr.f32.mxu0 0.0
      %1172 = vmatmul.mubr.f32.gmra.mxu0 %v1000
      %v1173 = vpop.f32.mrf.mxu0
      %v1174 = vadd.f32 0.0, %v1173
      %v1175 = vpop.f32.mrf.mxu0
      %1176 = vdwg.mxu0
      %v1177 = vadd.f32 %v1106, %v1174
      %v1178 = vxor.u32 %v1177, 2147483648
      %v1179 = vmul.f32 %v1178, 1.442695
      %v1180 = vpow.pop %v1179
      %v1181 = vadd.f32 %v1180, 1.0
      %v1182 = vrcp.pop %v1181
      %v1183 = vmul.f32 1.0, %v1182
      %v1184 = vtanh.pop %v1177
      %v1185 = vmul.f32 %v1183, %v918
      %1187 = vrot.lane.b32.xlu0 %v1184, 120
      %v1188 = vpop.permute.xlu0 %1187
      %v1190 = vmul.f32 %v1183, %v1188
      %1192 = vrot.lane.b32.xlu0 %v1190, 4
      %v1193 = vpop.permute.xlu0 %1192
      %v1195 = vadd.f32 %v1185, %v1193
      %v1196 = vtanh.pop %v1195
      %1198 = vrot.lane.b32.xlu0 %v1196, 8
      %v1199 = vpop.permute.xlu0 %1198
      %v1201 = vmul.f32 %v1183, %v1199
      %v1202 = vsel %vm83, %v1099, 0
      %1204 = vmatprep.subr.mxu0 0.0
      %1205 = vmatpush1.msra.mxu0 0.0
      %1206 = vmatprep.subr.mxu0 0.0
      %1207 = vmatpush1.msra.mxu0 0.0
      %1208 = vmatprep.subr.mxu0 0.0
      %1209 = vmatpush1.msra.mxu0 0.0
      %1210 = vmatprep.subr.mxu0 0.0
      %1211 = vmatpush1.msra.mxu0 0.0
      %1212 = vmatprep.subr.mxu0 0.0
      %1213 = vmatpush1.msra.mxu0 0.0
      %1214 = vmatprep.subr.mxu0 0.0
      %1215 = vmatpush1.msra.mxu0 0.0
      %1216 = vmatprep.subr.mxu0 0.0
      %1217 = vmatpush1.msra.mxu0 0.0
      %1218 = vmatprep.subr.mxu0 0.0
      %1219 = vmatpush1.msra.mxu0 0.0
      %1220 = vmatprep.subr.mxu0 0.0
      %1221 = vmatpush1.msra.mxu0 0.0
      %1222 = vmatprep.subr.mxu0 0.0
      %1223 = vmatpush1.msra.mxu0 0.0
      %1224 = vmatprep.subr.mxu0 0.0
      %1225 = vmatpush1.msra.mxu0 0.0
      %1226 = vmatprep.subr.mxu0 0.0
      %1227 = vmatpush1.msra.mxu0 0.0
      %1228 = vmatprep.subr.mxu0 0.0
      %1229 = vmatpush1.msra.mxu0 0.0
      %1230 = vmatprep.subr.mxu0 0.0
      %1231 = vmatpush1.msra.mxu0 0.0
      %1232 = vmatprep.subr.mxu0 0.0
      %1233 = vmatpush1.msra.mxu0 0.0
      %1234 = vmatprep.subr.mxu0 0.0
      %1235 = vmatpush1.msra.mxu0 %v637
      %1236 = vmatprep.subr.mxu0 0.0
      %1237 = vmatpush2.msra.mxu0 0.0
      %1238 = vmatprep.subr.mxu0 0.0
      %1239 = vmatpush2.msra.mxu0 0.0
      %1240 = vmatprep.subr.mxu0 0.0
      %1241 = vmatpush2.msra.mxu0 0.0
      %1242 = vmatprep.subr.mxu0 0.0
      %1243 = vmatpush2.msra.mxu0 0.0
      %1244 = vmatprep.subr.mxu0 0.0
      %1245 = vmatpush2.msra.mxu0 0.0
      %1246 = vmatprep.subr.mxu0 0.0
      %1247 = vmatpush2.msra.mxu0 0.0
      %1248 = vmatprep.subr.mxu0 0.0
      %1249 = vmatpush2.msra.mxu0 0.0
      %1250 = vmatprep.subr.mxu0 0.0
      %1251 = vmatpush2.msra.mxu0 0.0
      %1252 = vmatprep.subr.mxu0 0.0
      %1253 = vmatpush2.msra.mxu0 0.0
      %1254 = vmatprep.subr.mxu0 0.0
      %1255 = vmatpush2.msra.mxu0 0.0
      %1256 = vmatprep.subr.mxu0 0.0
      %1257 = vmatpush2.msra.mxu0 0.0
      %1258 = vmatprep.subr.mxu0 0.0
      %1259 = vmatpush2.msra.mxu0 0.0
      %1260 = vmatprep.subr.mxu0 0.0
      %1261 = vmatpush2.msra.mxu0 0.0
      %1262 = vmatprep.subr.mxu0 0.0
      %1263 = vmatpush2.msra.mxu0 0.0
      %1264 = vmatprep.subr.mxu0 0.0
      %1265 = vmatpush2.msra.mxu0 0.0
      %1266 = vmatprep.subr.mxu0 0.0
      %1267 = vmatpush2.msra.mxu0 0.0
      %1268 = vmatprep.mubr.f32.mxu0 0.0
      %1269 = vmatmul.mubr.f32.gmra.mxu0 %v1202
      %v1270 = vpop.f32.mrf.mxu0
      %v1271 = vadd.f32 0.0, %v1270
      %v1272 = vpop.f32.mrf.mxu0
      %1273 = vdwg.mxu0
      %1275 = vrot.lane.b32.xlu0 %v1201, 116
      %v1276 = vpop.permute.xlu0 %1275
      %v1277 = vsel %vm83, %v1276, 0
      %1279 = vmatprep.subr.mxu0 0.0
      %1280 = vmatpush1.msra.mxu0 0.0
      %1281 = vmatprep.subr.mxu0 0.0
      %1282 = vmatpush1.msra.mxu0 0.0
      %1283 = vmatprep.subr.mxu0 0.0
      %1284 = vmatpush1.msra.mxu0 0.0
      %1285 = vmatprep.subr.mxu0 0.0
      %1286 = vmatpush1.msra.mxu0 0.0
      %1287 = vmatprep.subr.mxu0 0.0
      %1288 = vmatpush1.msra.mxu0 0.0
      %1289 = vmatprep.subr.mxu0 0.0
      %1290 = vmatpush1.msra.mxu0 0.0
      %1291 = vmatprep.subr.mxu0 0.0
      %1292 = vmatpush1.msra.mxu0 0.0
      %1293 = vmatprep.subr.mxu0 0.0
      %1294 = vmatpush1.msra.mxu0 0.0
      %1295 = vmatprep.subr.mxu0 0.0
      %1296 = vmatpush1.msra.mxu0 0.0
      %1297 = vmatprep.subr.mxu0 0.0
      %1298 = vmatpush1.msra.mxu0 0.0
      %1299 = vmatprep.subr.mxu0 0.0
      %1300 = vmatpush1.msra.mxu0 0.0
      %1301 = vmatprep.subr.mxu0 0.0
      %1302 = vmatpush1.msra.mxu0 0.0
      %1303 = vmatprep.subr.mxu0 0.0
      %1304 = vmatpush1.msra.mxu0 0.0
      %1305 = vmatprep.subr.mxu0 0.0
      %1306 = vmatpush1.msra.mxu0 0.0
      %1307 = vmatprep.subr.mxu0 0.0
      %1308 = vmatpush1.msra.mxu0 0.0
      %1309 = vmatprep.subr.mxu0 0.0
      %1310 = vmatpush1.msra.mxu0 %v715
      %1311 = vmatprep.subr.mxu0 0.0
      %1312 = vmatpush2.msra.mxu0 0.0
      %1313 = vmatprep.subr.mxu0 0.0
      %1314 = vmatpush2.msra.mxu0 0.0
      %1315 = vmatprep.subr.mxu0 0.0
      %1316 = vmatpush2.msra.mxu0 0.0
      %1317 = vmatprep.subr.mxu0 0.0
      %1318 = vmatpush2.msra.mxu0 0.0
      %1319 = vmatprep.subr.mxu0 0.0
      %1320 = vmatpush2.msra.mxu0 0.0
      %1321 = vmatprep.subr.mxu0 0.0
      %1322 = vmatpush2.msra.mxu0 0.0
      %1323 = vmatprep.subr.mxu0 0.0
      %1324 = vmatpush2.msra.mxu0 0.0
      %1325 = vmatprep.subr.mxu0 0.0
      %1326 = vmatpush2.msra.mxu0 0.0
      %1327 = vmatprep.subr.mxu0 0.0
      %1328 = vmatpush2.msra.mxu0 0.0
      %1329 = vmatprep.subr.mxu0 0.0
      %1330 = vmatpush2.msra.mxu0 0.0
      %1331 = vmatprep.subr.mxu0 0.0
      %1332 = vmatpush2.msra.mxu0 0.0
      %1333 = vmatprep.subr.mxu0 0.0
      %1334 = vmatpush2.msra.mxu0 0.0
      %1335 = vmatprep.subr.mxu0 0.0
      %1336 = vmatpush2.msra.mxu0 0.0
      %1337 = vmatprep.subr.mxu0 0.0
      %1338 = vmatpush2.msra.mxu0 0.0
      %1339 = vmatprep.subr.mxu0 0.0
      %1340 = vmatpush2.msra.mxu0 0.0
      %1341 = vmatprep.subr.mxu0 0.0
      %1342 = vmatpush2.msra.mxu0 0.0
      %1343 = vmatprep.mubr.f32.mxu0 0.0
      %1344 = vmatmul.mubr.f32.gmra.mxu0 %v1277
      %v1345 = vpop.f32.mrf.mxu0
      %v1346 = vadd.f32 %v1271, %v1345
      %v1347 = vpop.f32.mrf.mxu0
      %1348 = vdwg.mxu0
      %v1349 = vadd.f32 %v1346, %v791
      %v1350 = vxor.u32 %v1349, 2147483648
      %v1351 = vmul.f32 %v1350, 1.442695
      %v1352 = vpow.pop %v1351
      %v1353 = vadd.f32 %v1352, 1.0
      %v1354 = vrcp.pop %v1353
      %v1355 = vmul.f32 1.0, %v1354
      %v1356 = vtanh.pop %v1349
      %v1357 = vmul.f32 %v1355, %v1090
      %1359 = vrot.lane.b32.xlu0 %v1356, 120
      %v1360 = vpop.permute.xlu0 %1359
      %v1362 = vmul.f32 %v1355, %v1360
      %1364 = vrot.lane.b32.xlu0 %v1362, 4
      %v1365 = vpop.permute.xlu0 %1364
      %v1367 = vadd.f32 %v1357, %v1365
      %v1368 = vtanh.pop %v1367
      %1370 = vrot.lane.b32.xlu0 %v1368, 8
      %v1371 = vpop.permute.xlu0 %1370
      %v1373 = vmul.f32 %v1355, %v1371
      %1375 = vrot.lane.b32.xlu0 %v1373, 116
      %v1376 = vpop.permute.xlu0 %1375
      %s1378 = scalar_lea.vmem %s7, %s1104
      %1379 = vst.msk [vmem:[%s1378] sm:$0x3] %vm824, %v1376
      %s1380 = sadd.s32 %s524, 3
      %s1381 = smul.u32 %s1380, 2
      %s1382 = scalar_lea.vmem [#allocation2], %s1381
      %v1383 = vld [vmem:[%s1382] sm:$0x3]
      %1384 = vmatprep.subr.mxu0 0.0
      %1385 = vmatpush1.msra.mxu0 0.0
      %1386 = vmatprep.subr.mxu0 0.0
      %1387 = vmatpush1.msra.mxu0 0.0
      %1388 = vmatprep.subr.mxu0 0.0
      %1389 = vmatpush1.msra.mxu0 0.0
      %1390 = vmatprep.subr.mxu0 0.0
      %1391 = vmatpush1.msra.mxu0 0.0
      %1392 = vmatprep.subr.mxu0 0.0
      %1393 = vmatpush1.msra.mxu0 0.0
      %1394 = vmatprep.subr.mxu0 0.0
      %1395 = vmatpush1.msra.mxu0 0.0
      %1396 = vmatprep.subr.mxu0 0.0
      %1397 = vmatpush1.msra.mxu0 0.0
      %1398 = vmatprep.subr.mxu0 0.0
      %1399 = vmatpush1.msra.mxu0 0.0
      %1400 = vmatprep.subr.mxu0 0.0
      %1401 = vmatpush1.msra.mxu0 0.0
      %1402 = vmatprep.subr.mxu0 0.0
      %1403 = vmatpush1.msra.mxu0 0.0
      %1404 = vmatprep.subr.mxu0 0.0
      %1405 = vmatpush1.msra.mxu0 0.0
      %1406 = vmatprep.subr.mxu0 0.0
      %1407 = vmatpush1.msra.mxu0 0.0
      %1408 = vmatprep.subr.mxu0 0.0
      %1409 = vmatpush1.msra.mxu0 0.0
      %1410 = vmatprep.subr.mxu0 0.0
      %1411 = vmatpush1.msra.mxu0 0.0
      %1412 = vmatprep.subr.mxu0 0.0
      %1413 = vmatpush1.msra.mxu0 0.0
      %1414 = vmatprep.subr.mxu0 0.0
      %1415 = vmatpush1.msra.mxu0 %v534
      %1416 = vmatprep.subr.mxu0 0.0
      %1417 = vmatpush2.msra.mxu0 0.0
      %1418 = vmatprep.subr.mxu0 0.0
      %1419 = vmatpush2.msra.mxu0 0.0
      %1420 = vmatprep.subr.mxu0 0.0
      %1421 = vmatpush2.msra.mxu0 0.0
      %1422 = vmatprep.subr.mxu0 0.0
      %1423 = vmatpush2.msra.mxu0 0.0
      %1424 = vmatprep.subr.mxu0 0.0
      %1425 = vmatpush2.msra.mxu0 0.0
      %1426 = vmatprep.subr.mxu0 0.0
      %1427 = vmatpush2.msra.mxu0 0.0
      %1428 = vmatprep.subr.mxu0 0.0
      %1429 = vmatpush2.msra.mxu0 0.0
      %1430 = vmatprep.subr.mxu0 0.0
      %1431 = vmatpush2.msra.mxu0 0.0
      %1432 = vmatprep.subr.mxu0 0.0
      %1433 = vmatpush2.msra.mxu0 0.0
      %1434 = vmatprep.subr.mxu0 0.0
      %1435 = vmatpush2.msra.mxu0 0.0
      %1436 = vmatprep.subr.mxu0 0.0
      %1437 = vmatpush2.msra.mxu0 0.0
      %1438 = vmatprep.subr.mxu0 0.0
      %1439 = vmatpush2.msra.mxu0 0.0
      %1440 = vmatprep.subr.mxu0 0.0
      %1441 = vmatpush2.msra.mxu0 0.0
      %1442 = vmatprep.subr.mxu0 0.0
      %1443 = vmatpush2.msra.mxu0 0.0
      %1444 = vmatprep.subr.mxu0 0.0
      %1445 = vmatpush2.msra.mxu0 0.0
      %1446 = vmatprep.subr.mxu0 0.0
      %1447 = vmatpush2.msra.mxu0 0.0
      %1448 = vmatprep.mubr.f32.mxu0 0.0
      %1449 = vmatmul.mubr.f32.gmra.mxu0 %v1277
      %v1450 = vpop.f32.mrf.mxu0
      %v1451 = vadd.f32 0.0, %v1450
      %v1452 = vpop.f32.mrf.mxu0
      %1453 = vdwg.mxu0
      %v1454 = vadd.f32 %v1383, %v1451
      %v1455 = vxor.u32 %v1454, 2147483648
      %v1456 = vmul.f32 %v1455, 1.442695
      %v1457 = vpow.pop %v1456
      %v1458 = vadd.f32 %v1457, 1.0
      %v1459 = vrcp.pop %v1458
      %v1460 = vmul.f32 1.0, %v1459
      %v1461 = vtanh.pop %v1454
      %v1462 = vmul.f32 %v1460, %v1195
      %1464 = vrot.lane.b32.xlu0 %v1461, 120
      %v1465 = vpop.permute.xlu0 %1464
      %v1467 = vmul.f32 %v1460, %v1465
      %1469 = vrot.lane.b32.xlu0 %v1467, 4
      %v1470 = vpop.permute.xlu0 %1469
      %v1472 = vadd.f32 %v1462, %v1470
      %v1473 = vtanh.pop %v1472
      %1475 = vrot.lane.b32.xlu0 %v1473, 8
      %v1476 = vpop.permute.xlu0 %1475
      %v1478 = vmul.f32 %v1460, %v1476
      %v1479 = vsel %vm83, %v1376, 0
      %1481 = vmatprep.subr.mxu0 0.0
      %1482 = vmatpush1.msra.mxu0 0.0
      %1483 = vmatprep.subr.mxu0 0.0
      %1484 = vmatpush1.msra.mxu0 0.0
      %1485 = vmatprep.subr.mxu0 0.0
      %1486 = vmatpush1.msra.mxu0 0.0
      %1487 = vmatprep.subr.mxu0 0.0
      %1488 = vmatpush1.msra.mxu0 0.0
      %1489 = vmatprep.subr.mxu0 0.0
      %1490 = vmatpush1.msra.mxu0 0.0
      %1491 = vmatprep.subr.mxu0 0.0
      %1492 = vmatpush1.msra.mxu0 0.0
      %1493 = vmatprep.subr.mxu0 0.0
      %1494 = vmatpush1.msra.mxu0 0.0
      %1495 = vmatprep.subr.mxu0 0.0
      %1496 = vmatpush1.msra.mxu0 0.0
      %1497 = vmatprep.subr.mxu0 0.0
      %1498 = vmatpush1.msra.mxu0 0.0
      %1499 = vmatprep.subr.mxu0 0.0
      %1500 = vmatpush1.msra.mxu0 0.0
      %1501 = vmatprep.subr.mxu0 0.0
      %1502 = vmatpush1.msra.mxu0 0.0
      %1503 = vmatprep.subr.mxu0 0.0
      %1504 = vmatpush1.msra.mxu0 0.0
      %1505 = vmatprep.subr.mxu0 0.0
      %1506 = vmatpush1.msra.mxu0 0.0
      %1507 = vmatprep.subr.mxu0 0.0
      %1508 = vmatpush1.msra.mxu0 0.0
      %1509 = vmatprep.subr.mxu0 0.0
      %1510 = vmatpush1.msra.mxu0 0.0
      %1511 = vmatprep.subr.mxu0 0.0
      %1512 = vmatpush1.msra.mxu0 %v637
      %1513 = vmatprep.subr.mxu0 0.0
      %1514 = vmatpush2.msra.mxu0 0.0
      %1515 = vmatprep.subr.mxu0 0.0
      %1516 = vmatpush2.msra.mxu0 0.0
      %1517 = vmatprep.subr.mxu0 0.0
      %1518 = vmatpush2.msra.mxu0 0.0
      %1519 = vmatprep.subr.mxu0 0.0
      %1520 = vmatpush2.msra.mxu0 0.0
      %1521 = vmatprep.subr.mxu0 0.0
      %1522 = vmatpush2.msra.mxu0 0.0
      %1523 = vmatprep.subr.mxu0 0.0
      %1524 = vmatpush2.msra.mxu0 0.0
      %1525 = vmatprep.subr.mxu0 0.0
      %1526 = vmatpush2.msra.mxu0 0.0
      %1527 = vmatprep.subr.mxu0 0.0
      %1528 = vmatpush2.msra.mxu0 0.0
      %1529 = vmatprep.subr.mxu0 0.0
      %1530 = vmatpush2.msra.mxu0 0.0
      %1531 = vmatprep.subr.mxu0 0.0
      %1532 = vmatpush2.msra.mxu0 0.0
      %1533 = vmatprep.subr.mxu0 0.0
      %1534 = vmatpush2.msra.mxu0 0.0
      %1535 = vmatprep.subr.mxu0 0.0
      %1536 = vmatpush2.msra.mxu0 0.0
      %1537 = vmatprep.subr.mxu0 0.0
      %1538 = vmatpush2.msra.mxu0 0.0
      %1539 = vmatprep.subr.mxu0 0.0
      %1540 = vmatpush2.msra.mxu0 0.0
      %1541 = vmatprep.subr.mxu0 0.0
      %1542 = vmatpush2.msra.mxu0 0.0
      %1543 = vmatprep.subr.mxu0 0.0
      %1544 = vmatpush2.msra.mxu0 0.0
      %1545 = vmatprep.mubr.f32.mxu0 0.0
      %1546 = vmatmul.mubr.f32.gmra.mxu0 %v1479
      %v1547 = vpop.f32.mrf.mxu0
      %v1548 = vadd.f32 0.0, %v1547
      %v1549 = vpop.f32.mrf.mxu0
      %1550 = vdwg.mxu0
      %1552 = vrot.lane.b32.xlu0 %v1478, 116
      %v1553 = vpop.permute.xlu0 %1552
      %v1554 = vsel %vm83, %v1553, 0
      %1556 = vmatprep.subr.mxu0 0.0
      %1557 = vmatpush1.msra.mxu0 0.0
      %1558 = vmatprep.subr.mxu0 0.0
      %1559 = vmatpush1.msra.mxu0 0.0
      %1560 = vmatprep.subr.mxu0 0.0
      %1561 = vmatpush1.msra.mxu0 0.0
      %1562 = vmatprep.subr.mxu0 0.0
      %1563 = vmatpush1.msra.mxu0 0.0
      %1564 = vmatprep.subr.mxu0 0.0
      %1565 = vmatpush1.msra.mxu0 0.0
      %1566 = vmatprep.subr.mxu0 0.0
      %1567 = vmatpush1.msra.mxu0 0.0
      %1568 = vmatprep.subr.mxu0 0.0
      %1569 = vmatpush1.msra.mxu0 0.0
      %1570 = vmatprep.subr.mxu0 0.0
      %1571 = vmatpush1.msra.mxu0 0.0
      %1572 = vmatprep.subr.mxu0 0.0
      %1573 = vmatpush1.msra.mxu0 0.0
      %1574 = vmatprep.subr.mxu0 0.0
      %1575 = vmatpush1.msra.mxu0 0.0
      %1576 = vmatprep.subr.mxu0 0.0
      %1577 = vmatpush1.msra.mxu0 0.0
      %1578 = vmatprep.subr.mxu0 0.0
      %1579 = vmatpush1.msra.mxu0 0.0
      %1580 = vmatprep.subr.mxu0 0.0
      %1581 = vmatpush1.msra.mxu0 0.0
      %1582 = vmatprep.subr.mxu0 0.0
      %1583 = vmatpush1.msra.mxu0 0.0
      %1584 = vmatprep.subr.mxu0 0.0
      %1585 = vmatpush1.msra.mxu0 0.0
      %1586 = vmatprep.subr.mxu0 0.0
      %1587 = vmatpush1.msra.mxu0 %v715
      %1588 = vmatprep.subr.mxu0 0.0
      %1589 = vmatpush2.msra.mxu0 0.0
      %1590 = vmatprep.subr.mxu0 0.0
      %1591 = vmatpush2.msra.mxu0 0.0
      %1592 = vmatprep.subr.mxu0 0.0
      %1593 = vmatpush2.msra.mxu0 0.0
      %1594 = vmatprep.subr.mxu0 0.0
      %1595 = vmatpush2.msra.mxu0 0.0
      %1596 = vmatprep.subr.mxu0 0.0
      %1597 = vmatpush2.msra.mxu0 0.0
      %1598 = vmatprep.subr.mxu0 0.0
      %1599 = vmatpush2.msra.mxu0 0.0
      %1600 = vmatprep.subr.mxu0 0.0
      %1601 = vmatpush2.msra.mxu0 0.0
      %1602 = vmatprep.subr.mxu0 0.0
      %1603 = vmatpush2.msra.mxu0 0.0
      %1604 = vmatprep.subr.mxu0 0.0
      %1605 = vmatpush2.msra.mxu0 0.0
      %1606 = vmatprep.subr.mxu0 0.0
      %1607 = vmatpush2.msra.mxu0 0.0
      %1608 = vmatprep.subr.mxu0 0.0
      %1609 = vmatpush2.msra.mxu0 0.0
      %1610 = vmatprep.subr.mxu0 0.0
      %1611 = vmatpush2.msra.mxu0 0.0
      %1612 = vmatprep.subr.mxu0 0.0
      %1613 = vmatpush2.msra.mxu0 0.0
      %1614 = vmatprep.subr.mxu0 0.0
      %1615 = vmatpush2.msra.mxu0 0.0
      %1616 = vmatprep.subr.mxu0 0.0
      %1617 = vmatpush2.msra.mxu0 0.0
      %1618 = vmatprep.subr.mxu0 0.0
      %1619 = vmatpush2.msra.mxu0 0.0
      %1620 = vmatprep.mubr.f32.mxu0 0.0
      %1621 = vmatmul.mubr.f32.gmra.mxu0 %v1554
      %v1622 = vpop.f32.mrf.mxu0
      %v1623 = vadd.f32 %v1548, %v1622
      %v1624 = vpop.f32.mrf.mxu0
      %1625 = vdwg.mxu0
      %v1626 = vadd.f32 %v1623, %v791
      %v1627 = vxor.u32 %v1626, 2147483648
      %v1628 = vmul.f32 %v1627, 1.442695
      %v1629 = vpow.pop %v1628
      %v1630 = vadd.f32 %v1629, 1.0
      %v1631 = vrcp.pop %v1630
      %v1632 = vmul.f32 1.0, %v1631
      %v1633 = vtanh.pop %v1626
      %v1634 = vmul.f32 %v1632, %v1367
      %1636 = vrot.lane.b32.xlu0 %v1633, 120
      %v1637 = vpop.permute.xlu0 %1636
      %v1639 = vmul.f32 %v1632, %v1637
      %1641 = vrot.lane.b32.xlu0 %v1639, 4
      %v1642 = vpop.permute.xlu0 %1641
      %v1644 = vadd.f32 %v1634, %v1642
      %v1645 = vtanh.pop %v1644
      %1647 = vrot.lane.b32.xlu0 %v1645, 8
      %v1648 = vpop.permute.xlu0 %1647
      %v1650 = vmul.f32 %v1632, %v1648
      %1652 = vrot.lane.b32.xlu0 %v1650, 116
      %v1653 = vpop.permute.xlu0 %1652
      %s1655 = scalar_lea.vmem %s7, %s1381
      %1656 = vst.msk [vmem:[%s1655] sm:$0x3] %vm824, %v1653
      %s1657 = sadd.s32 %s524, 4
      %s1658 = smul.u32 %s1657, 2
      %s1659 = scalar_lea.vmem [#allocation2], %s1658
      %v1660 = vld [vmem:[%s1659] sm:$0x3]
      %1661 = vmatprep.subr.mxu0 0.0
      %1662 = vmatpush1.msra.mxu0 0.0
      %1663 = vmatprep.subr.mxu0 0.0
      %1664 = vmatpush1.msra.mxu0 0.0
      %1665 = vmatprep.subr.mxu0 0.0
      %1666 = vmatpush1.msra.mxu0 0.0
      %1667 = vmatprep.subr.mxu0 0.0
      %1668 = vmatpush1.msra.mxu0 0.0
      %1669 = vmatprep.subr.mxu0 0.0
      %1670 = vmatpush1.msra.mxu0 0.0
      %1671 = vmatprep.subr.mxu0 0.0
      %1672 = vmatpush1.msra.mxu0 0.0
      %1673 = vmatprep.subr.mxu0 0.0
      %1674 = vmatpush1.msra.mxu0 0.0
      %1675 = vmatprep.subr.mxu0 0.0
      %1676 = vmatpush1.msra.mxu0 0.0
      %1677 = vmatprep.subr.mxu0 0.0
      %1678 = vmatpush1.msra.mxu0 0.0
      %1679 = vmatprep.subr.mxu0 0.0
      %1680 = vmatpush1.msra.mxu0 0.0
      %1681 = vmatprep.subr.mxu0 0.0
      %1682 = vmatpush1.msra.mxu0 0.0
      %1683 = vmatprep.subr.mxu0 0.0
      %1684 = vmatpush1.msra.mxu0 0.0
      %1685 = vmatprep.subr.mxu0 0.0
      %1686 = vmatpush1.msra.mxu0 0.0
      %1687 = vmatprep.subr.mxu0 0.0
      %1688 = vmatpush1.msra.mxu0 0.0
      %1689 = vmatprep.subr.mxu0 0.0
      %1690 = vmatpush1.msra.mxu0 0.0
      %1691 = vmatprep.subr.mxu0 0.0
      %1692 = vmatpush1.msra.mxu0 %v534
      %1693 = vmatprep.subr.mxu0 0.0
      %1694 = vmatpush2.msra.mxu0 0.0
      %1695 = vmatprep.subr.mxu0 0.0
      %1696 = vmatpush2.msra.mxu0 0.0
      %1697 = vmatprep.subr.mxu0 0.0
      %1698 = vmatpush2.msra.mxu0 0.0
      %1699 = vmatprep.subr.mxu0 0.0
      %1700 = vmatpush2.msra.mxu0 0.0
      %1701 = vmatprep.subr.mxu0 0.0
      %1702 = vmatpush2.msra.mxu0 0.0
      %1703 = vmatprep.subr.mxu0 0.0
      %1704 = vmatpush2.msra.mxu0 0.0
      %1705 = vmatprep.subr.mxu0 0.0
      %1706 = vmatpush2.msra.mxu0 0.0
      %1707 = vmatprep.subr.mxu0 0.0
      %1708 = vmatpush2.msra.mxu0 0.0
      %1709 = vmatprep.subr.mxu0 0.0
      %1710 = vmatpush2.msra.mxu0 0.0
      %1711 = vmatprep.subr.mxu0 0.0
      %1712 = vmatpush2.msra.mxu0 0.0
      %1713 = vmatprep.subr.mxu0 0.0
      %1714 = vmatpush2.msra.mxu0 0.0
      %1715 = vmatprep.subr.mxu0 0.0
      %1716 = vmatpush2.msra.mxu0 0.0
      %1717 = vmatprep.subr.mxu0 0.0
      %1718 = vmatpush2.msra.mxu0 0.0
      %1719 = vmatprep.subr.mxu0 0.0
      %1720 = vmatpush2.msra.mxu0 0.0
      %1721 = vmatprep.subr.mxu0 0.0
      %1722 = vmatpush2.msra.mxu0 0.0
      %1723 = vmatprep.subr.mxu0 0.0
      %1724 = vmatpush2.msra.mxu0 0.0
      %1725 = vmatprep.mubr.f32.mxu0 0.0
      %1726 = vmatmul.mubr.f32.gmra.mxu0 %v1554
      %v1727 = vpop.f32.mrf.mxu0
      %v1728 = vadd.f32 0.0, %v1727
      %v1729 = vpop.f32.mrf.mxu0
      %1730 = vdwg.mxu0
      %v1731 = vadd.f32 %v1660, %v1728
      %v1732 = vxor.u32 %v1731, 2147483648
      %v1733 = vmul.f32 %v1732, 1.442695
      %v1734 = vpow.pop %v1733
      %v1735 = vadd.f32 %v1734, 1.0
      %v1736 = vrcp.pop %v1735
      %v1737 = vmul.f32 1.0, %v1736
      %v1738 = vtanh.pop %v1731
      %v1739 = vmul.f32 %v1737, %v1472
      %1741 = vrot.lane.b32.xlu0 %v1738, 120
      %v1742 = vpop.permute.xlu0 %1741
      %v1744 = vmul.f32 %v1737, %v1742
      %1746 = vrot.lane.b32.xlu0 %v1744, 4
      %v1747 = vpop.permute.xlu0 %1746
      %v1749 = vadd.f32 %v1739, %v1747
      %v1750 = vtanh.pop %v1749
      %1752 = vrot.lane.b32.xlu0 %v1750, 8
      %v1753 = vpop.permute.xlu0 %1752
      %v1755 = vmul.f32 %v1737, %v1753
      %v1756 = vsel %vm83, %v1653, 0
      %1758 = vmatprep.subr.mxu0 0.0
      %1759 = vmatpush1.msra.mxu0 0.0
      %1760 = vmatprep.subr.mxu0 0.0
      %1761 = vmatpush1.msra.mxu0 0.0
      %1762 = vmatprep.subr.mxu0 0.0
      %1763 = vmatpush1.msra.mxu0 0.0
      %1764 = vmatprep.subr.mxu0 0.0
      %1765 = vmatpush1.msra.mxu0 0.0
      %1766 = vmatprep.subr.mxu0 0.0
      %1767 = vmatpush1.msra.mxu0 0.0
      %1768 = vmatprep.subr.mxu0 0.0
      %1769 = vmatpush1.msra.mxu0 0.0
      %1770 = vmatprep.subr.mxu0 0.0
      %1771 = vmatpush1.msra.mxu0 0.0
      %1772 = vmatprep.subr.mxu0 0.0
      %1773 = vmatpush1.msra.mxu0 0.0
      %1774 = vmatprep.subr.mxu0 0.0
      %1775 = vmatpush1.msra.mxu0 0.0
      %1776 = vmatprep.subr.mxu0 0.0
      %1777 = vmatpush1.msra.mxu0 0.0
      %1778 = vmatprep.subr.mxu0 0.0
      %1779 = vmatpush1.msra.mxu0 0.0
      %1780 = vmatprep.subr.mxu0 0.0
      %1781 = vmatpush1.msra.mxu0 0.0
      %1782 = vmatprep.subr.mxu0 0.0
      %1783 = vmatpush1.msra.mxu0 0.0
      %1784 = vmatprep.subr.mxu0 0.0
      %1785 = vmatpush1.msra.mxu0 0.0
      %1786 = vmatprep.subr.mxu0 0.0
      %1787 = vmatpush1.msra.mxu0 0.0
      %1788 = vmatprep.subr.mxu0 0.0
      %1789 = vmatpush1.msra.mxu0 %v637
      %1790 = vmatprep.subr.mxu0 0.0
      %1791 = vmatpush2.msra.mxu0 0.0
      %1792 = vmatprep.subr.mxu0 0.0
      %1793 = vmatpush2.msra.mxu0 0.0
      %1794 = vmatprep.subr.mxu0 0.0
      %1795 = vmatpush2.msra.mxu0 0.0
      %1796 = vmatprep.subr.mxu0 0.0
      %1797 = vmatpush2.msra.mxu0 0.0
      %1798 = vmatprep.subr.mxu0 0.0
      %1799 = vmatpush2.msra.mxu0 0.0
      %1800 = vmatprep.subr.mxu0 0.0
      %1801 = vmatpush2.msra.mxu0 0.0
      %1802 = vmatprep.subr.mxu0 0.0
      %1803 = vmatpush2.msra.mxu0 0.0
      %1804 = vmatprep.subr.mxu0 0.0
      %1805 = vmatpush2.msra.mxu0 0.0
      %1806 = vmatprep.subr.mxu0 0.0
      %1807 = vmatpush2.msra.mxu0 0.0
      %1808 = vmatprep.subr.mxu0 0.0
      %1809 = vmatpush2.msra.mxu0 0.0
      %1810 = vmatprep.subr.mxu0 0.0
      %1811 = vmatpush2.msra.mxu0 0.0
      %1812 = vmatprep.subr.mxu0 0.0
      %1813 = vmatpush2.msra.mxu0 0.0
      %1814 = vmatprep.subr.mxu0 0.0
      %1815 = vmatpush2.msra.mxu0 0.0
      %1816 = vmatprep.subr.mxu0 0.0
      %1817 = vmatpush2.msra.mxu0 0.0
      %1818 = vmatprep.subr.mxu0 0.0
      %1819 = vmatpush2.msra.mxu0 0.0
      %1820 = vmatprep.subr.mxu0 0.0
      %1821 = vmatpush2.msra.mxu0 0.0
      %1822 = vmatprep.mubr.f32.mxu0 0.0
      %1823 = vmatmul.mubr.f32.gmra.mxu0 %v1756
      %v1824 = vpop.f32.mrf.mxu0
      %v1825 = vadd.f32 0.0, %v1824
      %v1826 = vpop.f32.mrf.mxu0
      %1827 = vdwg.mxu0
      %1829 = vrot.lane.b32.xlu0 %v1755, 116
      %v1830 = vpop.permute.xlu0 %1829
      %v1831 = vsel %vm83, %v1830, 0
      %1833 = vmatprep.subr.mxu0 0.0
      %1834 = vmatpush1.msra.mxu0 0.0
      %1835 = vmatprep.subr.mxu0 0.0
      %1836 = vmatpush1.msra.mxu0 0.0
      %1837 = vmatprep.subr.mxu0 0.0
      %1838 = vmatpush1.msra.mxu0 0.0
      %1839 = vmatprep.subr.mxu0 0.0
      %1840 = vmatpush1.msra.mxu0 0.0
      %1841 = vmatprep.subr.mxu0 0.0
      %1842 = vmatpush1.msra.mxu0 0.0
      %1843 = vmatprep.subr.mxu0 0.0
      %1844 = vmatpush1.msra.mxu0 0.0
      %1845 = vmatprep.subr.mxu0 0.0
      %1846 = vmatpush1.msra.mxu0 0.0
      %1847 = vmatprep.subr.mxu0 0.0
      %1848 = vmatpush1.msra.mxu0 0.0
      %1849 = vmatprep.subr.mxu0 0.0
      %1850 = vmatpush1.msra.mxu0 0.0
      %1851 = vmatprep.subr.mxu0 0.0
      %1852 = vmatpush1.msra.mxu0 0.0
      %1853 = vmatprep.subr.mxu0 0.0
      %1854 = vmatpush1.msra.mxu0 0.0
      %1855 = vmatprep.subr.mxu0 0.0
      %1856 = vmatpush1.msra.mxu0 0.0
      %1857 = vmatprep.subr.mxu0 0.0
      %1858 = vmatpush1.msra.mxu0 0.0
      %1859 = vmatprep.subr.mxu0 0.0
      %1860 = vmatpush1.msra.mxu0 0.0
      %1861 = vmatprep.subr.mxu0 0.0
      %1862 = vmatpush1.msra.mxu0 0.0
      %1863 = vmatprep.subr.mxu0 0.0
      %1864 = vmatpush1.msra.mxu0 %v715
      %1865 = vmatprep.subr.mxu0 0.0
      %1866 = vmatpush2.msra.mxu0 0.0
      %1867 = vmatprep.subr.mxu0 0.0
      %1868 = vmatpush2.msra.mxu0 0.0
      %1869 = vmatprep.subr.mxu0 0.0
      %1870 = vmatpush2.msra.mxu0 0.0
      %1871 = vmatprep.subr.mxu0 0.0
      %1872 = vmatpush2.msra.mxu0 0.0
      %1873 = vmatprep.subr.mxu0 0.0
      %1874 = vmatpush2.msra.mxu0 0.0
      %1875 = vmatprep.subr.mxu0 0.0
      %1876 = vmatpush2.msra.mxu0 0.0
      %1877 = vmatprep.subr.mxu0 0.0
      %1878 = vmatpush2.msra.mxu0 0.0
      %1879 = vmatprep.subr.mxu0 0.0
      %1880 = vmatpush2.msra.mxu0 0.0
      %1881 = vmatprep.subr.mxu0 0.0
      %1882 = vmatpush2.msra.mxu0 0.0
      %1883 = vmatprep.subr.mxu0 0.0
      %1884 = vmatpush2.msra.mxu0 0.0
      %1885 = vmatprep.subr.mxu0 0.0
      %1886 = vmatpush2.msra.mxu0 0.0
      %1887 = vmatprep.subr.mxu0 0.0
      %1888 = vmatpush2.msra.mxu0 0.0
      %1889 = vmatprep.subr.mxu0 0.0
      %1890 = vmatpush2.msra.mxu0 0.0
      %1891 = vmatprep.subr.mxu0 0.0
      %1892 = vmatpush2.msra.mxu0 0.0
      %1893 = vmatprep.subr.mxu0 0.0
      %1894 = vmatpush2.msra.mxu0 0.0
      %1895 = vmatprep.subr.mxu0 0.0
      %1896 = vmatpush2.msra.mxu0 0.0
      %1897 = vmatprep.mubr.f32.mxu0 0.0
      %1898 = vmatmul.mubr.f32.gmra.mxu0 %v1831
      %v1899 = vpop.f32.mrf.mxu0
      %v1900 = vadd.f32 %v1825, %v1899
      %v1901 = vpop.f32.mrf.mxu0
      %1902 = vdwg.mxu0
      %v1903 = vadd.f32 %v1900, %v791
      %v1904 = vxor.u32 %v1903, 2147483648
      %v1905 = vmul.f32 %v1904, 1.442695
      %v1906 = vpow.pop %v1905
      %v1907 = vadd.f32 %v1906, 1.0
      %v1908 = vrcp.pop %v1907
      %v1909 = vmul.f32 1.0, %v1908
      %v1910 = vtanh.pop %v1903
      %v1911 = vmul.f32 %v1909, %v1644
      %1913 = vrot.lane.b32.xlu0 %v1910, 120
      %v1914 = vpop.permute.xlu0 %1913
      %v1916 = vmul.f32 %v1909, %v1914
      %1918 = vrot.lane.b32.xlu0 %v1916, 4
      %v1919 = vpop.permute.xlu0 %1918
      %v1921 = vadd.f32 %v1911, %v1919
      %v1922 = vtanh.pop %v1921
      %1924 = vrot.lane.b32.xlu0 %v1922, 8
      %v1925 = vpop.permute.xlu0 %1924
      %v1927 = vmul.f32 %v1909, %v1925
      %1929 = vrot.lane.b32.xlu0 %v1927, 116
      %v1930 = vpop.permute.xlu0 %1929
      %s1932 = scalar_lea.vmem %s7, %s1658
      %1933 = vst.msk [vmem:[%s1932] sm:$0x3] %vm824, %v1930
      %s1934 = sadd.s32 %s524, 5
      %s1935 = smul.u32 %s1934, 2
      %s1936 = scalar_lea.vmem [#allocation2], %s1935
      %v1937 = vld [vmem:[%s1936] sm:$0x3]
      %1938 = vmatprep.subr.mxu0 0.0
      %1939 = vmatpush1.msra.mxu0 0.0
      %1940 = vmatprep.subr.mxu0 0.0
      %1941 = vmatpush1.msra.mxu0 0.0
      %1942 = vmatprep.subr.mxu0 0.0
      %1943 = vmatpush1.msra.mxu0 0.0
      %1944 = vmatprep.subr.mxu0 0.0
      %1945 = vmatpush1.msra.mxu0 0.0
      %1946 = vmatprep.subr.mxu0 0.0
      %1947 = vmatpush1.msra.mxu0 0.0
      %1948 = vmatprep.subr.mxu0 0.0
      %1949 = vmatpush1.msra.mxu0 0.0
      %1950 = vmatprep.subr.mxu0 0.0
      %1951 = vmatpush1.msra.mxu0 0.0
      %1952 = vmatprep.subr.mxu0 0.0
      %1953 = vmatpush1.msra.mxu0 0.0
      %1954 = vmatprep.subr.mxu0 0.0
      %1955 = vmatpush1.msra.mxu0 0.0
      %1956 = vmatprep.subr.mxu0 0.0
      %1957 = vmatpush1.msra.mxu0 0.0
      %1958 = vmatprep.subr.mxu0 0.0
      %1959 = vmatpush1.msra.mxu0 0.0
      %1960 = vmatprep.subr.mxu0 0.0
      %1961 = vmatpush1.msra.mxu0 0.0
      %1962 = vmatprep.subr.mxu0 0.0
      %1963 = vmatpush1.msra.mxu0 0.0
      %1964 = vmatprep.subr.mxu0 0.0
      %1965 = vmatpush1.msra.mxu0 0.0
      %1966 = vmatprep.subr.mxu0 0.0
      %1967 = vmatpush1.msra.mxu0 0.0
      %1968 = vmatprep.subr.mxu0 0.0
      %1969 = vmatpush1.msra.mxu0 %v534
      %1970 = vmatprep.subr.mxu0 0.0
      %1971 = vmatpush2.msra.mxu0 0.0
      %1972 = vmatprep.subr.mxu0 0.0
      %1973 = vmatpush2.msra.mxu0 0.0
      %1974 = vmatprep.subr.mxu0 0.0
      %1975 = vmatpush2.msra.mxu0 0.0
      %1976 = vmatprep.subr.mxu0 0.0
      %1977 = vmatpush2.msra.mxu0 0.0
      %1978 = vmatprep.subr.mxu0 0.0
      %1979 = vmatpush2.msra.mxu0 0.0
      %1980 = vmatprep.subr.mxu0 0.0
      %1981 = vmatpush2.msra.mxu0 0.0
      %1982 = vmatprep.subr.mxu0 0.0
      %1983 = vmatpush2.msra.mxu0 0.0
      %1984 = vmatprep.subr.mxu0 0.0
      %1985 = vmatpush2.msra.mxu0 0.0
      %1986 = vmatprep.subr.mxu0 0.0
      %1987 = vmatpush2.msra.mxu0 0.0
      %1988 = vmatprep.subr.mxu0 0.0
      %1989 = vmatpush2.msra.mxu0 0.0
      %1990 = vmatprep.subr.mxu0 0.0
      %1991 = vmatpush2.msra.mxu0 0.0
      %1992 = vmatprep.subr.mxu0 0.0
      %1993 = vmatpush2.msra.mxu0 0.0
      %1994 = vmatprep.subr.mxu0 0.0
      %1995 = vmatpush2.msra.mxu0 0.0
      %1996 = vmatprep.subr.mxu0 0.0
      %1997 = vmatpush2.msra.mxu0 0.0
      %1998 = vmatprep.subr.mxu0 0.0
      %1999 = vmatpush2.msra.mxu0 0.0
      %2000 = vmatprep.subr.mxu0 0.0
      %2001 = vmatpush2.msra.mxu0 0.0
      %2002 = vmatprep.mubr.f32.mxu0 0.0
      %2003 = vmatmul.mubr.f32.gmra.mxu0 %v1831
      %v2004 = vpop.f32.mrf.mxu0
      %v2005 = vadd.f32 0.0, %v2004
      %v2006 = vpop.f32.mrf.mxu0
      %2007 = vdwg.mxu0
      %v2008 = vadd.f32 %v1937, %v2005
      %v2009 = vxor.u32 %v2008, 2147483648
      %v2010 = vmul.f32 %v2009, 1.442695
      %v2011 = vpow.pop %v2010
      %v2012 = vadd.f32 %v2011, 1.0
      %v2013 = vrcp.pop %v2012
      %v2014 = vmul.f32 1.0, %v2013
      %v2015 = vtanh.pop %v2008
      %v2016 = vmul.f32 %v2014, %v1749
      %2018 = vrot.lane.b32.xlu0 %v2015, 120
      %v2019 = vpop.permute.xlu0 %2018
      %v2021 = vmul.f32 %v2014, %v2019
      %2023 = vrot.lane.b32.xlu0 %v2021, 4
      %v2024 = vpop.permute.xlu0 %2023
      %v2026 = vadd.f32 %v2016, %v2024
      %v2027 = vtanh.pop %v2026
      %2029 = vrot.lane.b32.xlu0 %v2027, 8
      %v2030 = vpop.permute.xlu0 %2029
      %v2032 = vmul.f32 %v2014, %v2030
      %v2033 = vsel %vm83, %v1930, 0
      %2035 = vmatprep.subr.mxu0 0.0
      %2036 = vmatpush1.msra.mxu0 0.0
      %2037 = vmatprep.subr.mxu0 0.0
      %2038 = vmatpush1.msra.mxu0 0.0
      %2039 = vmatprep.subr.mxu0 0.0
      %2040 = vmatpush1.msra.mxu0 0.0
      %2041 = vmatprep.subr.mxu0 0.0
      %2042 = vmatpush1.msra.mxu0 0.0
      %2043 = vmatprep.subr.mxu0 0.0
      %2044 = vmatpush1.msra.mxu0 0.0
      %2045 = vmatprep.subr.mxu0 0.0
      %2046 = vmatpush1.msra.mxu0 0.0
      %2047 = vmatprep.subr.mxu0 0.0
      %2048 = vmatpush1.msra.mxu0 0.0
      %2049 = vmatprep.subr.mxu0 0.0
      %2050 = vmatpush1.msra.mxu0 0.0
      %2051 = vmatprep.subr.mxu0 0.0
      %2052 = vmatpush1.msra.mxu0 0.0
      %2053 = vmatprep.subr.mxu0 0.0
      %2054 = vmatpush1.msra.mxu0 0.0
      %2055 = vmatprep.subr.mxu0 0.0
      %2056 = vmatpush1.msra.mxu0 0.0
      %2057 = vmatprep.subr.mxu0 0.0
      %2058 = vmatpush1.msra.mxu0 0.0
      %2059 = vmatprep.subr.mxu0 0.0
      %2060 = vmatpush1.msra.mxu0 0.0
      %2061 = vmatprep.subr.mxu0 0.0
      %2062 = vmatpush1.msra.mxu0 0.0
      %2063 = vmatprep.subr.mxu0 0.0
      %2064 = vmatpush1.msra.mxu0 0.0
      %2065 = vmatprep.subr.mxu0 0.0
      %2066 = vmatpush1.msra.mxu0 %v637
      %2067 = vmatprep.subr.mxu0 0.0
      %2068 = vmatpush2.msra.mxu0 0.0
      %2069 = vmatprep.subr.mxu0 0.0
      %2070 = vmatpush2.msra.mxu0 0.0
      %2071 = vmatprep.subr.mxu0 0.0
      %2072 = vmatpush2.msra.mxu0 0.0
      %2073 = vmatprep.subr.mxu0 0.0
      %2074 = vmatpush2.msra.mxu0 0.0
      %2075 = vmatprep.subr.mxu0 0.0
      %2076 = vmatpush2.msra.mxu0 0.0
      %2077 = vmatprep.subr.mxu0 0.0
      %2078 = vmatpush2.msra.mxu0 0.0
      %2079 = vmatprep.subr.mxu0 0.0
      %2080 = vmatpush2.msra.mxu0 0.0
      %2081 = vmatprep.subr.mxu0 0.0
      %2082 = vmatpush2.msra.mxu0 0.0
      %2083 = vmatprep.subr.mxu0 0.0
      %2084 = vmatpush2.msra.mxu0 0.0
      %2085 = vmatprep.subr.mxu0 0.0
      %2086 = vmatpush2.msra.mxu0 0.0
      %2087 = vmatprep.subr.mxu0 0.0
      %2088 = vmatpush2.msra.mxu0 0.0
      %2089 = vmatprep.subr.mxu0 0.0
      %2090 = vmatpush2.msra.mxu0 0.0
      %2091 = vmatprep.subr.mxu0 0.0
      %2092 = vmatpush2.msra.mxu0 0.0
      %2093 = vmatprep.subr.mxu0 0.0
      %2094 = vmatpush2.msra.mxu0 0.0
      %2095 = vmatprep.subr.mxu0 0.0
      %2096 = vmatpush2.msra.mxu0 0.0
      %2097 = vmatprep.subr.mxu0 0.0
      %2098 = vmatpush2.msra.mxu0 0.0
      %2099 = vmatprep.mubr.f32.mxu0 0.0
      %2100 = vmatmul.mubr.f32.gmra.mxu0 %v2033
      %v2101 = vpop.f32.mrf.mxu0
      %v2102 = vadd.f32 0.0, %v2101
      %v2103 = vpop.f32.mrf.mxu0
      %2104 = vdwg.mxu0
      %2106 = vrot.lane.b32.xlu0 %v2032, 116
      %v2107 = vpop.permute.xlu0 %2106
      %v2108 = vsel %vm83, %v2107, 0
      %2110 = vmatprep.subr.mxu0 0.0
      %2111 = vmatpush1.msra.mxu0 0.0
      %2112 = vmatprep.subr.mxu0 0.0
      %2113 = vmatpush1.msra.mxu0 0.0
      %2114 = vmatprep.subr.mxu0 0.0
      %2115 = vmatpush1.msra.mxu0 0.0
      %2116 = vmatprep.subr.mxu0 0.0
      %2117 = vmatpush1.msra.mxu0 0.0
      %2118 = vmatprep.subr.mxu0 0.0
      %2119 = vmatpush1.msra.mxu0 0.0
      %2120 = vmatprep.subr.mxu0 0.0
      %2121 = vmatpush1.msra.mxu0 0.0
      %2122 = vmatprep.subr.mxu0 0.0
      %2123 = vmatpush1.msra.mxu0 0.0
      %2124 = vmatprep.subr.mxu0 0.0
      %2125 = vmatpush1.msra.mxu0 0.0
      %2126 = vmatprep.subr.mxu0 0.0
      %2127 = vmatpush1.msra.mxu0 0.0
      %2128 = vmatprep.subr.mxu0 0.0
      %2129 = vmatpush1.msra.mxu0 0.0
      %2130 = vmatprep.subr.mxu0 0.0
      %2131 = vmatpush1.msra.mxu0 0.0
      %2132 = vmatprep.subr.mxu0 0.0
      %2133 = vmatpush1.msra.mxu0 0.0
      %2134 = vmatprep.subr.mxu0 0.0
      %2135 = vmatpush1.msra.mxu0 0.0
      %2136 = vmatprep.subr.mxu0 0.0
      %2137 = vmatpush1.msra.mxu0 0.0
      %2138 = vmatprep.subr.mxu0 0.0
      %2139 = vmatpush1.msra.mxu0 0.0
      %2140 = vmatprep.subr.mxu0 0.0
      %2141 = vmatpush1.msra.mxu0 %v715
      %2142 = vmatprep.subr.mxu0 0.0
      %2143 = vmatpush2.msra.mxu0 0.0
      %2144 = vmatprep.subr.mxu0 0.0
      %2145 = vmatpush2.msra.mxu0 0.0
      %2146 = vmatprep.subr.mxu0 0.0
      %2147 = vmatpush2.msra.mxu0 0.0
      %2148 = vmatprep.subr.mxu0 0.0
      %2149 = vmatpush2.msra.mxu0 0.0
      %2150 = vmatprep.subr.mxu0 0.0
      %2151 = vmatpush2.msra.mxu0 0.0
      %2152 = vmatprep.subr.mxu0 0.0
      %2153 = vmatpush2.msra.mxu0 0.0
      %2154 = vmatprep.subr.mxu0 0.0
      %2155 = vmatpush2.msra.mxu0 0.0
      %2156 = vmatprep.subr.mxu0 0.0
      %2157 = vmatpush2.msra.mxu0 0.0
      %2158 = vmatprep.subr.mxu0 0.0
      %2159 = vmatpush2.msra.mxu0 0.0
      %2160 = vmatprep.subr.mxu0 0.0
      %2161 = vmatpush2.msra.mxu0 0.0
      %2162 = vmatprep.subr.mxu0 0.0
      %2163 = vmatpush2.msra.mxu0 0.0
      %2164 = vmatprep.subr.mxu0 0.0
      %2165 = vmatpush2.msra.mxu0 0.0
      %2166 = vmatprep.subr.mxu0 0.0
      %2167 = vmatpush2.msra.mxu0 0.0
      %2168 = vmatprep.subr.mxu0 0.0
      %2169 = vmatpush2.msra.mxu0 0.0
      %2170 = vmatprep.subr.mxu0 0.0
      %2171 = vmatpush2.msra.mxu0 0.0
      %2172 = vmatprep.subr.mxu0 0.0
      %2173 = vmatpush2.msra.mxu0 0.0
      %2174 = vmatprep.mubr.f32.mxu0 0.0
      %2175 = vmatmul.mubr.f32.gmra.mxu0 %v2108
      %v2176 = vpop.f32.mrf.mxu0
      %v2177 = vadd.f32 %v2102, %v2176
      %v2178 = vpop.f32.mrf.mxu0
      %2179 = vdwg.mxu0
      %v2180 = vadd.f32 %v2177, %v791
      %v2181 = vxor.u32 %v2180, 2147483648
      %v2182 = vmul.f32 %v2181, 1.442695
      %v2183 = vpow.pop %v2182
      %v2184 = vadd.f32 %v2183, 1.0
      %v2185 = vrcp.pop %v2184
      %v2186 = vmul.f32 1.0, %v2185
      %v2187 = vtanh.pop %v2180
      %v2188 = vmul.f32 %v2186, %v1921
      %2190 = vrot.lane.b32.xlu0 %v2187, 120
      %v2191 = vpop.permute.xlu0 %2190
      %v2193 = vmul.f32 %v2186, %v2191
      %2195 = vrot.lane.b32.xlu0 %v2193, 4
      %v2196 = vpop.permute.xlu0 %2195
      %v2198 = vadd.f32 %v2188, %v2196
      %v2199 = vtanh.pop %v2198
      %2201 = vrot.lane.b32.xlu0 %v2199, 8
      %v2202 = vpop.permute.xlu0 %2201
      %v2204 = vmul.f32 %v2186, %v2202
      %2206 = vrot.lane.b32.xlu0 %v2204, 116
      %v2207 = vpop.permute.xlu0 %2206
      %s2209 = scalar_lea.vmem %s7, %s1935
      %2210 = vst.msk [vmem:[%s2209] sm:$0x3] %vm824, %v2207
      %s2211 = sadd.s32 %s524, 6
      %s2212 = smul.u32 %s2211, 2
      %s2213 = scalar_lea.vmem [#allocation2], %s2212
      %v2214 = vld [vmem:[%s2213] sm:$0x3]
      %2215 = vmatprep.subr.mxu0 0.0
      %2216 = vmatpush1.msra.mxu0 0.0
      %2217 = vmatprep.subr.mxu0 0.0
      %2218 = vmatpush1.msra.mxu0 0.0
      %2219 = vmatprep.subr.mxu0 0.0
      %2220 = vmatpush1.msra.mxu0 0.0
      %2221 = vmatprep.subr.mxu0 0.0
      %2222 = vmatpush1.msra.mxu0 0.0
      %2223 = vmatprep.subr.mxu0 0.0
      %2224 = vmatpush1.msra.mxu0 0.0
      %2225 = vmatprep.subr.mxu0 0.0
      %2226 = vmatpush1.msra.mxu0 0.0
      %2227 = vmatprep.subr.mxu0 0.0
      %2228 = vmatpush1.msra.mxu0 0.0
      %2229 = vmatprep.subr.mxu0 0.0
      %2230 = vmatpush1.msra.mxu0 0.0
      %2231 = vmatprep.subr.mxu0 0.0
      %2232 = vmatpush1.msra.mxu0 0.0
      %2233 = vmatprep.subr.mxu0 0.0
      %2234 = vmatpush1.msra.mxu0 0.0
      %2235 = vmatprep.subr.mxu0 0.0
      %2236 = vmatpush1.msra.mxu0 0.0
      %2237 = vmatprep.subr.mxu0 0.0
      %2238 = vmatpush1.msra.mxu0 0.0
      %2239 = vmatprep.subr.mxu0 0.0
      %2240 = vmatpush1.msra.mxu0 0.0
      %2241 = vmatprep.subr.mxu0 0.0
      %2242 = vmatpush1.msra.mxu0 0.0
      %2243 = vmatprep.subr.mxu0 0.0
      %2244 = vmatpush1.msra.mxu0 0.0
      %2245 = vmatprep.subr.mxu0 0.0
      %2246 = vmatpush1.msra.mxu0 %v534
      %2247 = vmatprep.subr.mxu0 0.0
      %2248 = vmatpush2.msra.mxu0 0.0
      %2249 = vmatprep.subr.mxu0 0.0
      %2250 = vmatpush2.msra.mxu0 0.0
      %2251 = vmatprep.subr.mxu0 0.0
      %2252 = vmatpush2.msra.mxu0 0.0
      %2253 = vmatprep.subr.mxu0 0.0
      %2254 = vmatpush2.msra.mxu0 0.0
      %2255 = vmatprep.subr.mxu0 0.0
      %2256 = vmatpush2.msra.mxu0 0.0
      %2257 = vmatprep.subr.mxu0 0.0
      %2258 = vmatpush2.msra.mxu0 0.0
      %2259 = vmatprep.subr.mxu0 0.0
      %2260 = vmatpush2.msra.mxu0 0.0
      %2261 = vmatprep.subr.mxu0 0.0
      %2262 = vmatpush2.msra.mxu0 0.0
      %2263 = vmatprep.subr.mxu0 0.0
      %2264 = vmatpush2.msra.mxu0 0.0
      %2265 = vmatprep.subr.mxu0 0.0
      %2266 = vmatpush2.msra.mxu0 0.0
      %2267 = vmatprep.subr.mxu0 0.0
      %2268 = vmatpush2.msra.mxu0 0.0
      %2269 = vmatprep.subr.mxu0 0.0
      %2270 = vmatpush2.msra.mxu0 0.0
      %2271 = vmatprep.subr.mxu0 0.0
      %2272 = vmatpush2.msra.mxu0 0.0
      %2273 = vmatprep.subr.mxu0 0.0
      %2274 = vmatpush2.msra.mxu0 0.0
      %2275 = vmatprep.subr.mxu0 0.0
      %2276 = vmatpush2.msra.mxu0 0.0
      %2277 = vmatprep.subr.mxu0 0.0
      %2278 = vmatpush2.msra.mxu0 0.0
      %2279 = vmatprep.mubr.f32.mxu0 0.0
      %2280 = vmatmul.mubr.f32.gmra.mxu0 %v2108
      %v2281 = vpop.f32.mrf.mxu0
      %v2282 = vadd.f32 0.0, %v2281
      %v2283 = vpop.f32.mrf.mxu0
      %2284 = vdwg.mxu0
      %v2285 = vadd.f32 %v2214, %v2282
      %v2286 = vxor.u32 %v2285, 2147483648
      %v2287 = vmul.f32 %v2286, 1.442695
      %v2288 = vpow.pop %v2287
      %v2289 = vadd.f32 %v2288, 1.0
      %v2290 = vrcp.pop %v2289
      %v2291 = vmul.f32 1.0, %v2290
      %v2292 = vtanh.pop %v2285
      %v2293 = vmul.f32 %v2291, %v2026
      %2295 = vrot.lane.b32.xlu0 %v2292, 120
      %v2296 = vpop.permute.xlu0 %2295
      %v2298 = vmul.f32 %v2291, %v2296
      %2300 = vrot.lane.b32.xlu0 %v2298, 4
      %v2301 = vpop.permute.xlu0 %2300
      %v2303 = vadd.f32 %v2293, %v2301
      %v2304 = vtanh.pop %v2303
      %2306 = vrot.lane.b32.xlu0 %v2304, 8
      %v2307 = vpop.permute.xlu0 %2306
      %v2309 = vmul.f32 %v2291, %v2307
      %v2310 = vsel %vm83, %v2207, 0
      %2312 = vmatprep.subr.mxu0 0.0
      %2313 = vmatpush1.msra.mxu0 0.0
      %2314 = vmatprep.subr.mxu0 0.0
      %2315 = vmatpush1.msra.mxu0 0.0
      %2316 = vmatprep.subr.mxu0 0.0
      %2317 = vmatpush1.msra.mxu0 0.0
      %2318 = vmatprep.subr.mxu0 0.0
      %2319 = vmatpush1.msra.mxu0 0.0
      %2320 = vmatprep.subr.mxu0 0.0
      %2321 = vmatpush1.msra.mxu0 0.0
      %2322 = vmatprep.subr.mxu0 0.0
      %2323 = vmatpush1.msra.mxu0 0.0
      %2324 = vmatprep.subr.mxu0 0.0
      %2325 = vmatpush1.msra.mxu0 0.0
      %2326 = vmatprep.subr.mxu0 0.0
      %2327 = vmatpush1.msra.mxu0 0.0
      %2328 = vmatprep.subr.mxu0 0.0
      %2329 = vmatpush1.msra.mxu0 0.0
      %2330 = vmatprep.subr.mxu0 0.0
      %2331 = vmatpush1.msra.mxu0 0.0
      %2332 = vmatprep.subr.mxu0 0.0
      %2333 = vmatpush1.msra.mxu0 0.0
      %2334 = vmatprep.subr.mxu0 0.0
      %2335 = vmatpush1.msra.mxu0 0.0
      %2336 = vmatprep.subr.mxu0 0.0
      %2337 = vmatpush1.msra.mxu0 0.0
      %2338 = vmatprep.subr.mxu0 0.0
      %2339 = vmatpush1.msra.mxu0 0.0
      %2340 = vmatprep.subr.mxu0 0.0
      %2341 = vmatpush1.msra.mxu0 0.0
      %2342 = vmatprep.subr.mxu0 0.0
      %2343 = vmatpush1.msra.mxu0 %v637
      %2344 = vmatprep.subr.mxu0 0.0
      %2345 = vmatpush2.msra.mxu0 0.0
      %2346 = vmatprep.subr.mxu0 0.0
      %2347 = vmatpush2.msra.mxu0 0.0
      %2348 = vmatprep.subr.mxu0 0.0
      %2349 = vmatpush2.msra.mxu0 0.0
      %2350 = vmatprep.subr.mxu0 0.0
      %2351 = vmatpush2.msra.mxu0 0.0
      %2352 = vmatprep.subr.mxu0 0.0
      %2353 = vmatpush2.msra.mxu0 0.0
      %2354 = vmatprep.subr.mxu0 0.0
      %2355 = vmatpush2.msra.mxu0 0.0
      %2356 = vmatprep.subr.mxu0 0.0
      %2357 = vmatpush2.msra.mxu0 0.0
      %2358 = vmatprep.subr.mxu0 0.0
      %2359 = vmatpush2.msra.mxu0 0.0
      %2360 = vmatprep.subr.mxu0 0.0
      %2361 = vmatpush2.msra.mxu0 0.0
      %2362 = vmatprep.subr.mxu0 0.0
      %2363 = vmatpush2.msra.mxu0 0.0
      %2364 = vmatprep.subr.mxu0 0.0
      %2365 = vmatpush2.msra.mxu0 0.0
      %2366 = vmatprep.subr.mxu0 0.0
      %2367 = vmatpush2.msra.mxu0 0.0
      %2368 = vmatprep.subr.mxu0 0.0
      %2369 = vmatpush2.msra.mxu0 0.0
      %2370 = vmatprep.subr.mxu0 0.0
      %2371 = vmatpush2.msra.mxu0 0.0
      %2372 = vmatprep.subr.mxu0 0.0
      %2373 = vmatpush2.msra.mxu0 0.0
      %2374 = vmatprep.subr.mxu0 0.0
      %2375 = vmatpush2.msra.mxu0 0.0
      %2376 = vmatprep.mubr.f32.mxu0 0.0
      %2377 = vmatmul.mubr.f32.gmra.mxu0 %v2310
      %v2378 = vpop.f32.mrf.mxu0
      %v2379 = vadd.f32 0.0, %v2378
      %v2380 = vpop.f32.mrf.mxu0
      %2381 = vdwg.mxu0
      %2383 = vrot.lane.b32.xlu0 %v2309, 116
      %v2384 = vpop.permute.xlu0 %2383
      %v2385 = vsel %vm83, %v2384, 0
      %2387 = vmatprep.subr.mxu0 0.0
      %2388 = vmatpush1.msra.mxu0 0.0
      %2389 = vmatprep.subr.mxu0 0.0
      %2390 = vmatpush1.msra.mxu0 0.0
      %2391 = vmatprep.subr.mxu0 0.0
      %2392 = vmatpush1.msra.mxu0 0.0
      %2393 = vmatprep.subr.mxu0 0.0
      %2394 = vmatpush1.msra.mxu0 0.0
      %2395 = vmatprep.subr.mxu0 0.0
      %2396 = vmatpush1.msra.mxu0 0.0
      %2397 = vmatprep.subr.mxu0 0.0
      %2398 = vmatpush1.msra.mxu0 0.0
      %2399 = vmatprep.subr.mxu0 0.0
      %2400 = vmatpush1.msra.mxu0 0.0
      %2401 = vmatprep.subr.mxu0 0.0
      %2402 = vmatpush1.msra.mxu0 0.0
      %2403 = vmatprep.subr.mxu0 0.0
      %2404 = vmatpush1.msra.mxu0 0.0
      %2405 = vmatprep.subr.mxu0 0.0
      %2406 = vmatpush1.msra.mxu0 0.0
      %2407 = vmatprep.subr.mxu0 0.0
      %2408 = vmatpush1.msra.mxu0 0.0
      %2409 = vmatprep.subr.mxu0 0.0
      %2410 = vmatpush1.msra.mxu0 0.0
      %2411 = vmatprep.subr.mxu0 0.0
      %2412 = vmatpush1.msra.mxu0 0.0
      %2413 = vmatprep.subr.mxu0 0.0
      %2414 = vmatpush1.msra.mxu0 0.0
      %2415 = vmatprep.subr.mxu0 0.0
      %2416 = vmatpush1.msra.mxu0 0.0
      %2417 = vmatprep.subr.mxu0 0.0
      %2418 = vmatpush1.msra.mxu0 %v715
      %2419 = vmatprep.subr.mxu0 0.0
      %2420 = vmatpush2.msra.mxu0 0.0
      %2421 = vmatprep.subr.mxu0 0.0
      %2422 = vmatpush2.msra.mxu0 0.0
      %2423 = vmatprep.subr.mxu0 0.0
      %2424 = vmatpush2.msra.mxu0 0.0
      %2425 = vmatprep.subr.mxu0 0.0
      %2426 = vmatpush2.msra.mxu0 0.0
      %2427 = vmatprep.subr.mxu0 0.0
      %2428 = vmatpush2.msra.mxu0 0.0
      %2429 = vmatprep.subr.mxu0 0.0
      %2430 = vmatpush2.msra.mxu0 0.0
      %2431 = vmatprep.subr.mxu0 0.0
      %2432 = vmatpush2.msra.mxu0 0.0
      %2433 = vmatprep.subr.mxu0 0.0
      %2434 = vmatpush2.msra.mxu0 0.0
      %2435 = vmatprep.subr.mxu0 0.0
      %2436 = vmatpush2.msra.mxu0 0.0
      %2437 = vmatprep.subr.mxu0 0.0
      %2438 = vmatpush2.msra.mxu0 0.0
      %2439 = vmatprep.subr.mxu0 0.0
      %2440 = vmatpush2.msra.mxu0 0.0
      %2441 = vmatprep.subr.mxu0 0.0
      %2442 = vmatpush2.msra.mxu0 0.0
      %2443 = vmatprep.subr.mxu0 0.0
      %2444 = vmatpush2.msra.mxu0 0.0
      %2445 = vmatprep.subr.mxu0 0.0
      %2446 = vmatpush2.msra.mxu0 0.0
      %2447 = vmatprep.subr.mxu0 0.0
      %2448 = vmatpush2.msra.mxu0 0.0
      %2449 = vmatprep.subr.mxu0 0.0
      %2450 = vmatpush2.msra.mxu0 0.0
      %2451 = vmatprep.mubr.f32.mxu0 0.0
      %2452 = vmatmul.mubr.f32.gmra.mxu0 %v2385
      %v2453 = vpop.f32.mrf.mxu0
      %v2454 = vadd.f32 %v2379, %v2453
      %v2455 = vpop.f32.mrf.mxu0
      %2456 = vdwg.mxu0
      %v2457 = vadd.f32 %v2454, %v791
      %v2458 = vxor.u32 %v2457, 2147483648
      %v2459 = vmul.f32 %v2458, 1.442695
      %v2460 = vpow.pop %v2459
      %v2461 = vadd.f32 %v2460, 1.0
      %v2462 = vrcp.pop %v2461
      %v2463 = vmul.f32 1.0, %v2462
      %v2464 = vtanh.pop %v2457
      %v2465 = vmul.f32 %v2463, %v2198
      %2467 = vrot.lane.b32.xlu0 %v2464, 120
      %v2468 = vpop.permute.xlu0 %2467
      %v2470 = vmul.f32 %v2463, %v2468
      %2472 = vrot.lane.b32.xlu0 %v2470, 4
      %v2473 = vpop.permute.xlu0 %2472
      %v2475 = vadd.f32 %v2465, %v2473
      %v2476 = vtanh.pop %v2475
      %2478 = vrot.lane.b32.xlu0 %v2476, 8
      %v2479 = vpop.permute.xlu0 %2478
      %v2481 = vmul.f32 %v2463, %v2479
      %2483 = vrot.lane.b32.xlu0 %v2481, 116
      %v2484 = vpop.permute.xlu0 %2483
      %s2486 = scalar_lea.vmem %s7, %s2212
      %2487 = vst.msk [vmem:[%s2486] sm:$0x3] %vm824, %v2484
      %s2488 = sadd.s32 %s524, 7
      %s2489 = smul.u32 %s2488, 2
      %s2490 = scalar_lea.vmem [#allocation2], %s2489
      %v2491 = vld [vmem:[%s2490] sm:$0x3]
      %2492 = vmatprep.subr.mxu0 0.0
      %2493 = vmatpush1.msra.mxu0 0.0
      %2494 = vmatprep.subr.mxu0 0.0
      %2495 = vmatpush1.msra.mxu0 0.0
      %2496 = vmatprep.subr.mxu0 0.0
      %2497 = vmatpush1.msra.mxu0 0.0
      %2498 = vmatprep.subr.mxu0 0.0
      %2499 = vmatpush1.msra.mxu0 0.0
      %2500 = vmatprep.subr.mxu0 0.0
      %2501 = vmatpush1.msra.mxu0 0.0
      %2502 = vmatprep.subr.mxu0 0.0
      %2503 = vmatpush1.msra.mxu0 0.0
      %2504 = vmatprep.subr.mxu0 0.0
      %2505 = vmatpush1.msra.mxu0 0.0
      %2506 = vmatprep.subr.mxu0 0.0
      %2507 = vmatpush1.msra.mxu0 0.0
      %2508 = vmatprep.subr.mxu0 0.0
      %2509 = vmatpush1.msra.mxu0 0.0
      %2510 = vmatprep.subr.mxu0 0.0
      %2511 = vmatpush1.msra.mxu0 0.0
      %2512 = vmatprep.subr.mxu0 0.0
      %2513 = vmatpush1.msra.mxu0 0.0
      %2514 = vmatprep.subr.mxu0 0.0
      %2515 = vmatpush1.msra.mxu0 0.0
      %2516 = vmatprep.subr.mxu0 0.0
      %2517 = vmatpush1.msra.mxu0 0.0
      %2518 = vmatprep.subr.mxu0 0.0
      %2519 = vmatpush1.msra.mxu0 0.0
      %2520 = vmatprep.subr.mxu0 0.0
      %2521 = vmatpush1.msra.mxu0 0.0
      %2522 = vmatprep.subr.mxu0 0.0
      %2523 = vmatpush1.msra.mxu0 %v534
      %2524 = vmatprep.subr.mxu0 0.0
      %2525 = vmatpush2.msra.mxu0 0.0
      %2526 = vmatprep.subr.mxu0 0.0
      %2527 = vmatpush2.msra.mxu0 0.0
      %2528 = vmatprep.subr.mxu0 0.0
      %2529 = vmatpush2.msra.mxu0 0.0
      %2530 = vmatprep.subr.mxu0 0.0
      %2531 = vmatpush2.msra.mxu0 0.0
      %2532 = vmatprep.subr.mxu0 0.0
      %2533 = vmatpush2.msra.mxu0 0.0
      %2534 = vmatprep.subr.mxu0 0.0
      %2535 = vmatpush2.msra.mxu0 0.0
      %2536 = vmatprep.subr.mxu0 0.0
      %2537 = vmatpush2.msra.mxu0 0.0
      %2538 = vmatprep.subr.mxu0 0.0
      %2539 = vmatpush2.msra.mxu0 0.0
      %2540 = vmatprep.subr.mxu0 0.0
      %2541 = vmatpush2.msra.mxu0 0.0
      %2542 = vmatprep.subr.mxu0 0.0
      %2543 = vmatpush2.msra.mxu0 0.0
      %2544 = vmatprep.subr.mxu0 0.0
      %2545 = vmatpush2.msra.mxu0 0.0
      %2546 = vmatprep.subr.mxu0 0.0
      %2547 = vmatpush2.msra.mxu0 0.0
      %2548 = vmatprep.subr.mxu0 0.0
      %2549 = vmatpush2.msra.mxu0 0.0
      %2550 = vmatprep.subr.mxu0 0.0
      %2551 = vmatpush2.msra.mxu0 0.0
      %2552 = vmatprep.subr.mxu0 0.0
      %2553 = vmatpush2.msra.mxu0 0.0
      %2554 = vmatprep.subr.mxu0 0.0
      %2555 = vmatpush2.msra.mxu0 0.0
      %2556 = vmatprep.mubr.f32.mxu0 0.0
      %2557 = vmatmul.mubr.f32.gmra.mxu0 %v2385
      %v2558 = vpop.f32.mrf.mxu0
      %v2559 = vadd.f32 0.0, %v2558
      %v2560 = vpop.f32.mrf.mxu0
      %2561 = vdwg.mxu0
      %v2562 = vadd.f32 %v2491, %v2559
      %v2563 = vxor.u32 %v2562, 2147483648
      %v2564 = vmul.f32 %v2563, 1.442695
      %v2565 = vpow.pop %v2564
      %v2566 = vadd.f32 %v2565, 1.0
      %v2567 = vrcp.pop %v2566
      %v2568 = vmul.f32 1.0, %v2567
      %v2569 = vtanh.pop %v2562
      %v2570 = vmul.f32 %v2568, %v2303
      %2572 = vrot.lane.b32.xlu0 %v2569, 120
      %v2573 = vpop.permute.xlu0 %2572
      %v2575 = vmul.f32 %v2568, %v2573
      %2577 = vrot.lane.b32.xlu0 %v2575, 4
      %v2578 = vpop.permute.xlu0 %2577
      %v2580 = vadd.f32 %v2570, %v2578
      %v2581 = vtanh.pop %v2580
      %2583 = vrot.lane.b32.xlu0 %v2581, 8
      %v2584 = vpop.permute.xlu0 %2583
      %v2586 = vmul.f32 %v2568, %v2584
      %v2587 = vsel %vm83, %v2484, 0
      %2589 = vmatprep.subr.mxu0 0.0
      %2590 = vmatpush1.msra.mxu0 0.0
      %2591 = vmatprep.subr.mxu0 0.0
      %2592 = vmatpush1.msra.mxu0 0.0
      %2593 = vmatprep.subr.mxu0 0.0
      %2594 = vmatpush1.msra.mxu0 0.0
      %2595 = vmatprep.subr.mxu0 0.0
      %2596 = vmatpush1.msra.mxu0 0.0
      %2597 = vmatprep.subr.mxu0 0.0
      %2598 = vmatpush1.msra.mxu0 0.0
      %2599 = vmatprep.subr.mxu0 0.0
      %2600 = vmatpush1.msra.mxu0 0.0
      %2601 = vmatprep.subr.mxu0 0.0
      %2602 = vmatpush1.msra.mxu0 0.0
      %2603 = vmatprep.subr.mxu0 0.0
      %2604 = vmatpush1.msra.mxu0 0.0
      %2605 = vmatprep.subr.mxu0 0.0
      %2606 = vmatpush1.msra.mxu0 0.0
      %2607 = vmatprep.subr.mxu0 0.0
      %2608 = vmatpush1.msra.mxu0 0.0
      %2609 = vmatprep.subr.mxu0 0.0
      %2610 = vmatpush1.msra.mxu0 0.0
      %2611 = vmatprep.subr.mxu0 0.0
      %2612 = vmatpush1.msra.mxu0 0.0
      %2613 = vmatprep.subr.mxu0 0.0
      %2614 = vmatpush1.msra.mxu0 0.0
      %2615 = vmatprep.subr.mxu0 0.0
      %2616 = vmatpush1.msra.mxu0 0.0
      %2617 = vmatprep.subr.mxu0 0.0
      %2618 = vmatpush1.msra.mxu0 0.0
      %2619 = vmatprep.subr.mxu0 0.0
      %2620 = vmatpush1.msra.mxu0 %v637
      %2621 = vmatprep.subr.mxu0 0.0
      %2622 = vmatpush2.msra.mxu0 0.0
      %2623 = vmatprep.subr.mxu0 0.0
      %2624 = vmatpush2.msra.mxu0 0.0
      %2625 = vmatprep.subr.mxu0 0.0
      %2626 = vmatpush2.msra.mxu0 0.0
      %2627 = vmatprep.subr.mxu0 0.0
      %2628 = vmatpush2.msra.mxu0 0.0
      %2629 = vmatprep.subr.mxu0 0.0
      %2630 = vmatpush2.msra.mxu0 0.0
      %2631 = vmatprep.subr.mxu0 0.0
      %2632 = vmatpush2.msra.mxu0 0.0
      %2633 = vmatprep.subr.mxu0 0.0
      %2634 = vmatpush2.msra.mxu0 0.0
      %2635 = vmatprep.subr.mxu0 0.0
      %2636 = vmatpush2.msra.mxu0 0.0
      %2637 = vmatprep.subr.mxu0 0.0
      %2638 = vmatpush2.msra.mxu0 0.0
      %2639 = vmatprep.subr.mxu0 0.0
      %2640 = vmatpush2.msra.mxu0 0.0
      %2641 = vmatprep.subr.mxu0 0.0
      %2642 = vmatpush2.msra.mxu0 0.0
      %2643 = vmatprep.subr.mxu0 0.0
      %2644 = vmatpush2.msra.mxu0 0.0
      %2645 = vmatprep.subr.mxu0 0.0
      %2646 = vmatpush2.msra.mxu0 0.0
      %2647 = vmatprep.subr.mxu0 0.0
      %2648 = vmatpush2.msra.mxu0 0.0
      %2649 = vmatprep.subr.mxu0 0.0
      %2650 = vmatpush2.msra.mxu0 0.0
      %2651 = vmatprep.subr.mxu0 0.0
      %2652 = vmatpush2.msra.mxu0 0.0
      %2653 = vmatprep.mubr.f32.mxu0 0.0
      %2654 = vmatmul.mubr.f32.gmra.mxu0 %v2587
      %v2655 = vpop.f32.mrf.mxu0
      %v2656 = vadd.f32 0.0, %v2655
      %v2657 = vpop.f32.mrf.mxu0
      %2658 = vdwg.mxu0
      %2660 = vrot.lane.b32.xlu0 %v2586, 116
      %v2661 = vpop.permute.xlu0 %2660
      %v2662 = vsel %vm83, %v2661, 0
      %2664 = vmatprep.subr.mxu0 0.0
      %2665 = vmatpush1.msra.mxu0 0.0
      %2666 = vmatprep.subr.mxu0 0.0
      %2667 = vmatpush1.msra.mxu0 0.0
      %2668 = vmatprep.subr.mxu0 0.0
      %2669 = vmatpush1.msra.mxu0 0.0
      %2670 = vmatprep.subr.mxu0 0.0
      %2671 = vmatpush1.msra.mxu0 0.0
      %2672 = vmatprep.subr.mxu0 0.0
      %2673 = vmatpush1.msra.mxu0 0.0
      %2674 = vmatprep.subr.mxu0 0.0
      %2675 = vmatpush1.msra.mxu0 0.0
      %2676 = vmatprep.subr.mxu0 0.0
      %2677 = vmatpush1.msra.mxu0 0.0
      %2678 = vmatprep.subr.mxu0 0.0
      %2679 = vmatpush1.msra.mxu0 0.0
      %2680 = vmatprep.subr.mxu0 0.0
      %2681 = vmatpush1.msra.mxu0 0.0
      %2682 = vmatprep.subr.mxu0 0.0
      %2683 = vmatpush1.msra.mxu0 0.0
      %2684 = vmatprep.subr.mxu0 0.0
      %2685 = vmatpush1.msra.mxu0 0.0
      %2686 = vmatprep.subr.mxu0 0.0
      %2687 = vmatpush1.msra.mxu0 0.0
      %2688 = vmatprep.subr.mxu0 0.0
      %2689 = vmatpush1.msra.mxu0 0.0
      %2690 = vmatprep.subr.mxu0 0.0
      %2691 = vmatpush1.msra.mxu0 0.0
      %2692 = vmatprep.subr.mxu0 0.0
      %2693 = vmatpush1.msra.mxu0 0.0
      %2694 = vmatprep.subr.mxu0 0.0
      %2695 = vmatpush1.msra.mxu0 %v715
      %2696 = vmatprep.subr.mxu0 0.0
      %2697 = vmatpush2.msra.mxu0 0.0
      %2698 = vmatprep.subr.mxu0 0.0
      %2699 = vmatpush2.msra.mxu0 0.0
      %2700 = vmatprep.subr.mxu0 0.0
      %2701 = vmatpush2.msra.mxu0 0.0
      %2702 = vmatprep.subr.mxu0 0.0
      %2703 = vmatpush2.msra.mxu0 0.0
      %2704 = vmatprep.subr.mxu0 0.0
      %2705 = vmatpush2.msra.mxu0 0.0
      %2706 = vmatprep.subr.mxu0 0.0
      %2707 = vmatpush2.msra.mxu0 0.0
      %2708 = vmatprep.subr.mxu0 0.0
      %2709 = vmatpush2.msra.mxu0 0.0
      %2710 = vmatprep.subr.mxu0 0.0
      %2711 = vmatpush2.msra.mxu0 0.0
      %2712 = vmatprep.subr.mxu0 0.0
      %2713 = vmatpush2.msra.mxu0 0.0
      %2714 = vmatprep.subr.mxu0 0.0
      %2715 = vmatpush2.msra.mxu0 0.0
      %2716 = vmatprep.subr.mxu0 0.0
      %2717 = vmatpush2.msra.mxu0 0.0
      %2718 = vmatprep.subr.mxu0 0.0
      %2719 = vmatpush2.msra.mxu0 0.0
      %2720 = vmatprep.subr.mxu0 0.0
      %2721 = vmatpush2.msra.mxu0 0.0
      %2722 = vmatprep.subr.mxu0 0.0
      %2723 = vmatpush2.msra.mxu0 0.0
      %2724 = vmatprep.subr.mxu0 0.0
      %2725 = vmatpush2.msra.mxu0 0.0
      %2726 = vmatprep.subr.mxu0 0.0
      %2727 = vmatpush2.msra.mxu0 0.0
      %2728 = vmatprep.mubr.f32.mxu0 0.0
      %2729 = vmatmul.mubr.f32.gmra.mxu0 %v2662
      %v2730 = vpop.f32.mrf.mxu0
      %v2731 = vadd.f32 %v2656, %v2730
      %v2732 = vpop.f32.mrf.mxu0
      %2733 = vdwg.mxu0
      %v2734 = vadd.f32 %v2731, %v791
      %v2735 = vxor.u32 %v2734, 2147483648
      %v2736 = vmul.f32 %v2735, 1.442695
      %v2737 = vpow.pop %v2736
      %v2738 = vadd.f32 %v2737, 1.0
      %v2739 = vrcp.pop %v2738
      %v2740 = vmul.f32 1.0, %v2739
      %v2741 = vtanh.pop %v2734
      %v2742 = vmul.f32 %v2740, %v2475
      %2744 = vrot.lane.b32.xlu0 %v2741, 120
      %v2745 = vpop.permute.xlu0 %2744
      %v2747 = vmul.f32 %v2740, %v2745
      %2749 = vrot.lane.b32.xlu0 %v2747, 4
      %v2750 = vpop.permute.xlu0 %2749
      %v2752 = vadd.f32 %v2742, %v2750
      %v2753 = vtanh.pop %v2752
      %2755 = vrot.lane.b32.xlu0 %v2753, 8
      %v2756 = vpop.permute.xlu0 %2755
      %v2758 = vmul.f32 %v2740, %v2756
      %2760 = vrot.lane.b32.xlu0 %v2758, 116
      %v2761 = vpop.permute.xlu0 %2760
      %s2763 = scalar_lea.vmem %s7, %s2489
      %2764 = vst.msk [vmem:[%s2763] sm:$0x3] %vm824, %v2761
    $region34: #{tpu_custom_call.1} parent=1 // loop_footer
      %s519 = sadd.s32 1, %s515
    $region35: #{tpu_custom_call.1} parent=1 // loop_footer_branch
      %514 = sbr.rel target = $region31
    $region36: #{tpu_custom_call.1} parent=1 // loop_exit
      _
    %2766 = vrot.lane.b32.xlu0 %v520, 116
    %v2767 = vpop.permute.xlu0 %2766
    %vm2769 = vcmask 25600
    %2770 = vst.msk [vmem:[#allocation3] sm:$0x3] %vm2769, %v2767
    %2772 = vrot.lane.b32.xlu0 %v522, 116
    %v2773 = vpop.permute.xlu0 %2772
    %s2775 = scalar_lea.vmem [#allocation3], 2
    %2776 = vst.msk [vmem:[%s2775] sm:$0x3] %vm2769, %v2773
    %2778 = vrot.lane.b32.xlu0 %v521, 124
    %v2779 = vpop.permute.xlu0 %2778
    %2781 = vst.msk [vmem:[#allocation5] sm:$0x3] %vm2769, %v2779
    %2783 = vrot.lane.b32.xlu0 %v523, 124
    %v2784 = vpop.permute.xlu0 %2783
    %s2786 = scalar_lea.vmem [#allocation5], 2
    %2787 = vst.msk [vmem:[%s2786] sm:$0x3] %vm2769, %v2784
    // Predicated region
    $region37: #{tpu_custom_call.1} parent=1 // pred_check
      _
    $region38: #{tpu_custom_call.1} parent=1 // pred_check_branch
      %2789 = sbr.rel (0) target = $region40
    $region39: #{tpu_custom_call.1} parent=1 // pred_region
      _
    $region40: #{tpu_custom_call.1} parent=1 // pred_fallthru
      _
    // Predicated region
    $region41: #{tpu_custom_call.1} parent=1 // pred_check
      _
    $region42: #{tpu_custom_call.1} parent=1 // pred_check_branch
      %2791 = sbr.rel (0) target = $region44
    $region43: #{tpu_custom_call.1} parent=1 // pred_region
      %s2793 = ssub.s32 64, 64
      %2794 = vsyncadd [#allocation4], %s2793
      %s2795 = sshll.u32 [#allocation3], 4
      %s2796 = int_to_ptr.vmem [resolvable:$true] %s2795
      %2801 = dma.vmem_to_hbm [thread:$0]  %s2796, 64, %s8, [#allocation4], 32, 32, 2
    $region44: #{tpu_custom_call.1} parent=1 // pred_fallthru
      _
    // Predicated region
    $region45: #{tpu_custom_call.1} parent=1 // pred_check
      _
    $region46: #{tpu_custom_call.1} parent=1 // pred_check_branch
      %2803 = sbr.rel (0) target = $region48
    $region47: #{tpu_custom_call.1} parent=1 // pred_region
      %s2805 = ssub.s32 64, 64
      %2806 = vsyncadd [#allocation6], %s2805
      %s2807 = sshll.u32 [#allocation5], 4
      %s2808 = int_to_ptr.vmem [resolvable:$true] %s2807
      %2813 = dma.vmem_to_hbm [thread:$0]  %s2808, 64, %s9, [#allocation6], 32, 32, 2
    $region48: #{tpu_custom_call.1} parent=1 // pred_fallthru
      _
    // Predicated region
    $region49: #{tpu_custom_call.1} parent=1 // pred_check
      _
    $region50: #{tpu_custom_call.1} parent=1 // pred_check_branch
      %2815 = sbr.rel (0) target = $region52
    $region51: #{tpu_custom_call.1} parent=1 // pred_region
      _
    $region52: #{tpu_custom_call.1} parent=1 // pred_fallthru
      _
    // Predicated region
    $region53: #{tpu_custom_call.1} parent=1 // pred_check
      _
    $region54: #{tpu_custom_call.1} parent=1 // pred_check_branch
      %2817 = sbr.rel (0) target = $region56
    $region55: #{tpu_custom_call.1} parent=1 // pred_region
      %2818 = dma.done [#allocation4], 64
    $region56: #{tpu_custom_call.1} parent=1 // pred_fallthru
      _
    // Predicated region
    $region57: #{tpu_custom_call.1} parent=1 // pred_check
      _
    $region58: #{tpu_custom_call.1} parent=1 // pred_check_branch
      %2820 = sbr.rel (0) target = $region60
    $region59: #{tpu_custom_call.1} parent=1 // pred_region
      %2821 = dma.done [#allocation6], 64
    $region60: #{tpu_custom_call.1} parent=1 // pred_fallthru
      _
    %2822 = vsyncpa [#allocation4], 1
    %2823 = vsyncpa [#allocation6], 1

</llo_original>
